<compile_context>
chip_gen: v7x
topology: tpu7x:2x2x1
jax: 0.10.0
libtpu: 0.0.40
codegen_flags: <defaults>
</compile_context>

<pallas_src>
import functools
import math

import jax
import jax.numpy as jnp
from jax import lax
from jax.experimental import pallas as pl
from jax.experimental.pallas import tpu as pltpu


# ----------------------------------------------------------------------------
# Pallas kernel: one grid step = one transformer block (layer l) applied to a
# block of Bt sequences.  The hidden state is resident in out_ref across the
# layer axis (same output block index for all l).
# ----------------------------------------------------------------------------
def gpt_stack_kernel(x_ref, wqkv_ref, bqkv_ref, wproj_ref, bproj_ref,
                     g1_ref, be1_ref, wfc_ref, bfc_ref, wp2_ref, bp2_ref,
                     g2_ref, be2_ref, out_ref, qkv_ref, *, n_head, eps):
    l = pl.program_id(1)

    # Layer 0: seed the resident hidden state from the embedding input.
    @pl.when(l == 0)
    def _():
        out_ref[...] = x_ref[...]

    xb = out_ref[...]                       # (Bt, S, D) f32 hidden state
    Bt, S, D = xb.shape
    dh = D // n_head
    scale = 1.0 / math.sqrt(dh)
    x = xb.reshape(Bt * S, D)               # collapse leading dims (layout no-op)

    # ---- fused QKV projection: one (Bt*S, D)x(D, 3D) bf16 MXU matmul ----
    # Result is staged in a VMEM scratch so the head loop slices a ref instead
    # of keeping a large f32 value live (avoids uncontrolled spills).
    qkv_ref[...] = jnp.dot(x.astype(jnp.bfloat16), wqkv_ref[0],
                           preferred_element_type=jnp.float32) + bqkv_ref[0]

    # In-kernel causal mask (no (S,S) HBM buffer).
    rows = lax.broadcasted_iota(jnp.int32, (S, S), 0)
    cols = lax.broadcasted_iota(jnp.int32, (S, S), 1)
    causal = (cols <= rows)[None]           # (1, S, S) broadcast over batch

    # ---- per-head causal attention: bf16 matmuls, f32 softmax ----
    # TODO(synk): for S >= ~512 switch to a KV-blocked flash-style online
    # softmax (the (S,S) per-head score tile dominates VMEM on v7x).
    head_outs = []
    for h in range(n_head):
        q = (qkv_ref[:, h * dh:(h + 1) * dh] * scale)          # scale q, not scores
        q = q.astype(jnp.bfloat16).reshape(Bt, S, dh)
        k = qkv_ref[:, D + h * dh:D + (h + 1) * dh]
        k = k.astype(jnp.bfloat16).reshape(Bt, S, dh)
        v = qkv_ref[:, 2 * D + h * dh:2 * D + (h + 1) * dh]
        v = v.astype(jnp.bfloat16).reshape(Bt, S, dh)
        s = jnp.einsum('bqd,bkd->bqk', q, k,
                       preferred_element_type=jnp.float32)     # (Bt, S, S) f32
        s = jnp.where(causal, s, -10000.0)                     # == w*b + -1e4*(1-b)
        s = s - jnp.max(s, axis=-1, keepdims=True)
        p = jnp.exp(s)
        p = p * pl.reciprocal(jnp.sum(p, axis=-1, keepdims=True), approx=True)
        head_outs.append(jnp.einsum('bqk,bkd->bqd', p.astype(jnp.bfloat16), v,
                                    preferred_element_type=jnp.float32))

    # merge_heads: one lane-dense concatenation, no sub-128-lane stores.
    merged = jnp.concatenate(head_outs, axis=-1).reshape(Bt * S, D)

    # ---- fused output projection: one (D, D) bf16 matmul ----
    a = jnp.dot(merged.astype(jnp.bfloat16), wproj_ref[0],
                preferred_element_type=jnp.float32) + bproj_ref[0]

    # ---- residual + LayerNorm (ln_1), f32 ----
    r1 = x + a
    mu1 = jnp.mean(r1, axis=-1, keepdims=True)
    var1 = jnp.mean(jnp.square(r1 - mu1), axis=-1, keepdims=True)
    n1 = (r1 - mu1) * lax.rsqrt(var1 + eps) * g1_ref[0] + be1_ref[0]

    # ---- MLP: c_fc -> gelu(tanh) -> c_proj, bf16 matmuls / f32 accum ----
    # TODO(synk): on v6e/v7x the GELU polynomial could run in bf16 (the next
    # matmul consumes bf16 anyway); kept f32 for v5e portability.
    # TODO(synk): for very large D on v7x, K-tile the (D,4D)/(4D,D) weights
    # (pltpu.emit_pipeline) or set pipeline_mode=pl.Buffered(1) on them.
    hmid = jnp.dot(n1.astype(jnp.bfloat16), wfc_ref[0],
                   preferred_element_type=jnp.float32) + bfc_ref[0]
    c = math.sqrt(2.0 / math.pi)
    hmid3 = hmid * hmid * hmid                                  # explicit cube, no pow
    g = 0.5 * hmid * (1.0 + jnp.tanh(c * (hmid + 0.044715 * hmid3)))
    h2 = jnp.dot(g.astype(jnp.bfloat16), wp2_ref[0],
                 preferred_element_type=jnp.float32) + bp2_ref[0]

    # ---- residual + LayerNorm (ln_2) -> new resident hidden state ----
    r2 = n1 + h2
    mu2 = jnp.mean(r2, axis=-1, keepdims=True)
    var2 = jnp.mean(jnp.square(r2 - mu2), axis=-1, keepdims=True)
    y = (r2 - mu2) * lax.rsqrt(var2 + eps) * g2_ref[0] + be2_ref[0]
    out_ref[...] = y.reshape(Bt, S, D)


# ----------------------------------------------------------------------------
# Wrapper: single pallas_call over (sequence blocks, layers).
# ----------------------------------------------------------------------------
_STACKED_PARAM_NAMES = ("wqkv", "bqkv", "wproj", "bproj", "g1", "be1",
                        "wfc", "bfc", "wp2", "bp2", "g2", "be2")


def _vmem_limit_bytes():
    # Generation-aware VMEM budget: leave ~8 MiB headroom for internal scratch;
    # cap at 112 MiB on 128 MiB parts, 56 MiB on 64 MiB (v7x) parts.
    cap = 64 * 1024 * 1024
    try:
        cap = int(pltpu.get_tpu_info().vmem_capacity_bytes)
    except Exception:
        pass
    return max(min(cap - 8 * 1024 * 1024, 112 * 1024 * 1024), 32 * 1024 * 1024)


def _pick_block_batch(B, S, D, vmem_limit):
    # Resident, double-buffered bf16 weights for one layer: 2 * 2 bytes * 12*D^2.
    weight_bytes = 48 * D * D
    budget = max(vmem_limit - weight_bytes - (6 << 20), 2 << 20)
    # Rough per-sequence activation footprint (f32): hidden in/out (double
    # buffered), qkv scratch, merged heads, MLP intermediate (+bf16 copy),
    # one (S,S) score + prob tile.
    per_seq = 4 * S * (4 * D + 3 * D + D + 6 * D + 2 * S)
    best = 1
    for bt in range(1, B + 1):
        if B % bt == 0 and bt * per_seq <= budget and bt * S <= 2048:
            best = bt
    return best


def gpt_transformer(hidden, params, *, n_head, eps):
    B, S, D = hidden.shape
    L = params["wqkv"].shape[0]
    # TODO(synk): for full lane utilization D should be padded to a multiple of
    # 128 (with masked LayerNorm stats); tiny demo shapes run unpadded.

    vmem_limit = _vmem_limit_bytes()
    Bt = _pick_block_batch(B, S, D, vmem_limit)

    weights = [params[name] for name in _STACKED_PARAM_NAMES]
    in_specs = [pl.BlockSpec((Bt, S, D), lambda b, l: (b, 0, 0))]
    in_specs += [pl.BlockSpec((1,) + w.shape[1:], lambda b, l: (l, 0, 0))
                 for w in weights]

    kernel = functools.partial(gpt_stack_kernel, n_head=n_head, eps=eps)

    return pl.pallas_call(
        kernel,
        out_shape=jax.ShapeDtypeStruct((B, S, D), jnp.float32),
        grid_spec=pltpu.PrefetchScalarGridSpec(
            num_scalar_prefetch=0,
            grid=(B // Bt, L),
            in_specs=in_specs,
            out_specs=pl.BlockSpec((Bt, S, D), lambda b, l: (b, 0, 0)),
            scratch_shapes=[pltpu.VMEM((Bt * S, 3 * D), jnp.float32)],  # QKV staging
        ),
        input_output_aliases={0: 0},     # update the hidden buffer in place
        compiler_params=pltpu.CompilerParams(
            dimension_semantics=("parallel", "arbitrary"),
            vmem_limit_bytes=vmem_limit,
        ),
    )(hidden, *weights)


# ----------------------------------------------------------------------------
# Deterministic synthetic parameter init (shapes follow the PyTorch module);
# per-layer weights stacked on a leading axis, matmul weights stored bf16.
# ----------------------------------------------------------------------------
def init_params(key, *, n_embd, n_head, n_layer, vocab_size, n_positions):
    D, L = n_embd, n_layer
    keys = jax.random.split(key, 2 + 4 * n_layer)

    tokens_embed = 0.02 * jax.random.normal(keys[0], (vocab_size, D), jnp.float32)
    positions_embed = 0.02 * jax.random.normal(keys[1], (n_positions, D), jnp.float32)

    wqkv, wproj, wfc, wp2 = [], [], [], []
    for layer in range(n_layer):
        k0, k1, k2, k3 = keys[2 + 4 * layer: 2 + 4 * (layer + 1)]
        wqkv.append(0.02 * jax.random.normal(k0, (D, 3 * D), jnp.float32))  # c_attn
        wproj.append(0.02 * jax.random.normal(k1, (D, D), jnp.float32))     # c_proj
        wfc.append(0.02 * jax.random.normal(k2, (D, 4 * D), jnp.float32))   # mlp c_fc
        wp2.append(0.02 * jax.random.normal(k3, (4 * D, D), jnp.float32))   # mlp c_proj

    return {
        "tokens_embed": tokens_embed,
        "positions_embed": positions_embed,
        "wqkv": jnp.stack(wqkv).astype(jnp.bfloat16),
        "bqkv": jnp.zeros((L, 1, 3 * D), jnp.float32),
        "wproj": jnp.stack(wproj).astype(jnp.bfloat16),
        "bproj": jnp.zeros((L, 1, D), jnp.float32),
        "g1": jnp.ones((L, 1, D), jnp.float32),
        "be1": jnp.zeros((L, 1, D), jnp.float32),
        "wfc": jnp.stack(wfc).astype(jnp.bfloat16),
        "bfc": jnp.zeros((L, 1, 4 * D), jnp.float32),
        "wp2": jnp.stack(wp2).astype(jnp.bfloat16),
        "bp2": jnp.zeros((L, 1, D), jnp.float32),
        "g2": jnp.ones((L, 1, D), jnp.float32),
        "be2": jnp.zeros((L, 1, D), jnp.float32),
    }


# ----------------------------------------------------------------------------
# Full forward of OpenAIGPTDoubleHeadsModel: returns hidden states reshaped to
# (batch*num_choices, seq, n_embd), exactly like the reference forward.
# ----------------------------------------------------------------------------
def gpt_double_heads_forward(params, input_ids, *, n_head, eps):
    batch, num_choices, seq = input_ids.shape
    ids = input_ids.reshape(-1, seq)                      # (B, S)
    # TODO(synk): embedding gather stays in plain JAX (data-dependent gather,
    # no rectangular BlockSpec form).
    tok = jnp.take(params["tokens_embed"], ids, axis=0)   # (B, S, D)
    pos = params["positions_embed"][:seq][None, :, :]     # (1, S, D)
    hidden = (tok + pos).astype(jnp.float32)              # embd dropout = identity

    hidden = gpt_transformer(hidden, params, n_head=n_head, eps=eps)

    # hidden_states.view(-1, seq, n_embd) -- already flat over (batch, choices)
    return hidden
    # TODO(synk): lm_head / multiple_choice_head (SequenceSummary) / expand are
    # unused by the reference forward (it returns hidden_states only).


# ----------------------------------------------------------------------------
# Plain-JAX reference (same bf16 matmul precision) for a numerical sanity check.
# ----------------------------------------------------------------------------
def _layernorm(x, g, b, eps):
    mu = jnp.mean(x, axis=-1, keepdims=True)
    var = jnp.mean(jnp.square(x - mu), axis=-1, keepdims=True)
    return (x - mu) * lax.rsqrt(var + eps) * g + b


def _bf16_mm(a, w):
    return jnp.dot(a.astype(jnp.bfloat16), w.astype(jnp.bfloat16),
                   preferred_element_type=jnp.float32)


def gpt_double_heads_reference(params, input_ids, *, n_head, eps):
    batch, num_choices, seq = input_ids.shape
    ids = input_ids.reshape(-1, seq)
    tok = jnp.take(params["tokens_embed"], ids, axis=0)
    pos = params["positions_embed"][:seq][None, :, :]
    h = (tok + pos).astype(jnp.float32)
    B, S, D = h.shape
    dh = D // n_head
    L = params["wqkv"].shape[0]
    causal = jnp.tril(jnp.ones((S, S), jnp.float32))
    c = math.sqrt(2.0 / math.pi)

    for l in range(L):
        x = h.reshape(B * S, D)
        qkv = (_bf16_mm(x, params["wqkv"][l]) + params["bqkv"][l]).reshape(B, S, 3 * D)
        q, k, v = jnp.split(qkv, 3, axis=-1)
        q = q.reshape(B, S, n_head, dh).transpose(0, 2, 1, 3) / math.sqrt(dh)
        k = k.reshape(B, S, n_head, dh).transpose(0, 2, 1, 3)
        v = v.reshape(B, S, n_head, dh).transpose(0, 2, 1, 3)
        w = jnp.einsum('bhqd,bhkd->bhqk', q.astype(jnp.bfloat16),
                       k.astype(jnp.bfloat16), preferred_element_type=jnp.float32)
        w = w * causal + -10000.0 * (1.0 - causal)
        w = jax.nn.softmax(w, axis=-1)
        o = jnp.einsum('bhqk,bhkd->bhqd', w.astype(jnp.bfloat16),
                       v.astype(jnp.bfloat16), preferred_element_type=jnp.float32)
        o = o.transpose(0, 2, 1, 3).reshape(B * S, D)
        a = _bf16_mm(o, params["wproj"][l]) + params["bproj"][l]
        n1 = _layernorm(x + a, params["g1"][l], params["be1"][l], eps)
        hm = _bf16_mm(n1, params["wfc"][l]) + params["bfc"][l]
        g = 0.5 * hm * (1.0 + jnp.tanh(c * (hm + 0.044715 * hm * hm * hm)))
        h2 = _bf16_mm(g, params["wp2"][l]) + params["bp2"][l]
        h = _layernorm(n1 + h2, params["g2"][l], params["be2"][l], eps).reshape(B, S, D)
    return h


if __name__ == "__main__":
    cfg = dict(n_embd=32, n_head=4, n_layer=2, afn="gelu",
               layer_norm_epsilon=1e-5,
               embd_pdrop=0.0, attn_pdrop=0.0, resid_pdrop=0.0,
               output_attentions=False)
    vocab_size = 256
    n_positions = 64
    batch, num_choices, seq = 2, 2, 8

    key = jax.random.PRNGKey(0)
    k_params, k_ids = jax.random.split(key)
    params = init_params(k_params,
                         n_embd=cfg["n_embd"], n_head=cfg["n_head"],
                         n_layer=cfg["n_layer"], vocab_size=vocab_size,
                         n_positions=n_positions)
    input_ids = jax.random.randint(k_ids, (batch, num_choices, seq), 0, vocab_size)

    fwd = jax.jit(functools.partial(gpt_double_heads_forward,
                                    n_head=cfg["n_head"],
                                    eps=cfg["layer_norm_epsilon"]))
    out = jax.block_until_ready(fwd(params, input_ids))

    assert out.shape == (batch * num_choices, seq, cfg["n_embd"]), out.shape
    assert bool(jnp.all(jnp.isfinite(out)))

    ref = gpt_double_heads_reference(params, input_ids,
                                     n_head=cfg["n_head"],
                                     eps=cfg["layer_norm_epsilon"])
    max_err = float(jnp.max(jnp.abs(out - ref)))
    assert max_err < 5e-2, f"max abs error vs reference: {max_err}"

    print("KERNEL_OK")
</pallas_src>

<mosaic_0001>
module attributes {stable_mosaic.version = 11 : i64} {
  func.func @gpt_stack_kernel(%arg0: i32, %arg1: i32, %arg2: memref<4x8x32xf32, #tpu.memory_space<vmem>>, %arg3: memref<1x32x96xbf16, #tpu.memory_space<vmem>>, %arg4: memref<1x1x96xf32, #tpu.memory_space<vmem>>, %arg5: memref<1x32x32xbf16, #tpu.memory_space<vmem>>, %arg6: memref<1x1x32xf32, #tpu.memory_space<vmem>>, %arg7: memref<1x1x32xf32, #tpu.memory_space<vmem>>, %arg8: memref<1x1x32xf32, #tpu.memory_space<vmem>>, %arg9: memref<1x32x128xbf16, #tpu.memory_space<vmem>>, %arg10: memref<1x1x128xf32, #tpu.memory_space<vmem>>, %arg11: memref<1x128x32xbf16, #tpu.memory_space<vmem>>, %arg12: memref<1x1x32xf32, #tpu.memory_space<vmem>>, %arg13: memref<1x1x32xf32, #tpu.memory_space<vmem>>, %arg14: memref<1x1x32xf32, #tpu.memory_space<vmem>>, %arg15: memref<4x8x32xf32, #tpu.memory_space<vmem>>, %arg16: memref<32x96xf32, #tpu.memory_space<vmem>>) attributes {dimension_semantics = [#tpu.dimension_semantics<parallel>, #tpu.dimension_semantics<arbitrary>], iteration_bounds = array<i64: 1, 2>, scalar_prefetch = 0 : i64, scratch_operands = 1 : i64, tpu.core_type = #tpu.core_type<tc>, window_params = [{transform_indices = @transform_0, window_bounds = array<i64: 4, 8, 32>}, {transform_indices = @transform_1, window_bounds = array<i64: 1, 32, 96>}, {transform_indices = @transform_2, window_bounds = array<i64: 1, 1, 96>}, {transform_indices = @transform_3, window_bounds = array<i64: 1, 32, 32>}, {transform_indices = @transform_4, window_bounds = array<i64: 1, 1, 32>}, {transform_indices = @transform_5, window_bounds = array<i64: 1, 1, 32>}, {transform_indices = @transform_6, window_bounds = array<i64: 1, 1, 32>}, {transform_indices = @transform_7, window_bounds = array<i64: 1, 32, 128>}, {transform_indices = @transform_8, window_bounds = array<i64: 1, 1, 128>}, {transform_indices = @transform_9, window_bounds = array<i64: 1, 128, 32>}, {transform_indices = @transform_10, window_bounds = array<i64: 1, 1, 32>}, {transform_indices = @transform_11, window_bounds = array<i64: 1, 1, 32>}, {transform_indices = @transform_12, window_bounds = array<i64: 1, 1, 32>}, {transform_indices = @transform_13, window_bounds = array<i64: 4, 8, 32>}]} {
    %c0_i32 = arith.constant 0 : i32
    %0 = arith.cmpi eq, %arg1, %c0_i32 : i32
    %1 = arith.extui %0 : i1 to i32
    %c0_i32_0 = arith.constant 0 : i32
    %2 = arith.cmpi ne, %1, %c0_i32_0 : i32
    scf.if %2 {
      %c0_98 = arith.constant 0 : index
      %c0_99 = arith.constant 0 : index
      %c0_100 = arith.constant 0 : index
      %225 = vector.load %arg2[%c0_98, %c0_99, %c0_100] : memref<4x8x32xf32, #tpu.memory_space<vmem>>, vector<4x8x32xf32>
      %c0_101 = arith.constant 0 : index
      %c0_102 = arith.constant 0 : index
      %c0_103 = arith.constant 0 : index
      %226 = vector.load %arg15[%c0_101, %c0_102, %c0_103] : memref<4x8x32xf32, #tpu.memory_space<vmem>>, vector<4x8x32xf32>
      tpu.vector_store %arg15[%c0_101, %c0_102, %c0_103], %225 {strides = array<i32>} : memref<4x8x32xf32, #tpu.memory_space<vmem>>, vector<4x8x32xf32>,
    } else {
    }
    %c0 = arith.constant 0 : index
    %c0_1 = arith.constant 0 : index
    %c0_2 = arith.constant 0 : index
    %3 = vector.load %arg15[%c0, %c0_1, %c0_2] : memref<4x8x32xf32, #tpu.memory_space<vmem>>, vector<4x8x32xf32>
    %4 = vector.shape_cast %3 : vector<4x8x32xf32> to vector<32x32xf32>
    %5 = arith.truncf %4 : vector<32x32xf32> to vector<32x32xbf16>
    %c0_3 = arith.constant 0 : index
    %c0_4 = arith.constant 0 : index
    %c0_5 = arith.constant 0 : index
    %6 = vector.load %arg3[%c0_3, %c0_4, %c0_5] : memref<1x32x96xbf16, #tpu.memory_space<vmem>>, vector<1x32x96xbf16>
    %7 = vector.shape_cast %6 : vector<1x32x96xbf16> to vector<32x96xbf16>
    %cst = arith.constant dense<0.000000e+00> : vector<32x96xf32>
    %8 = tpu.matmul %5, %7, %cst {dimension_numbers = #tpu.dot_dimension_numbers<[1], [0], [0], [1], [0, 0, 1, 1], [], []>} : vector<32x32xbf16>, vector<32x96xbf16>, vector<32x96xf32> -> vector<32x96xf32>
    %c0_6 = arith.constant 0 : index
    %c0_7 = arith.constant 0 : index
    %c0_8 = arith.constant 0 : index
    %9 = vector.load %arg4[%c0_6, %c0_7, %c0_8] : memref<1x1x96xf32, #tpu.memory_space<vmem>>, vector<1x1x96xf32>
    %10 = vector.shape_cast %9 : vector<1x1x96xf32> to vector<1x96xf32>
    %11 = vector.broadcast %10 : vector<1x96xf32> to vector<32x96xf32>
    %12 = arith.addf %8, %11 : vector<32x96xf32>
    %c0_9 = arith.constant 0 : index
    %c0_10 = arith.constant 0 : index
    %13 = vector.load %arg16[%c0_9, %c0_10] : memref<32x96xf32, #tpu.memory_space<vmem>>, vector<32x96xf32>
    tpu.vector_store %arg16[%c0_9, %c0_10], %12 {strides = array<i32>} : memref<32x96xf32, #tpu.memory_space<vmem>>, vector<32x96xf32>,
    %14 = tpu.iota {dimensions = array<i32: 0>} : vector<8x8xi32>
    %15 = tpu.iota {dimensions = array<i32: 1>} : vector<8x8xi32>
    %16 = arith.cmpi sle, %15, %14 : vector<8x8xi32>
    %17 = vector.shape_cast %16 : vector<8x8xi1> to vector<1x8x8xi1>
    %c0_11 = arith.constant 0 : index
    %c0_12 = arith.constant 0 : index
    %18 = vector.load %arg16[%c0_11, %c0_12] : memref<32x96xf32, #tpu.memory_space<vmem>>, vector<32x8xf32>
    %cst_13 = arith.constant 0.353553385 : f32
    %19 = vector.broadcast %cst_13 : f32 to vector<32x8xf32>
    %20 = arith.mulf %18, %19 : vector<32x8xf32>
    %21 = arith.truncf %20 : vector<32x8xf32> to vector<32x8xbf16>
    %22 = vector.shape_cast %21 : vector<32x8xbf16> to vector<4x8x8xbf16>
    %c0_14 = arith.constant 0 : index
    %c32 = arith.constant 32 : index
    %23 = vector.load %arg16[%c0_14, %c32] : memref<32x96xf32, #tpu.memory_space<vmem>>, vector<32x8xf32>
    %24 = arith.truncf %23 : vector<32x8xf32> to vector<32x8xbf16>
    %25 = vector.shape_cast %24 : vector<32x8xbf16> to vector<4x8x8xbf16>
    %c0_15 = arith.constant 0 : index
    %c64 = arith.constant 64 : index
    %26 = vector.load %arg16[%c0_15, %c64] : memref<32x96xf32, #tpu.memory_space<vmem>>, vector<32x8xf32>
    %27 = arith.truncf %26 : vector<32x8xf32> to vector<32x8xbf16>
    %28 = vector.shape_cast %27 : vector<32x8xbf16> to vector<4x8x8xbf16>
    "tpu.trace_start"() <{level = 10 : i32, message = "bqd,bkd->bqk"}> : () -> ()
    %cst_16 = arith.constant dense<0.000000e+00> : vector<4x8x8xf32>
    %29 = tpu.matmul %22, %25, %cst_16 {dimension_numbers = #tpu.dot_dimension_numbers<[2], [2], [1], [1], [0, 0, 0, 1, 1, 1], [0], [0]>} : vector<4x8x8xbf16>, vector<4x8x8xbf16>, vector<4x8x8xf32> -> vector<4x8x8xf32>
    %cst_17 = arith.constant -1.000000e+04 : f32
    "tpu.trace_stop"() : () -> ()
    %30 = vector.shape_cast %17 : vector<1x8x8xi1> to vector<1x8x8xi1>
    %31 = vector.broadcast %30 : vector<1x8x8xi1> to vector<4x8x8xi1>
    %32 = vector.broadcast %cst_17 : f32 to vector<4x8x8xf32>
    %33 = arith.select %31, %29, %32 : vector<4x8x8xi1>, vector<4x8x8xf32>
    %cst_18 = arith.constant dense<0xFF800000> : vector<4x8xf32>
    %34 = vector.multi_reduction <maximumf>, %33, %cst_18 [2] : vector<4x8x8xf32> to vector<4x8xf32>
    %35 = vector.shape_cast %34 : vector<4x8xf32> to vector<4x8x1xf32>
    %36 = vector.broadcast %35 : vector<4x8x1xf32> to vector<4x8x8xf32>
    %37 = arith.subf %33, %36 : vector<4x8x8xf32>
    %38 = math.exp %37 : vector<4x8x8xf32>
    %cst_19 = arith.constant dense<0.000000e+00> : vector<4x8xf32>
    %39 = vector.multi_reduction <add>, %38, %cst_19 [2] : vector<4x8x8xf32> to vector<4x8xf32>
    %40 = vector.shape_cast %39 : vector<4x8xf32> to vector<4x8x1xf32>
    %41 = tpu.reciprocal %40 {approx = true} : vector<4x8x1xf32> -> vector<4x8x1xf32>
    %42 = vector.broadcast %41 : vector<4x8x1xf32> to vector<4x8x8xf32>
    %43 = arith.mulf %38, %42 : vector<4x8x8xf32>
    %44 = arith.truncf %43 : vector<4x8x8xf32> to vector<4x8x8xbf16>
    "tpu.trace_start"() <{level = 10 : i32, message = "bqk,bkd->bqd"}> : () -> ()
    %cst_20 = arith.constant dense<0.000000e+00> : vector<4x8x8xf32>
    %45 = tpu.matmul %44, %28, %cst_20 {dimension_numbers = #tpu.dot_dimension_numbers<[2], [1], [1], [2], [0, 0, 0, 1, 1, 2], [0], [0]>} : vector<4x8x8xbf16>, vector<4x8x8xbf16>, vector<4x8x8xf32> -> vector<4x8x8xf32>
    "tpu.trace_stop"() : () -> ()
    %c0_21 = arith.constant 0 : index
    %c8 = arith.constant 8 : index
    %46 = vector.load %arg16[%c0_21, %c8] : memref<32x96xf32, #tpu.memory_space<vmem>>, vector<32x8xf32>
    %cst_22 = arith.constant 0.353553385 : f32
    %47 = vector.broadcast %cst_22 : f32 to vector<32x8xf32>
    %48 = arith.mulf %46, %47 : vector<32x8xf32>
    %49 = arith.truncf %48 : vector<32x8xf32> to vector<32x8xbf16>
    %50 = vector.shape_cast %49 : vector<32x8xbf16> to vector<4x8x8xbf16>
    %c0_23 = arith.constant 0 : index
    %c40 = arith.constant 40 : index
    %51 = vector.load %arg16[%c0_23, %c40] : memref<32x96xf32, #tpu.memory_space<vmem>>, vector<32x8xf32>
    %52 = arith.truncf %51 : vector<32x8xf32> to vector<32x8xbf16>
    %53 = vector.shape_cast %52 : vector<32x8xbf16> to vector<4x8x8xbf16>
    %c0_24 = arith.constant 0 : index
    %c72 = arith.constant 72 : index
    %54 = vector.load %arg16[%c0_24, %c72] : memref<32x96xf32, #tpu.memory_space<vmem>>, vector<32x8xf32>
    %55 = arith.truncf %54 : vector<32x8xf32> to vector<32x8xbf16>
    %56 = vector.shape_cast %55 : vector<32x8xbf16> to vector<4x8x8xbf16>
    "tpu.trace_start"() <{level = 10 : i32, message = "bqd,bkd->bqk"}> : () -> ()
    %cst_25 = arith.constant dense<0.000000e+00> : vector<4x8x8xf32>
    %57 = tpu.matmul %50, %53, %cst_25 {dimension_numbers = #tpu.dot_dimension_numbers<[2], [2], [1], [1], [0, 0, 0, 1, 1, 1], [0], [0]>} : vector<4x8x8xbf16>, vector<4x8x8xbf16>, vector<4x8x8xf32> -> vector<4x8x8xf32>
    %cst_26 = arith.constant -1.000000e+04 : f32
    "tpu.trace_stop"() : () -> ()
    %58 = vector.shape_cast %17 : vector<1x8x8xi1> to vector<1x8x8xi1>
    %59 = vector.broadcast %58 : vector<1x8x8xi1> to vector<4x8x8xi1>
    %60 = vector.broadcast %cst_26 : f32 to vector<4x8x8xf32>
    %61 = arith.select %59, %57, %60 : vector<4x8x8xi1>, vector<4x8x8xf32>
    %cst_27 = arith.constant dense<0xFF800000> : vector<4x8xf32>
    %62 = vector.multi_reduction <maximumf>, %61, %cst_27 [2] : vector<4x8x8xf32> to vector<4x8xf32>
    %63 = vector.shape_cast %62 : vector<4x8xf32> to vector<4x8x1xf32>
    %64 = vector.broadcast %63 : vector<4x8x1xf32> to vector<4x8x8xf32>
    %65 = arith.subf %61, %64 : vector<4x8x8xf32>
    %66 = math.exp %65 : vector<4x8x8xf32>
    %cst_28 = arith.constant dense<0.000000e+00> : vector<4x8xf32>
    %67 = vector.multi_reduction <add>, %66, %cst_28 [2] : vector<4x8x8xf32> to vector<4x8xf32>
    %68 = vector.shape_cast %67 : vector<4x8xf32> to vector<4x8x1xf32>
    %69 = tpu.reciprocal %68 {approx = true} : vector<4x8x1xf32> -> vector<4x8x1xf32>
    %70 = vector.broadcast %69 : vector<4x8x1xf32> to vector<4x8x8xf32>
    %71 = arith.mulf %66, %70 : vector<4x8x8xf32>
    %72 = arith.truncf %71 : vector<4x8x8xf32> to vector<4x8x8xbf16>
    "tpu.trace_start"() <{level = 10 : i32, message = "bqk,bkd->bqd"}> : () -> ()
    %cst_29 = arith.constant dense<0.000000e+00> : vector<4x8x8xf32>
    %73 = tpu.matmul %72, %56, %cst_29 {dimension_numbers = #tpu.dot_dimension_numbers<[2], [1], [1], [2], [0, 0, 0, 1, 1, 2], [0], [0]>} : vector<4x8x8xbf16>, vector<4x8x8xbf16>, vector<4x8x8xf32> -> vector<4x8x8xf32>
    "tpu.trace_stop"() : () -> ()
    %c0_30 = arith.constant 0 : index
    %c16 = arith.constant 16 : index
    %74 = vector.load %arg16[%c0_30, %c16] : memref<32x96xf32, #tpu.memory_space<vmem>>, vector<32x8xf32>
    %cst_31 = arith.constant 0.353553385 : f32
    %75 = vector.broadcast %cst_31 : f32 to vector<32x8xf32>
    %76 = arith.mulf %74, %75 : vector<32x8xf32>
    %77 = arith.truncf %76 : vector<32x8xf32> to vector<32x8xbf16>
    %78 = vector.shape_cast %77 : vector<32x8xbf16> to vector<4x8x8xbf16>
    %c0_32 = arith.constant 0 : index
    %c48 = arith.constant 48 : index
    %79 = vector.load %arg16[%c0_32, %c48] : memref<32x96xf32, #tpu.memory_space<vmem>>, vector<32x8xf32>
    %80 = arith.truncf %79 : vector<32x8xf32> to vector<32x8xbf16>
    %81 = vector.shape_cast %80 : vector<32x8xbf16> to vector<4x8x8xbf16>
    %c0_33 = arith.constant 0 : index
    %c80 = arith.constant 80 : index
    %82 = vector.load %arg16[%c0_33, %c80] : memref<32x96xf32, #tpu.memory_space<vmem>>, vector<32x8xf32>
    %83 = arith.truncf %82 : vector<32x8xf32> to vector<32x8xbf16>
    %84 = vector.shape_cast %83 : vector<32x8xbf16> to vector<4x8x8xbf16>
    "tpu.trace_start"() <{level = 10 : i32, message = "bqd,bkd->bqk"}> : () -> ()
    %cst_34 = arith.constant dense<0.000000e+00> : vector<4x8x8xf32>
    %85 = tpu.matmul %78, %81, %cst_34 {dimension_numbers = #tpu.dot_dimension_numbers<[2], [2], [1], [1], [0, 0, 0, 1, 1, 1], [0], [0]>} : vector<4x8x8xbf16>, vector<4x8x8xbf16>, vector<4x8x8xf32> -> vector<4x8x8xf32>
    %cst_35 = arith.constant -1.000000e+04 : f32
    "tpu.trace_stop"() : () -> ()
    %86 = vector.shape_cast %17 : vector<1x8x8xi1> to vector<1x8x8xi1>
    %87 = vector.broadcast %86 : vector<1x8x8xi1> to vector<4x8x8xi1>
    %88 = vector.broadcast %cst_35 : f32 to vector<4x8x8xf32>
    %89 = arith.select %87, %85, %88 : vector<4x8x8xi1>, vector<4x8x8xf32>
    %cst_36 = arith.constant dense<0xFF800000> : vector<4x8xf32>
    %90 = vector.multi_reduction <maximumf>, %89, %cst_36 [2] : vector<4x8x8xf32> to vector<4x8xf32>
    %91 = vector.shape_cast %90 : vector<4x8xf32> to vector<4x8x1xf32>
    %92 = vector.broadcast %91 : vector<4x8x1xf32> to vector<4x8x8xf32>
    %93 = arith.subf %89, %92 : vector<4x8x8xf32>
    %94 = math.exp %93 : vector<4x8x8xf32>
    %cst_37 = arith.constant dense<0.000000e+00> : vector<4x8xf32>
    %95 = vector.multi_reduction <add>, %94, %cst_37 [2] : vector<4x8x8xf32> to vector<4x8xf32>
    %96 = vector.shape_cast %95 : vector<4x8xf32> to vector<4x8x1xf32>
    %97 = tpu.reciprocal %96 {approx = true} : vector<4x8x1xf32> -> vector<4x8x1xf32>
    %98 = vector.broadcast %97 : vector<4x8x1xf32> to vector<4x8x8xf32>
    %99 = arith.mulf %94, %98 : vector<4x8x8xf32>
    %100 = arith.truncf %99 : vector<4x8x8xf32> to vector<4x8x8xbf16>
    "tpu.trace_start"() <{level = 10 : i32, message = "bqk,bkd->bqd"}> : () -> ()
    %cst_38 = arith.constant dense<0.000000e+00> : vector<4x8x8xf32>
    %101 = tpu.matmul %100, %84, %cst_38 {dimension_numbers = #tpu.dot_dimension_numbers<[2], [1], [1], [2], [0, 0, 0, 1, 1, 2], [0], [0]>} : vector<4x8x8xbf16>, vector<4x8x8xbf16>, vector<4x8x8xf32> -> vector<4x8x8xf32>
    "tpu.trace_stop"() : () -> ()
    %c0_39 = arith.constant 0 : index
    %c24 = arith.constant 24 : index
    %102 = vector.load %arg16[%c0_39, %c24] : memref<32x96xf32, #tpu.memory_space<vmem>>, vector<32x8xf32>
    %cst_40 = arith.constant 0.353553385 : f32
    %103 = vector.broadcast %cst_40 : f32 to vector<32x8xf32>
    %104 = arith.mulf %102, %103 : vector<32x8xf32>
    %105 = arith.truncf %104 : vector<32x8xf32> to vector<32x8xbf16>
    %106 = vector.shape_cast %105 : vector<32x8xbf16> to vector<4x8x8xbf16>
    %c0_41 = arith.constant 0 : index
    %c56 = arith.constant 56 : index
    %107 = vector.load %arg16[%c0_41, %c56] : memref<32x96xf32, #tpu.memory_space<vmem>>, vector<32x8xf32>
    %108 = arith.truncf %107 : vector<32x8xf32> to vector<32x8xbf16>
    %109 = vector.shape_cast %108 : vector<32x8xbf16> to vector<4x8x8xbf16>
    %c0_42 = arith.constant 0 : index
    %c88 = arith.constant 88 : index
    %110 = vector.load %arg16[%c0_42, %c88] : memref<32x96xf32, #tpu.memory_space<vmem>>, vector<32x8xf32>
    %111 = arith.truncf %110 : vector<32x8xf32> to vector<32x8xbf16>
    %112 = vector.shape_cast %111 : vector<32x8xbf16> to vector<4x8x8xbf16>
    "tpu.trace_start"() <{level = 10 : i32, message = "bqd,bkd->bqk"}> : () -> ()
    %cst_43 = arith.constant dense<0.000000e+00> : vector<4x8x8xf32>
    %113 = tpu.matmul %106, %109, %cst_43 {dimension_numbers = #tpu.dot_dimension_numbers<[2], [2], [1], [1], [0, 0, 0, 1, 1, 1], [0], [0]>} : vector<4x8x8xbf16>, vector<4x8x8xbf16>, vector<4x8x8xf32> -> vector<4x8x8xf32>
    %cst_44 = arith.constant -1.000000e+04 : f32
    "tpu.trace_stop"() : () -> ()
    %114 = vector.shape_cast %17 : vector<1x8x8xi1> to vector<1x8x8xi1>
    %115 = vector.broadcast %114 : vector<1x8x8xi1> to vector<4x8x8xi1>
    %116 = vector.broadcast %cst_44 : f32 to vector<4x8x8xf32>
    %117 = arith.select %115, %113, %116 : vector<4x8x8xi1>, vector<4x8x8xf32>
    %cst_45 = arith.constant dense<0xFF800000> : vector<4x8xf32>
    %118 = vector.multi_reduction <maximumf>, %117, %cst_45 [2] : vector<4x8x8xf32> to vector<4x8xf32>
    %119 = vector.shape_cast %118 : vector<4x8xf32> to vector<4x8x1xf32>
    %120 = vector.broadcast %119 : vector<4x8x1xf32> to vector<4x8x8xf32>
    %121 = arith.subf %117, %120 : vector<4x8x8xf32>
    %122 = math.exp %121 : vector<4x8x8xf32>
    %cst_46 = arith.constant dense<0.000000e+00> : vector<4x8xf32>
    %123 = vector.multi_reduction <add>, %122, %cst_46 [2] : vector<4x8x8xf32> to vector<4x8xf32>
    %124 = vector.shape_cast %123 : vector<4x8xf32> to vector<4x8x1xf32>
    %125 = tpu.reciprocal %124 {approx = true} : vector<4x8x1xf32> -> vector<4x8x1xf32>
    %126 = vector.broadcast %125 : vector<4x8x1xf32> to vector<4x8x8xf32>
    %127 = arith.mulf %122, %126 : vector<4x8x8xf32>
    %128 = arith.truncf %127 : vector<4x8x8xf32> to vector<4x8x8xbf16>
    "tpu.trace_start"() <{level = 10 : i32, message = "bqk,bkd->bqd"}> : () -> ()
    %cst_47 = arith.constant dense<0.000000e+00> : vector<4x8x8xf32>
    %129 = tpu.matmul %128, %112, %cst_47 {dimension_numbers = #tpu.dot_dimension_numbers<[2], [1], [1], [2], [0, 0, 0, 1, 1, 2], [0], [0]>} : vector<4x8x8xbf16>, vector<4x8x8xbf16>, vector<4x8x8xf32> -> vector<4x8x8xf32>
    "tpu.trace_stop"() : () -> ()
    %130 = tpu.concatenate %45, %73, %101, %129 in 2 : vector<4x8x8xf32>, vector<4x8x8xf32>, vector<4x8x8xf32>, vector<4x8x8xf32> -> vector<4x8x32xf32>
    %131 = vector.shape_cast %130 : vector<4x8x32xf32> to vector<32x32xf32>
    %132 = arith.truncf %131 : vector<32x32xf32> to vector<32x32xbf16>
    %c0_48 = arith.constant 0 : index
    %c0_49 = arith.constant 0 : index
    %c0_50 = arith.constant 0 : index
    %133 = vector.load %arg5[%c0_48, %c0_49, %c0_50] : memref<1x32x32xbf16, #tpu.memory_space<vmem>>, vector<1x32x32xbf16>
    %134 = vector.shape_cast %133 : vector<1x32x32xbf16> to vector<32x32xbf16>
    %cst_51 = arith.constant dense<0.000000e+00> : vector<32x32xf32>
    %135 = tpu.matmul %132, %134, %cst_51 {dimension_numbers = #tpu.dot_dimension_numbers<[1], [0], [0], [1], [0, 0, 1, 1], [], []>} : vector<32x32xbf16>, vector<32x32xbf16>, vector<32x32xf32> -> vector<32x32xf32>
    %c0_52 = arith.constant 0 : index
    %c0_53 = arith.constant 0 : index
    %c0_54 = arith.constant 0 : index
    %136 = vector.load %arg6[%c0_52, %c0_53, %c0_54] : memref<1x1x32xf32, #tpu.memory_space<vmem>>, vector<1x1x32xf32>
    %137 = vector.shape_cast %136 : vector<1x1x32xf32> to vector<1x32xf32>
    %138 = vector.broadcast %137 : vector<1x32xf32> to vector<32x32xf32>
    %139 = arith.addf %135, %138 : vector<32x32xf32>
    %140 = arith.addf %4, %139 : vector<32x32xf32>
    %cst_55 = arith.constant dense<0.000000e+00> : vector<32xf32>
    %141 = vector.multi_reduction <add>, %140, %cst_55 [1] : vector<32x32xf32> to vector<32xf32>
    %142 = vector.shape_cast %141 : vector<32xf32> to vector<32x1xf32>
    %cst_56 = arith.constant 3.200000e+01 : f32
    %143 = vector.broadcast %cst_56 : f32 to vector<32x1xf32>
    %144 = arith.divf %142, %143 : vector<32x1xf32>
    %145 = vector.broadcast %144 : vector<32x1xf32> to vector<32x32xf32>
    %146 = arith.subf %140, %145 : vector<32x32xf32>
    %147 = arith.mulf %146, %146 : vector<32x32xf32>
    %cst_57 = arith.constant dense<0.000000e+00> : vector<32xf32>
    %148 = vector.multi_reduction <add>, %147, %cst_57 [1] : vector<32x32xf32> to vector<32xf32>
    %149 = vector.shape_cast %148 : vector<32xf32> to vector<32x1xf32>
    %cst_58 = arith.constant 3.200000e+01 : f32
    %150 = vector.broadcast %cst_58 : f32 to vector<32x1xf32>
    %151 = arith.divf %149, %150 : vector<32x1xf32>
    %152 = vector.broadcast %144 : vector<32x1xf32> to vector<32x32xf32>
    %153 = arith.subf %140, %152 : vector<32x32xf32>
    %cst_59 = arith.constant 9.99999974E-6 : f32
    %154 = vector.broadcast %cst_59 : f32 to vector<32x1xf32>
    %155 = arith.addf %151, %154 : vector<32x1xf32>
    %156 = math.rsqrt %155 : vector<32x1xf32>
    %157 = vector.broadcast %156 : vector<32x1xf32> to vector<32x32xf32>
    %158 = arith.mulf %153, %157 : vector<32x32xf32>
    %c0_60 = arith.constant 0 : index
    %c0_61 = arith.constant 0 : index
    %c0_62 = arith.constant 0 : index
    %159 = vector.load %arg7[%c0_60, %c0_61, %c0_62] : memref<1x1x32xf32, #tpu.memory_space<vmem>>, vector<1x1x32xf32>
    %160 = vector.shape_cast %159 : vector<1x1x32xf32> to vector<1x32xf32>
    %161 = vector.broadcast %160 : vector<1x32xf32> to vector<32x32xf32>
    %162 = arith.mulf %158, %161 : vector<32x32xf32>
    %c0_63 = arith.constant 0 : index
    %c0_64 = arith.constant 0 : index
    %c0_65 = arith.constant 0 : index
    %163 = vector.load %arg8[%c0_63, %c0_64, %c0_65] : memref<1x1x32xf32, #tpu.memory_space<vmem>>, vector<1x1x32xf32>
    %164 = vector.shape_cast %163 : vector<1x1x32xf32> to vector<1x32xf32>
    %165 = vector.broadcast %164 : vector<1x32xf32> to vector<32x32xf32>
    %166 = arith.addf %162, %165 : vector<32x32xf32>
    %167 = arith.truncf %166 : vector<32x32xf32> to vector<32x32xbf16>
    %c0_66 = arith.constant 0 : index
    %c0_67 = arith.constant 0 : index
    %c0_68 = arith.constant 0 : index
    %168 = vector.load %arg9[%c0_66, %c0_67, %c0_68] : memref<1x32x128xbf16, #tpu.memory_space<vmem>>, vector<1x32x128xbf16>
    %169 = vector.shape_cast %168 : vector<1x32x128xbf16> to vector<32x128xbf16>
    %cst_69 = arith.constant dense<0.000000e+00> : vector<32x128xf32>
    %170 = tpu.matmul %167, %169, %cst_69 {dimension_numbers = #tpu.dot_dimension_numbers<[1], [0], [0], [1], [0, 0, 1, 1], [], []>} : vector<32x32xbf16>, vector<32x128xbf16>, vector<32x128xf32> -> vector<32x128xf32>
    %c0_70 = arith.constant 0 : index
    %c0_71 = arith.constant 0 : index
    %c0_72 = arith.constant 0 : index
    %171 = vector.load %arg10[%c0_70, %c0_71, %c0_72] : memref<1x1x128xf32, #tpu.memory_space<vmem>>, vector<1x1x128xf32>
    %172 = vector.shape_cast %171 : vector<1x1x128xf32> to vector<1x128xf32>
    %173 = vector.broadcast %172 : vector<1x128xf32> to vector<32x128xf32>
    %174 = arith.addf %170, %173 : vector<32x128xf32>
    %175 = arith.mulf %174, %174 : vector<32x128xf32>
    %176 = arith.mulf %175, %174 : vector<32x128xf32>
    %cst_73 = arith.constant 5.000000e-01 : f32
    %177 = vector.broadcast %cst_73 : f32 to vector<32x128xf32>
    %178 = arith.mulf %177, %174 : vector<32x128xf32>
    %cst_74 = arith.constant 4.471500e-02 : f32
    %179 = vector.broadcast %cst_74 : f32 to vector<32x128xf32>
    %180 = arith.mulf %179, %176 : vector<32x128xf32>
    %181 = arith.addf %174, %180 : vector<32x128xf32>
    %cst_75 = arith.constant 0.797884583 : f32
    %182 = vector.broadcast %cst_75 : f32 to vector<32x128xf32>
    %183 = arith.mulf %182, %181 : vector<32x128xf32>
    %184 = math.tanh %183 : vector<32x128xf32>
    %cst_76 = arith.constant 1.000000e+00 : f32
    %185 = vector.broadcast %cst_76 : f32 to vector<32x128xf32>
    %186 = arith.addf %185, %184 : vector<32x128xf32>
    %187 = arith.mulf %178, %186 : vector<32x128xf32>
    %188 = arith.truncf %187 : vector<32x128xf32> to vector<32x128xbf16>
    %c0_77 = arith.constant 0 : index
    %c0_78 = arith.constant 0 : index
    %c0_79 = arith.constant 0 : index
    %189 = vector.load %arg11[%c0_77, %c0_78, %c0_79] : memref<1x128x32xbf16, #tpu.memory_space<vmem>>, vector<1x128x32xbf16>
    %190 = vector.shape_cast %189 : vector<1x128x32xbf16> to vector<128x32xbf16>
    %cst_80 = arith.constant dense<0.000000e+00> : vector<32x32xf32>
    %191 = tpu.matmul %188, %190, %cst_80 {dimension_numbers = #tpu.dot_dimension_numbers<[1], [0], [0], [1], [0, 0, 1, 1], [], []>} : vector<32x128xbf16>, vector<128x32xbf16>, vector<32x32xf32> -> vector<32x32xf32>
    %c0_81 = arith.constant 0 : index
    %c0_82 = arith.constant 0 : index
    %c0_83 = arith.constant 0 : index
    %192 = vector.load %arg12[%c0_81, %c0_82, %c0_83] : memref<1x1x32xf32, #tpu.memory_space<vmem>>, vector<1x1x32xf32>
    %193 = vector.shape_cast %192 : vector<1x1x32xf32> to vector<1x32xf32>
    %194 = vector.broadcast %193 : vector<1x32xf32> to vector<32x32xf32>
    %195 = arith.addf %191, %194 : vector<32x32xf32>
    %196 = arith.addf %166, %195 : vector<32x32xf32>
    %cst_84 = arith.constant dense<0.000000e+00> : vector<32xf32>
    %197 = vector.multi_reduction <add>, %196, %cst_84 [1] : vector<32x32xf32> to vector<32xf32>
    %198 = vector.shape_cast %197 : vector<32xf32> to vector<32x1xf32>
    %cst_85 = arith.constant 3.200000e+01 : f32
    %199 = vector.broadcast %cst_85 : f32 to vector<32x1xf32>
    %200 = arith.divf %198, %199 : vector<32x1xf32>
    %201 = vector.broadcast %200 : vector<32x1xf32> to vector<32x32xf32>
    %202 = arith.subf %196, %201 : vector<32x32xf32>
    %203 = arith.mulf %202, %202 : vector<32x32xf32>
    %cst_86 = arith.constant dense<0.000000e+00> : vector<32xf32>
    %204 = vector.multi_reduction <add>, %203, %cst_86 [1] : vector<32x32xf32> to vector<32xf32>
    %205 = vector.shape_cast %204 : vector<32xf32> to vector<32x1xf32>
    %cst_87 = arith.constant 3.200000e+01 : f32
    %206 = vector.broadcast %cst_87 : f32 to vector<32x1xf32>
    %207 = arith.divf %205, %206 : vector<32x1xf32>
    %208 = vector.broadcast %200 : vector<32x1xf32> to vector<32x32xf32>
    %209 = arith.subf %196, %208 : vector<32x32xf32>
    %cst_88 = arith.constant 9.99999974E-6 : f32
    %210 = vector.broadcast %cst_88 : f32 to vector<32x1xf32>
    %211 = arith.addf %207, %210 : vector<32x1xf32>
    %212 = math.rsqrt %211 : vector<32x1xf32>
    %213 = vector.broadcast %212 : vector<32x1xf32> to vector<32x32xf32>
    %214 = arith.mulf %209, %213 : vector<32x32xf32>
    %c0_89 = arith.constant 0 : index
    %c0_90 = arith.constant 0 : index
    %c0_91 = arith.constant 0 : index
    %215 = vector.load %arg13[%c0_89, %c0_90, %c0_91] : memref<1x1x32xf32, #tpu.memory_space<vmem>>, vector<1x1x32xf32>
    %216 = vector.shape_cast %215 : vector<1x1x32xf32> to vector<1x32xf32>
    %217 = vector.broadcast %216 : vector<1x32xf32> to vector<32x32xf32>
    %218 = arith.mulf %214, %217 : vector<32x32xf32>
    %c0_92 = arith.constant 0 : index
    %c0_93 = arith.constant 0 : index
    %c0_94 = arith.constant 0 : index
    %219 = vector.load %arg14[%c0_92, %c0_93, %c0_94] : memref<1x1x32xf32, #tpu.memory_space<vmem>>, vector<1x1x32xf32>
    %220 = vector.shape_cast %219 : vector<1x1x32xf32> to vector<1x32xf32>
    %221 = vector.broadcast %220 : vector<1x32xf32> to vector<32x32xf32>
    %222 = arith.addf %218, %221 : vector<32x32xf32>
    %223 = vector.shape_cast %222 : vector<32x32xf32> to vector<4x8x32xf32>
    %c0_95 = arith.constant 0 : index
    %c0_96 = arith.constant 0 : index
    %c0_97 = arith.constant 0 : index
    %224 = vector.load %arg15[%c0_95, %c0_96, %c0_97] : memref<4x8x32xf32, #tpu.memory_space<vmem>>, vector<4x8x32xf32>
    tpu.vector_store %arg15[%c0_95, %c0_96, %c0_97], %223 {strides = array<i32>} : memref<4x8x32xf32, #tpu.memory_space<vmem>>, vector<4x8x32xf32>,
    return
  }
  func.func @transform_0(%arg0: i32, %arg1: i32) -> (i32, i32, i32) {
    %c0_i32 = arith.constant 0 : i32
    %c0_i32_0 = arith.constant 0 : i32
    %c0_i32_1 = arith.constant 0 : i32
    return %arg0, %c0_i32, %c0_i32_0 : i32, i32, i32
  }
  func.func @transform_1(%arg0: i32, %arg1: i32) -> (i32, i32, i32) {
    %c0_i32 = arith.constant 0 : i32
    %c0_i32_0 = arith.constant 0 : i32
    %c0_i32_1 = arith.constant 0 : i32
    return %arg1, %c0_i32, %c0_i32_0 : i32, i32, i32
  }
  func.func @transform_2(%arg0: i32, %arg1: i32) -> (i32, i32, i32) {
    %c0_i32 = arith.constant 0 : i32
    %c0_i32_0 = arith.constant 0 : i32
    %c0_i32_1 = arith.constant 0 : i32
    return %arg1, %c0_i32, %c0_i32_0 : i32, i32, i32
  }
  func.func @transform_3(%arg0: i32, %arg1: i32) -> (i32, i32, i32) {
    %c0_i32 = arith.constant 0 : i32
    %c0_i32_0 = arith.constant 0 : i32
    %c0_i32_1 = arith.constant 0 : i32
    return %arg1, %c0_i32, %c0_i32_0 : i32, i32, i32
  }
  func.func @transform_4(%arg0: i32, %arg1: i32) -> (i32, i32, i32) {
    %c0_i32 = arith.constant 0 : i32
    %c0_i32_0 = arith.constant 0 : i32
    %c0_i32_1 = arith.constant 0 : i32
    return %arg1, %c0_i32, %c0_i32_0 : i32, i32, i32
  }
  func.func @transform_5(%arg0: i32, %arg1: i32) -> (i32, i32, i32) {
    %c0_i32 = arith.constant 0 : i32
    %c0_i32_0 = arith.constant 0 : i32
    %c0_i32_1 = arith.constant 0 : i32
    return %arg1, %c0_i32, %c0_i32_0 : i32, i32, i32
  }
  func.func @transform_6(%arg0: i32, %arg1: i32) -> (i32, i32, i32) {
    %c0_i32 = arith.constant 0 : i32
    %c0_i32_0 = arith.constant 0 : i32
    %c0_i32_1 = arith.constant 0 : i32
    return %arg1, %c0_i32, %c0_i32_0 : i32, i32, i32
  }
  func.func @transform_7(%arg0: i32, %arg1: i32) -> (i32, i32, i32) {
    %c0_i32 = arith.constant 0 : i32
    %c0_i32_0 = arith.constant 0 : i32
    %c0_i32_1 = arith.constant 0 : i32
    return %arg1, %c0_i32, %c0_i32_0 : i32, i32, i32
  }
  func.func @transform_8(%arg0: i32, %arg1: i32) -> (i32, i32, i32) {
    %c0_i32 = arith.constant 0 : i32
    %c0_i32_0 = arith.constant 0 : i32
    %c0_i32_1 = arith.constant 0 : i32
    return %arg1, %c0_i32, %c0_i32_0 : i32, i32, i32
  }
  func.func @transform_9(%arg0: i32, %arg1: i32) -> (i32, i32, i32) {
    %c0_i32 = arith.constant 0 : i32
    %c0_i32_0 = arith.constant 0 : i32
    %c0_i32_1 = arith.constant 0 : i32
    return %arg1, %c0_i32, %c0_i32_0 : i32, i32, i32
  }
  func.func @transform_10(%arg0: i32, %arg1: i32) -> (i32, i32, i32) {
    %c0_i32 = arith.constant 0 : i32
    %c0_i32_0 = arith.constant 0 : i32
    %c0_i32_1 = arith.constant 0 : i32
    return %arg1, %c0_i32, %c0_i32_0 : i32, i32, i32
  }
  func.func @transform_11(%arg0: i32, %arg1: i32) -> (i32, i32, i32) {
    %c0_i32 = arith.constant 0 : i32
    %c0_i32_0 = arith.constant 0 : i32
    %c0_i32_1 = arith.constant 0 : i32
    return %arg1, %c0_i32, %c0_i32_0 : i32, i32, i32
  }
  func.func @transform_12(%arg0: i32, %arg1: i32) -> (i32, i32, i32) {
    %c0_i32 = arith.constant 0 : i32
    %c0_i32_0 = arith.constant 0 : i32
    %c0_i32_1 = arith.constant 0 : i32
    return %arg1, %c0_i32, %c0_i32_0 : i32, i32, i32
  }
  func.func @transform_13(%arg0: i32, %arg1: i32) -> (i32, i32, i32) {
    %c0_i32 = arith.constant 0 : i32
    %c0_i32_0 = arith.constant 0 : i32
    %c0_i32_1 = arith.constant 0 : i32
    return %arg0, %c0_i32, %c0_i32_0 : i32, i32, i32
  }
}

</mosaic_0001>

<llo_original>
// kernel: gpt_double_heads_forward.1
$region0: #{gpt_double_heads_forward.1}
  #allocation0 [shape = 'u32[]', space=smem, size = 0x4, offset = 0x4, fixed_abs, tag = 'smem constant byte address 0x4 - core index']
  #allocation1 [shape = 'u32[144,128]{1,0:T(1,128)}', space=vmem, size = 0x12000, scoped, tag = 'internal scratch']
  #allocation2 [shape = 'f32[32,96]{1,0:T(8,128)}', space=vmem, size = 0x4000, scoped, tag = 'scratch operand']
  %s0 = inlined_call_operand.hbm [shape: f32[4,8,32], index: 0, kind: input, shape index: {}, may-alias: {0,13}]
  %s1 = inlined_call_operand.vmem [shape: bf16[2,32,96], index: 1, kind: input, shape index: {}]
  %s2 = inlined_call_operand.vmem [shape: f32[2,1,96], index: 2, kind: input, shape index: {}]
  %s3 = inlined_call_operand.vmem [shape: bf16[2,32,32], index: 3, kind: input, shape index: {}]
  %s4 = inlined_call_operand.vmem [shape: f32[2,1,32], index: 4, kind: input, shape index: {}]
  %s5 = inlined_call_operand.vmem [shape: f32[2,1,32], index: 5, kind: input, shape index: {}]
  %s6 = inlined_call_operand.vmem [shape: f32[2,1,32], index: 6, kind: input, shape index: {}]
  %s7 = inlined_call_operand.vmem [shape: bf16[2,32,128], index: 7, kind: input, shape index: {}]
  %s8 = inlined_call_operand.vmem [shape: f32[2,1,128], index: 8, kind: input, shape index: {}]
  %s9 = inlined_call_operand.vmem [shape: bf16[2,128,32], index: 9, kind: input, shape index: {}]
  %s10 = inlined_call_operand.vmem [shape: f32[2,1,32], index: 10, kind: input, shape index: {}]
  %s11 = inlined_call_operand.vmem [shape: f32[2,1,32], index: 11, kind: input, shape index: {}]
  %s12 = inlined_call_operand.vmem [shape: f32[2,1,32], index: 12, kind: input, shape index: {}]
  %s13 = inlined_call_operand.hbm [shape: f32[4,8,32], index: 13, kind: output, shape index: {}, may-alias: {0,13}]
  %s14 = sld [smem:[#allocation0]]
  $region93: #{gpt_double_heads_forward.1} parent=0
    _
  %s16 = ssub.s32 1, %s14
  %s17 = scalar_select 0, %s16, %s14
  $region1: #{gpt_double_heads_forward.1} parent=0
    #allocation3 [shape = 'u8[16384]{0}', space=vmem, size = 0x4000, scoped, tag = 'input window, operand 0, single buffered']
    #allocation4 [shape = 's32[2]{0}', space=sflag, size = 0x8, scoped, tag = 'scoped memory for gpt_double_heads_forward.1']
    #allocation5 [shape = 's32[2]{0}', space=sflag, size = 0x8, scoped, tag = 'scoped memory for gpt_double_heads_forward.1']
    #allocation6 [shape = 'u8[16384]{0}', space=vmem, size = 0x4000, scoped, tag = 'output window, operand 0, single buffered']
    %18 = vsyncpa [#allocation4], 0
    %19 = vsyncpa [#allocation5], 0
    loop: start=0, step=1, limit=4
    $region2: #{gpt_double_heads_forward.1} parent=1 // loop_pre_header
      _
    $region3: #{gpt_double_heads_forward.1} parent=1 // loop_header
      %s21 = sphi 0, %s25
      %p22 = scmp.ge.s32.totalorder %s21, 4
      %s28 = sphi 0, %s40
      %s29 = sphi 0, %s36
      %s30 = sphi 0, %s28
      %s31 = sphi 0, %s29
      %s32 = sphi 0, %s30
      %s33 = sphi 0, %s31
      %s43 = sphi 0, %s45
      %s46 = sphi 0, %s43
      %s47 = sphi 0, %s46
      %s63 = sphi 0, %s47
      %s69 = sphi 0, %s71
      %s72 = sphi 0, %s69
      %s73 = sphi 0, %s72
      %s89 = sphi 0, %s73
      %s95 = sphi 0, %s97
      %s98 = sphi 0, %s95
      %s99 = sphi 0, %s98
      %s115 = sphi 0, %s99
      %s121 = sphi 0, %s123
      %s124 = sphi 0, %s121
      %s125 = sphi 0, %s124
      %s141 = sphi 0, %s125
      %s147 = sphi 0, %s149
      %s150 = sphi 0, %s147
      %s151 = sphi 0, %s150
      %s167 = sphi 0, %s151
      %s173 = sphi 0, %s175
      %s176 = sphi 0, %s173
      %s177 = sphi 0, %s176
      %s193 = sphi 0, %s177
      %s199 = sphi 0, %s201
      %s202 = sphi 0, %s199
      %s203 = sphi 0, %s202
      %s219 = sphi 0, %s203
      %s225 = sphi 0, %s227
      %s228 = sphi 0, %s225
      %s229 = sphi 0, %s228
      %s245 = sphi 0, %s229
      %s251 = sphi 0, %s253
      %s254 = sphi 0, %s251
      %s255 = sphi 0, %s254
      %s271 = sphi 0, %s255
      %s277 = sphi 0, %s279
      %s280 = sphi 0, %s277
      %s281 = sphi 0, %s280
      %s297 = sphi 0, %s281
      %s303 = sphi 0, %s305
      %s306 = sphi 0, %s303
      %s307 = sphi 0, %s306
      %s323 = sphi 0, %s307
      %s329 = sphi 0, %s331
      %s332 = sphi 0, %s329
      %s333 = sphi 0, %s332
      %s349 = sphi 0, %s333
      %s355 = sphi 0, %s357
      %s358 = sphi 0, %s355
      %s359 = sphi 0, %s358
      %s375 = sphi 0, %s359
      %s381 = sphi 0, %s383
      %s384 = sphi 0, %s381
      %s385 = sphi 0, %s384
      %s401 = sphi 0, %s385
    $region4: #{gpt_double_heads_forward.1} parent=1 // loop_header_branch
      %24 = sbr.rel (%p22) target = $region8
    $region5: #{gpt_double_heads_forward.1} parent=1 // loop_body
      %s26 = ssub.s32 %s21, 1
      %s27 = ssub.s32 %s21, 2
      %s34 = sadd.s32 1, %s29
      %p35 = scmp.ge.s32.totalorder %s34, 2
      %s36 = scalar_select %p35, 0, %s34
      %s37 = sadd.s32 1, %s28
      %s38 = scalar_select %p35, %s37, %s28
      %p39 = scmp.ge.s32.totalorder %s38, 1
      %s40 = scalar_select %p39, 0, %s38
      %s41 = ssub.s32 %s28, %s40
      %p42 = scmp.eq.s32.totalorder %s41, 0
      %s44 = sadd.s32 %s43, 1
      %s45 = scalar_select %p42, %s43, %s44
      %p48 = pneg %p42
      %p49 = scmp.eq.s32.totalorder %s21, 1
      %p50 = por %p48, %p49
      %p51 = scmp.ne.s32.totalorder %s43, %s46
      %p52 = scmp.eq.s32.totalorder %s21, 0
      %p53 = por %p51, %p52
      %p54 = scmp.ne.s32.totalorder %s43, %s46
      %p55 = scmp.eq.s32.totalorder %s26, 1
      %p56 = por %p54, %p55
      %p57 = scmp.ne.s32.totalorder %s46, %s47
      %p58 = scmp.eq.s32.totalorder %s26, 0
      %p59 = por %p57, %p58
      %p60 = scmp.ne.s32.totalorder %s46, %s47
      %p61 = scmp.eq.s32.totalorder %s27, 1
      %p62 = por %p60, %p61
      %p64 = scmp.ne.s32.totalorder %s47, %s63
      %p65 = scmp.eq.s32.totalorder %s27, 0
      %p66 = por %p64, %p65
      %s67 = ssub.s32 %s29, %s36
      %p68 = scmp.eq.s32.totalorder %s67, 0
      %s70 = sadd.s32 %s69, 1
      %s71 = scalar_select %p68, %s69, %s70
      %p74 = pneg %p68
      %p75 = scmp.eq.s32.totalorder %s21, 1
      %p76 = por %p74, %p75
      %p77 = scmp.ne.s32.totalorder %s69, %s72
      %p78 = scmp.eq.s32.totalorder %s21, 0
      %p79 = por %p77, %p78
      %p80 = scmp.ne.s32.totalorder %s69, %s72
      %p81 = scmp.eq.s32.totalorder %s26, 1
      %p82 = por %p80, %p81
      %p83 = scmp.ne.s32.totalorder %s72, %s73
      %p84 = scmp.eq.s32.totalorder %s26, 0
      %p85 = por %p83, %p84
      %p86 = scmp.ne.s32.totalorder %s72, %s73
      %p87 = scmp.eq.s32.totalorder %s27, 1
      %p88 = por %p86, %p87
      %p90 = scmp.ne.s32.totalorder %s73, %s89
      %p91 = scmp.eq.s32.totalorder %s27, 0
      %p92 = por %p90, %p91
      %s93 = ssub.s32 %s29, %s36
      %p94 = scmp.eq.s32.totalorder %s93, 0
      %s96 = sadd.s32 %s95, 1
      %s97 = scalar_select %p94, %s95, %s96
      %p100 = pneg %p94
      %p101 = scmp.eq.s32.totalorder %s21, 1
      %p102 = por %p100, %p101
      %p103 = scmp.ne.s32.totalorder %s95, %s98
      %p104 = scmp.eq.s32.totalorder %s21, 0
      %p105 = por %p103, %p104
      %p106 = scmp.ne.s32.totalorder %s95, %s98
      %p107 = scmp.eq.s32.totalorder %s26, 1
      %p108 = por %p106, %p107
      %p109 = scmp.ne.s32.totalorder %s98, %s99
      %p110 = scmp.eq.s32.totalorder %s26, 0
      %p111 = por %p109, %p110
      %p112 = scmp.ne.s32.totalorder %s98, %s99
      %p113 = scmp.eq.s32.totalorder %s27, 1
      %p114 = por %p112, %p113
      %p116 = scmp.ne.s32.totalorder %s99, %s115
      %p117 = scmp.eq.s32.totalorder %s27, 0
      %p118 = por %p116, %p117
      %s119 = ssub.s32 %s29, %s36
      %p120 = scmp.eq.s32.totalorder %s119, 0
      %s122 = sadd.s32 %s121, 1
      %s123 = scalar_select %p120, %s121, %s122
      %p126 = pneg %p120
      %p127 = scmp.eq.s32.totalorder %s21, 1
      %p128 = por %p126, %p127
      %p129 = scmp.ne.s32.totalorder %s121, %s124
      %p130 = scmp.eq.s32.totalorder %s21, 0
      %p131 = por %p129, %p130
      %p132 = scmp.ne.s32.totalorder %s121, %s124
      %p133 = scmp.eq.s32.totalorder %s26, 1
      %p134 = por %p132, %p133
      %p135 = scmp.ne.s32.totalorder %s124, %s125
      %p136 = scmp.eq.s32.totalorder %s26, 0
      %p137 = por %p135, %p136
      %p138 = scmp.ne.s32.totalorder %s124, %s125
      %p139 = scmp.eq.s32.totalorder %s27, 1
      %p140 = por %p138, %p139
      %p142 = scmp.ne.s32.totalorder %s125, %s141
      %p143 = scmp.eq.s32.totalorder %s27, 0
      %p144 = por %p142, %p143
      %s145 = ssub.s32 %s29, %s36
      %p146 = scmp.eq.s32.totalorder %s145, 0
      %s148 = sadd.s32 %s147, 1
      %s149 = scalar_select %p146, %s147, %s148
      %p152 = pneg %p146
      %p153 = scmp.eq.s32.totalorder %s21, 1
      %p154 = por %p152, %p153
      %p155 = scmp.ne.s32.totalorder %s147, %s150
      %p156 = scmp.eq.s32.totalorder %s21, 0
      %p157 = por %p155, %p156
      %p158 = scmp.ne.s32.totalorder %s147, %s150
      %p159 = scmp.eq.s32.totalorder %s26, 1
      %p160 = por %p158, %p159
      %p161 = scmp.ne.s32.totalorder %s150, %s151
      %p162 = scmp.eq.s32.totalorder %s26, 0
      %p163 = por %p161, %p162
      %p164 = scmp.ne.s32.totalorder %s150, %s151
      %p165 = scmp.eq.s32.totalorder %s27, 1
      %p166 = por %p164, %p165
      %p168 = scmp.ne.s32.totalorder %s151, %s167
      %p169 = scmp.eq.s32.totalorder %s27, 0
      %p170 = por %p168, %p169
      %s171 = ssub.s32 %s29, %s36
      %p172 = scmp.eq.s32.totalorder %s171, 0
      %s174 = sadd.s32 %s173, 1
      %s175 = scalar_select %p172, %s173, %s174
      %p178 = pneg %p172
      %p179 = scmp.eq.s32.totalorder %s21, 1
      %p180 = por %p178, %p179
      %p181 = scmp.ne.s32.totalorder %s173, %s176
      %p182 = scmp.eq.s32.totalorder %s21, 0
      %p183 = por %p181, %p182
      %p184 = scmp.ne.s32.totalorder %s173, %s176
      %p185 = scmp.eq.s32.totalorder %s26, 1
      %p186 = por %p184, %p185
      %p187 = scmp.ne.s32.totalorder %s176, %s177
      %p188 = scmp.eq.s32.totalorder %s26, 0
      %p189 = por %p187, %p188
      %p190 = scmp.ne.s32.totalorder %s176, %s177
      %p191 = scmp.eq.s32.totalorder %s27, 1
      %p192 = por %p190, %p191
      %p194 = scmp.ne.s32.totalorder %s177, %s193
      %p195 = scmp.eq.s32.totalorder %s27, 0
      %p196 = por %p194, %p195
      %s197 = ssub.s32 %s29, %s36
      %p198 = scmp.eq.s32.totalorder %s197, 0
      %s200 = sadd.s32 %s199, 1
      %s201 = scalar_select %p198, %s199, %s200
      %p204 = pneg %p198
      %p205 = scmp.eq.s32.totalorder %s21, 1
      %p206 = por %p204, %p205
      %p207 = scmp.ne.s32.totalorder %s199, %s202
      %p208 = scmp.eq.s32.totalorder %s21, 0
      %p209 = por %p207, %p208
      %p210 = scmp.ne.s32.totalorder %s199, %s202
      %p211 = scmp.eq.s32.totalorder %s26, 1
      %p212 = por %p210, %p211
      %p213 = scmp.ne.s32.totalorder %s202, %s203
      %p214 = scmp.eq.s32.totalorder %s26, 0
      %p215 = por %p213, %p214
      %p216 = scmp.ne.s32.totalorder %s202, %s203
      %p217 = scmp.eq.s32.totalorder %s27, 1
      %p218 = por %p216, %p217
      %p220 = scmp.ne.s32.totalorder %s203, %s219
      %p221 = scmp.eq.s32.totalorder %s27, 0
      %p222 = por %p220, %p221
      %s223 = ssub.s32 %s29, %s36
      %p224 = scmp.eq.s32.totalorder %s223, 0
      %s226 = sadd.s32 %s225, 1
      %s227 = scalar_select %p224, %s225, %s226
      %p230 = pneg %p224
      %p231 = scmp.eq.s32.totalorder %s21, 1
      %p232 = por %p230, %p231
      %p233 = scmp.ne.s32.totalorder %s225, %s228
      %p234 = scmp.eq.s32.totalorder %s21, 0
      %p235 = por %p233, %p234
      %p236 = scmp.ne.s32.totalorder %s225, %s228
      %p237 = scmp.eq.s32.totalorder %s26, 1
      %p238 = por %p236, %p237
      %p239 = scmp.ne.s32.totalorder %s228, %s229
      %p240 = scmp.eq.s32.totalorder %s26, 0
      %p241 = por %p239, %p240
      %p242 = scmp.ne.s32.totalorder %s228, %s229
      %p243 = scmp.eq.s32.totalorder %s27, 1
      %p244 = por %p242, %p243
      %p246 = scmp.ne.s32.totalorder %s229, %s245
      %p247 = scmp.eq.s32.totalorder %s27, 0
      %p248 = por %p246, %p247
      %s249 = ssub.s32 %s29, %s36
      %p250 = scmp.eq.s32.totalorder %s249, 0
      %s252 = sadd.s32 %s251, 1
      %s253 = scalar_select %p250, %s251, %s252
      %p256 = pneg %p250
      %p257 = scmp.eq.s32.totalorder %s21, 1
      %p258 = por %p256, %p257
      %p259 = scmp.ne.s32.totalorder %s251, %s254
      %p260 = scmp.eq.s32.totalorder %s21, 0
      %p261 = por %p259, %p260
      %p262 = scmp.ne.s32.totalorder %s251, %s254
      %p263 = scmp.eq.s32.totalorder %s26, 1
      %p264 = por %p262, %p263
      %p265 = scmp.ne.s32.totalorder %s254, %s255
      %p266 = scmp.eq.s32.totalorder %s26, 0
      %p267 = por %p265, %p266
      %p268 = scmp.ne.s32.totalorder %s254, %s255
      %p269 = scmp.eq.s32.totalorder %s27, 1
      %p270 = por %p268, %p269
      %p272 = scmp.ne.s32.totalorder %s255, %s271
      %p273 = scmp.eq.s32.totalorder %s27, 0
      %p274 = por %p272, %p273
      %s275 = ssub.s32 %s29, %s36
      %p276 = scmp.eq.s32.totalorder %s275, 0
      %s278 = sadd.s32 %s277, 1
      %s279 = scalar_select %p276, %s277, %s278
      %p282 = pneg %p276
      %p283 = scmp.eq.s32.totalorder %s21, 1
      %p284 = por %p282, %p283
      %p285 = scmp.ne.s32.totalorder %s277, %s280
      %p286 = scmp.eq.s32.totalorder %s21, 0
      %p287 = por %p285, %p286
      %p288 = scmp.ne.s32.totalorder %s277, %s280
      %p289 = scmp.eq.s32.totalorder %s26, 1
      %p290 = por %p288, %p289
      %p291 = scmp.ne.s32.totalorder %s280, %s281
      %p292 = scmp.eq.s32.totalorder %s26, 0
      %p293 = por %p291, %p292
      %p294 = scmp.ne.s32.totalorder %s280, %s281
      %p295 = scmp.eq.s32.totalorder %s27, 1
      %p296 = por %p294, %p295
      %p298 = scmp.ne.s32.totalorder %s281, %s297
      %p299 = scmp.eq.s32.totalorder %s27, 0
      %p300 = por %p298, %p299
      %s301 = ssub.s32 %s29, %s36
      %p302 = scmp.eq.s32.totalorder %s301, 0
      %s304 = sadd.s32 %s303, 1
      %s305 = scalar_select %p302, %s303, %s304
      %p308 = pneg %p302
      %p309 = scmp.eq.s32.totalorder %s21, 1
      %p310 = por %p308, %p309
      %p311 = scmp.ne.s32.totalorder %s303, %s306
      %p312 = scmp.eq.s32.totalorder %s21, 0
      %p313 = por %p311, %p312
      %p314 = scmp.ne.s32.totalorder %s303, %s306
      %p315 = scmp.eq.s32.totalorder %s26, 1
      %p316 = por %p314, %p315
      %p317 = scmp.ne.s32.totalorder %s306, %s307
      %p318 = scmp.eq.s32.totalorder %s26, 0
      %p319 = por %p317, %p318
      %p320 = scmp.ne.s32.totalorder %s306, %s307
      %p321 = scmp.eq.s32.totalorder %s27, 1
      %p322 = por %p320, %p321
      %p324 = scmp.ne.s32.totalorder %s307, %s323
      %p325 = scmp.eq.s32.totalorder %s27, 0
      %p326 = por %p324, %p325
      %s327 = ssub.s32 %s29, %s36
      %p328 = scmp.eq.s32.totalorder %s327, 0
      %s330 = sadd.s32 %s329, 1
      %s331 = scalar_select %p328, %s329, %s330
      %p334 = pneg %p328
      %p335 = scmp.eq.s32.totalorder %s21, 1
      %p336 = por %p334, %p335
      %p337 = scmp.ne.s32.totalorder %s329, %s332
      %p338 = scmp.eq.s32.totalorder %s21, 0
      %p339 = por %p337, %p338
      %p340 = scmp.ne.s32.totalorder %s329, %s332
      %p341 = scmp.eq.s32.totalorder %s26, 1
      %p342 = por %p340, %p341
      %p343 = scmp.ne.s32.totalorder %s332, %s333
      %p344 = scmp.eq.s32.totalorder %s26, 0
      %p345 = por %p343, %p344
      %p346 = scmp.ne.s32.totalorder %s332, %s333
      %p347 = scmp.eq.s32.totalorder %s27, 1
      %p348 = por %p346, %p347
      %p350 = scmp.ne.s32.totalorder %s333, %s349
      %p351 = scmp.eq.s32.totalorder %s27, 0
      %p352 = por %p350, %p351
      %s353 = ssub.s32 %s29, %s36
      %p354 = scmp.eq.s32.totalorder %s353, 0
      %s356 = sadd.s32 %s355, 1
      %s357 = scalar_select %p354, %s355, %s356
      %p360 = pneg %p354
      %p361 = scmp.eq.s32.totalorder %s21, 1
      %p362 = por %p360, %p361
      %p363 = scmp.ne.s32.totalorder %s355, %s358
      %p364 = scmp.eq.s32.totalorder %s21, 0
      %p365 = por %p363, %p364
      %p366 = scmp.ne.s32.totalorder %s355, %s358
      %p367 = scmp.eq.s32.totalorder %s26, 1
      %p368 = por %p366, %p367
      %p369 = scmp.ne.s32.totalorder %s358, %s359
      %p370 = scmp.eq.s32.totalorder %s26, 0
      %p371 = por %p369, %p370
      %p372 = scmp.ne.s32.totalorder %s358, %s359
      %p373 = scmp.eq.s32.totalorder %s27, 1
      %p374 = por %p372, %p373
      %p376 = scmp.ne.s32.totalorder %s359, %s375
      %p377 = scmp.eq.s32.totalorder %s27, 0
      %p378 = por %p376, %p377
      %s379 = ssub.s32 %s28, %s40
      %p380 = scmp.eq.s32.totalorder %s379, 0
      %s382 = sadd.s32 %s381, 1
      %s383 = scalar_select %p380, %s381, %s382
      %p386 = pneg %p380
      %p387 = scmp.eq.s32.totalorder %s21, 1
      %p388 = por %p386, %p387
      %p389 = scmp.ne.s32.totalorder %s381, %s384
      %p390 = scmp.eq.s32.totalorder %s21, 0
      %p391 = por %p389, %p390
      %p392 = scmp.ne.s32.totalorder %s381, %s384
      %p393 = scmp.eq.s32.totalorder %s26, 1
      %p394 = por %p392, %p393
      %p395 = scmp.ne.s32.totalorder %s384, %s385
      %p396 = scmp.eq.s32.totalorder %s26, 0
      %p397 = por %p395, %p396
      %p398 = scmp.ne.s32.totalorder %s384, %s385
      %p399 = scmp.eq.s32.totalorder %s27, 1
      %p400 = por %p398, %p399
      %p402 = scmp.ne.s32.totalorder %s385, %s401
      %p403 = scmp.eq.s32.totalorder %s27, 0
      %p404 = por %p402, %p403
      %p405 = scmp.le.s32.totalorder 1, %s21
      %p406 = scmp.lt.s32.totalorder %s21, 3
      %p407 = pnand %p405, %p406
      %p408 = pneg %p407
      // Predicated region
      $region9: #{gpt_double_heads_forward.1} parent=5 // pred_check
        _
      $region10: #{gpt_double_heads_forward.1} parent=5 // pred_check_branch
        %410 = sbr.rel (%p407) target = $region12
      $region11: #{gpt_double_heads_forward.1} parent=5 // pred_region
        %s411 = ssub.s32 %s21, 1
        // Predicated region
        $region13: #{gpt_double_heads_forward.1} parent=11 // pred_check
          %p412 = pneg %p59
        $region14: #{gpt_double_heads_forward.1} parent=11 // pred_check_branch
          %414 = sbr.rel (%p412) target = $region16
        $region15: #{gpt_double_heads_forward.1} parent=11 // pred_region
          %s415 = smul.u32 4, %s30
          %s417 = ssub.s32 512, 512
          %418 = vsyncadd [#allocation4], %s417
          %s419 = smul.addr %s415, 128
          %s420 = scalar_lea.hbm %s0, %s419
          %s421 = sshll.u32 [#allocation3], 4
          %s422 = int_to_ptr.vmem [resolvable:$true] %s421
          %427 = dma.hbm_to_vmem [thread:$0]  %s420, 512, %s422, [#allocation4], 128, 128, 8
        $region16: #{gpt_double_heads_forward.1} parent=11 // pred_fallthru
          _
      $region12: #{gpt_double_heads_forward.1} parent=5 // pred_fallthru
        _
      %p428 = scmp.lt.s32.totalorder %s21, 2
      // Predicated region
      $region17: #{gpt_double_heads_forward.1} parent=5 // pred_check
        %p429 = pneg %p428
      $region18: #{gpt_double_heads_forward.1} parent=5 // pred_check_branch
        %431 = sbr.rel (%p429) target = $region20
      $region19: #{gpt_double_heads_forward.1} parent=5 // pred_region
        // Predicated region
        $region21: #{gpt_double_heads_forward.1} parent=19 // pred_check
          %p432 = pneg %p79
        $region22: #{gpt_double_heads_forward.1} parent=19 // pred_check_branch
          %434 = sbr.rel (%p432) target = $region24
        $region23: #{gpt_double_heads_forward.1} parent=19 // pred_region
          %p435 = scmp.lt.s32.totalorder %s29, 1
          %s436 = scalar_select %p435, %s29, 1
          %s437 = smul.addr %s436, 4
          %s438 = smul.addr %s437, 4
          %s439 = scalar_lea.vmem %s1, %s438
        $region24: #{gpt_double_heads_forward.1} parent=19 // pred_fallthru
          _
        // Predicated region
        $region25: #{gpt_double_heads_forward.1} parent=19 // pred_check
          %p440 = pneg %p105
        $region26: #{gpt_double_heads_forward.1} parent=19 // pred_check_branch
          %442 = sbr.rel (%p440) target = $region28
        $region27: #{gpt_double_heads_forward.1} parent=19 // pred_region
          %p443 = scmp.lt.s32.totalorder %s29, 1
          %s444 = scalar_select %p443, %s29, 1
          %s445 = scalar_lea.vmem %s2, %s444
        $region28: #{gpt_double_heads_forward.1} parent=19 // pred_fallthru
          _
        // Predicated region
        $region29: #{gpt_double_heads_forward.1} parent=19 // pred_check
          %p446 = pneg %p131
        $region30: #{gpt_double_heads_forward.1} parent=19 // pred_check_branch
          %448 = sbr.rel (%p446) target = $region32
        $region31: #{gpt_double_heads_forward.1} parent=19 // pred_region
          %p449 = scmp.lt.s32.totalorder %s29, 1
          %s450 = scalar_select %p449, %s29, 1
          %s451 = smul.addr %s450, 4
          %s452 = smul.addr %s451, 4
          %s453 = scalar_lea.vmem %s3, %s452
        $region32: #{gpt_double_heads_forward.1} parent=19 // pred_fallthru
          _
        // Predicated region
        $region33: #{gpt_double_heads_forward.1} parent=19 // pred_check
          %p454 = pneg %p157
        $region34: #{gpt_double_heads_forward.1} parent=19 // pred_check_branch
          %456 = sbr.rel (%p454) target = $region36
        $region35: #{gpt_double_heads_forward.1} parent=19 // pred_region
          %p457 = scmp.lt.s32.totalorder %s29, 1
          %s458 = scalar_select %p457, %s29, 1
          %s459 = scalar_lea.vmem %s4, %s458
        $region36: #{gpt_double_heads_forward.1} parent=19 // pred_fallthru
          _
        // Predicated region
        $region37: #{gpt_double_heads_forward.1} parent=19 // pred_check
          %p460 = pneg %p183
        $region38: #{gpt_double_heads_forward.1} parent=19 // pred_check_branch
          %462 = sbr.rel (%p460) target = $region40
        $region39: #{gpt_double_heads_forward.1} parent=19 // pred_region
          %p463 = scmp.lt.s32.totalorder %s29, 1
          %s464 = scalar_select %p463, %s29, 1
          %s465 = scalar_lea.vmem %s5, %s464
        $region40: #{gpt_double_heads_forward.1} parent=19 // pred_fallthru
          _
        // Predicated region
        $region41: #{gpt_double_heads_forward.1} parent=19 // pred_check
          %p466 = pneg %p209
        $region42: #{gpt_double_heads_forward.1} parent=19 // pred_check_branch
          %468 = sbr.rel (%p466) target = $region44
        $region43: #{gpt_double_heads_forward.1} parent=19 // pred_region
          %p469 = scmp.lt.s32.totalorder %s29, 1
          %s470 = scalar_select %p469, %s29, 1
          %s471 = scalar_lea.vmem %s6, %s470
        $region44: #{gpt_double_heads_forward.1} parent=19 // pred_fallthru
          _
        // Predicated region
        $region45: #{gpt_double_heads_forward.1} parent=19 // pred_check
          %p472 = pneg %p235
        $region46: #{gpt_double_heads_forward.1} parent=19 // pred_check_branch
          %474 = sbr.rel (%p472) target = $region48
        $region47: #{gpt_double_heads_forward.1} parent=19 // pred_region
          %p475 = scmp.lt.s32.totalorder %s29, 1
          %s476 = scalar_select %p475, %s29, 1
          %s477 = smul.addr %s476, 4
          %s478 = smul.addr %s477, 4
          %s479 = scalar_lea.vmem %s7, %s478
        $region48: #{gpt_double_heads_forward.1} parent=19 // pred_fallthru
          _
        // Predicated region
        $region49: #{gpt_double_heads_forward.1} parent=19 // pred_check
          %p480 = pneg %p261
        $region50: #{gpt_double_heads_forward.1} parent=19 // pred_check_branch
          %482 = sbr.rel (%p480) target = $region52
        $region51: #{gpt_double_heads_forward.1} parent=19 // pred_region
          %p483 = scmp.lt.s32.totalorder %s29, 1
          %s484 = scalar_select %p483, %s29, 1
          %s485 = scalar_lea.vmem %s8, %s484
        $region52: #{gpt_double_heads_forward.1} parent=19 // pred_fallthru
          _
        // Predicated region
        $region53: #{gpt_double_heads_forward.1} parent=19 // pred_check
          %p486 = pneg %p287
        $region54: #{gpt_double_heads_forward.1} parent=19 // pred_check_branch
          %488 = sbr.rel (%p486) target = $region56
        $region55: #{gpt_double_heads_forward.1} parent=19 // pred_region
          %p489 = scmp.lt.s32.totalorder %s29, 1
          %s490 = scalar_select %p489, %s29, 1
          %s491 = smul.addr %s490, 16
          %s492 = smul.addr %s491, 4
          %s493 = scalar_lea.vmem %s9, %s492
        $region56: #{gpt_double_heads_forward.1} parent=19 // pred_fallthru
          _
        // Predicated region
        $region57: #{gpt_double_heads_forward.1} parent=19 // pred_check
          %p494 = pneg %p313
        $region58: #{gpt_double_heads_forward.1} parent=19 // pred_check_branch
          %496 = sbr.rel (%p494) target = $region60
        $region59: #{gpt_double_heads_forward.1} parent=19 // pred_region
          %p497 = scmp.lt.s32.totalorder %s29, 1
          %s498 = scalar_select %p497, %s29, 1
          %s499 = scalar_lea.vmem %s10, %s498
        $region60: #{gpt_double_heads_forward.1} parent=19 // pred_fallthru
          _
        // Predicated region
        $region61: #{gpt_double_heads_forward.1} parent=19 // pred_check
          %p500 = pneg %p339
        $region62: #{gpt_double_heads_forward.1} parent=19 // pred_check_branch
          %502 = sbr.rel (%p500) target = $region64
        $region63: #{gpt_double_heads_forward.1} parent=19 // pred_region
          %p503 = scmp.lt.s32.totalorder %s29, 1
          %s504 = scalar_select %p503, %s29, 1
          %s505 = scalar_lea.vmem %s11, %s504
        $region64: #{gpt_double_heads_forward.1} parent=19 // pred_fallthru
          _
        // Predicated region
        $region65: #{gpt_double_heads_forward.1} parent=19 // pred_check
          %p506 = pneg %p365
        $region66: #{gpt_double_heads_forward.1} parent=19 // pred_check_branch
          %508 = sbr.rel (%p506) target = $region68
        $region67: #{gpt_double_heads_forward.1} parent=19 // pred_region
          %p509 = scmp.lt.s32.totalorder %s29, 1
          %s510 = scalar_select %p509, %s29, 1
          %s511 = scalar_lea.vmem %s12, %s510
        $region68: #{gpt_double_heads_forward.1} parent=19 // pred_fallthru
          _
      $region20: #{gpt_double_heads_forward.1} parent=5 // pred_fallthru
        _
      %p512 = scmp.le.s32.totalorder 1, %s21
      %p513 = scmp.lt.s32.totalorder %s21, 3
      %p514 = pnand %p512, %p513
      %p515 = pneg %p514
      // Predicated region
      $region69: #{gpt_double_heads_forward.1} parent=5 // pred_check
        _
      $region70: #{gpt_double_heads_forward.1} parent=5 // pred_check_branch
        %517 = sbr.rel (%p514) target = $region72
      $region71: #{gpt_double_heads_forward.1} parent=5 // pred_region
        %s518 = ssub.s32 %s21, 1
        // Predicated region
        $region73: #{gpt_double_heads_forward.1} parent=71 // pred_check
          %p519 = pneg %p59
        $region74: #{gpt_double_heads_forward.1} parent=71 // pred_check_branch
          %521 = sbr.rel (%p519) target = $region76
        $region75: #{gpt_double_heads_forward.1} parent=71 // pred_region
          %522 = dma.done [#allocation4], 512
        $region76: #{gpt_double_heads_forward.1} parent=71 // pred_fallthru
          _
        %p523 = pneg %p59
        %p524 = pneg %p56
        %p525 = scmp.lt.s32.totalorder %s31, 1
        %s526 = scalar_select %p525, %s31, 1
        %s527 = smul.addr %s526, 4
        %s528 = smul.addr %s527, 4
        %s529 = scalar_lea.vmem %s1, %s528
        %p530 = pneg %p85
        %p531 = pneg %p82
        %p532 = scmp.lt.s32.totalorder %s31, 1
        %s533 = scalar_select %p532, %s31, 1
        %s534 = scalar_lea.vmem %s2, %s533
        %p535 = pneg %p111
        %p536 = pneg %p108
        %p537 = scmp.lt.s32.totalorder %s31, 1
        %s538 = scalar_select %p537, %s31, 1
        %s539 = smul.addr %s538, 4
        %s540 = smul.addr %s539, 4
        %s541 = scalar_lea.vmem %s3, %s540
        %p542 = pneg %p137
        %p543 = pneg %p134
        %p544 = scmp.lt.s32.totalorder %s31, 1
        %s545 = scalar_select %p544, %s31, 1
        %s546 = scalar_lea.vmem %s4, %s545
        %p547 = pneg %p163
        %p548 = pneg %p160
        %p549 = scmp.lt.s32.totalorder %s31, 1
        %s550 = scalar_select %p549, %s31, 1
        %s551 = scalar_lea.vmem %s5, %s550
        %p552 = pneg %p189
        %p553 = pneg %p186
        %p554 = scmp.lt.s32.totalorder %s31, 1
        %s555 = scalar_select %p554, %s31, 1
        %s556 = scalar_lea.vmem %s6, %s555
        %p557 = pneg %p215
        %p558 = pneg %p212
        %p559 = scmp.lt.s32.totalorder %s31, 1
        %s560 = scalar_select %p559, %s31, 1
        %s561 = smul.addr %s560, 4
        %s562 = smul.addr %s561, 4
        %s563 = scalar_lea.vmem %s7, %s562
        %p564 = pneg %p241
        %p565 = pneg %p238
        %p566 = scmp.lt.s32.totalorder %s31, 1
        %s567 = scalar_select %p566, %s31, 1
        %s568 = scalar_lea.vmem %s8, %s567
        %p569 = pneg %p267
        %p570 = pneg %p264
        %p571 = scmp.lt.s32.totalorder %s31, 1
        %s572 = scalar_select %p571, %s31, 1
        %s573 = smul.addr %s572, 16
        %s574 = smul.addr %s573, 4
        %s575 = scalar_lea.vmem %s9, %s574
        %p576 = pneg %p293
        %p577 = pneg %p290
        %p578 = scmp.lt.s32.totalorder %s31, 1
        %s579 = scalar_select %p578, %s31, 1
        %s580 = scalar_lea.vmem %s10, %s579
        %p581 = pneg %p319
        %p582 = pneg %p316
        %p583 = scmp.lt.s32.totalorder %s31, 1
        %s584 = scalar_select %p583, %s31, 1
        %s585 = scalar_lea.vmem %s11, %s584
        %p586 = pneg %p345
        %p587 = pneg %p342
        %p588 = scmp.lt.s32.totalorder %s31, 1
        %s589 = scalar_select %p588, %s31, 1
        %s590 = scalar_lea.vmem %s12, %s589
        %p591 = pneg %p371
        %p592 = pneg %p368
        %p593 = pneg %p397
        %p594 = pneg %p394
        %s595 = smul.u32 4, %s30
        %p596 = scmp.lt.s32.totalorder %s31, 1
        %s597 = scalar_select %p596, %s31, 1
        %s598 = smul.addr %s597, 4
        %s599 = smul.addr %s598, 4
        %s600 = scalar_lea.vmem %s1, %s599
        %p601 = scmp.lt.s32.totalorder %s31, 1
        %s602 = scalar_select %p601, %s31, 1
        %s603 = scalar_lea.vmem %s2, %s602
        %p604 = scmp.lt.s32.totalorder %s31, 1
        %s605 = scalar_select %p604, %s31, 1
        %s606 = smul.addr %s605, 4
        %s607 = smul.addr %s606, 4
        %s608 = scalar_lea.vmem %s3, %s607
        %p609 = scmp.lt.s32.totalorder %s31, 1
        %s610 = scalar_select %p609, %s31, 1
        %s611 = scalar_lea.vmem %s4, %s610
        %p612 = scmp.lt.s32.totalorder %s31, 1
        %s613 = scalar_select %p612, %s31, 1
        %s614 = scalar_lea.vmem %s5, %s613
        %p615 = scmp.lt.s32.totalorder %s31, 1
        %s616 = scalar_select %p615, %s31, 1
        %s617 = scalar_lea.vmem %s6, %s616
        %p618 = scmp.lt.s32.totalorder %s31, 1
        %s619 = scalar_select %p618, %s31, 1
        %s620 = smul.addr %s619, 4
        %s621 = smul.addr %s620, 4
        %s622 = scalar_lea.vmem %s7, %s621
        %p623 = scmp.lt.s32.totalorder %s31, 1
        %s624 = scalar_select %p623, %s31, 1
        %s625 = scalar_lea.vmem %s8, %s624
        %p626 = scmp.lt.s32.totalorder %s31, 1
        %s627 = scalar_select %p626, %s31, 1
        %s628 = smul.addr %s627, 16
        %s629 = smul.addr %s628, 4
        %s630 = scalar_lea.vmem %s9, %s629
        %p631 = scmp.lt.s32.totalorder %s31, 1
        %s632 = scalar_select %p631, %s31, 1
        %s633 = scalar_lea.vmem %s10, %s632
        %p634 = scmp.lt.s32.totalorder %s31, 1
        %s635 = scalar_select %p634, %s31, 1
        %s636 = scalar_lea.vmem %s11, %s635
        %p637 = scmp.lt.s32.totalorder %s31, 1
        %s638 = scalar_select %p637, %s31, 1
        %s639 = scalar_lea.vmem %s12, %s638
        %s640 = smul.u32 4, %s30
        %p642 = scmp.eq.s32.totalorder %s31, 0
        // Predicated region
        $region77: #{gpt_double_heads_forward.1} parent=71 // pred_check
          %p643 = pneg %p642
        $region78: #{gpt_double_heads_forward.1} parent=71 // pred_check_branch
          %645 = sbr.rel (%p643) target = $region80
        $region79: #{gpt_double_heads_forward.1} parent=71 // pred_region
          %v646 = vld [vmem:[#allocation3] sm:$0xff]
          %v647 = vld [vmem:[#allocation3 + $0x8] sm:$0xff]
          %v648 = vld [vmem:[#allocation3 + $0x10] sm:$0xff]
          %v649 = vld [vmem:[#allocation3 + $0x18] sm:$0xff]
          %vm650 = vcmask 261120
          %651 = vst.msk [vmem:[#allocation6] sm:$0xff] %vm650, %v646
          %652 = vst.msk [vmem:[#allocation6 + $0x8] sm:$0xff] %vm650, %v647
          %653 = vst.msk [vmem:[#allocation6 + $0x10] sm:$0xff] %vm650, %v648
          %654 = vst.msk [vmem:[#allocation6 + $0x18] sm:$0xff] %vm650, %v649
        $region80: #{gpt_double_heads_forward.1} parent=71 // pred_fallthru
          _
        %v655 = vld [vmem:[#allocation6] sm:$0xff]
        %v656 = vld [vmem:[#allocation6 + $0x8] sm:$0xff]
        %v657 = vld [vmem:[#allocation6 + $0x10] sm:$0xff]
        %v658 = vld [vmem:[#allocation6 + $0x18] sm:$0xff]
        %v659 = vpack.c.bf16 %v656, %v655
        %v660 = vpack.c.bf16 %v658, %v657
        %v661 = vld [vmem:[%s600] sm:$0xf]
        %v662 = vld [vmem:[%s600 + $0x4] sm:$0xf]
        %v663 = vld [vmem:[%s600 + $0x8] sm:$0xf]
        %v664 = vld [vmem:[%s600 + $0xc] sm:$0xf]
        %v665 = vld [vmem:[%s603] sm:$0x1]
        %v667 = vlaneseq
        %v668 = vshrl.u32 %v667, 7
        %v669 = vsub.s32 0, %v668
        %v670 = vrot.slane %v665, %v669
        %v676 = vunpack.c.l.b16 %v661
        %v677 = vunpack.c.l.b16 %v662
        %v678 = vunpack.c.l.b16 %v663
        %v679 = vunpack.c.l.b16 %v664
        %v680 = vpack.c.b16 %v677, %v676
        %v681 = vpack.c.b16 %v679, %v678
        %vm684 = vcmask 261120
        %v686 = vsel %vm684, %v659, 0
        %v689 = vsel %vm684, %v660, 0
        %691 = vmatprep.subr.bf16.mxu0 0
        %692 = vmatpush1.bf16.msra.mxu0 %v680
        %693 = vmatprep.subr.bf16.mxu0 0
        %694 = vmatpush1.bf16.msra.mxu0 %v681
        %695 = vmatprep.subr.bf16.mxu0 0
        %696 = vmatpush1.bf16.msra.mxu0 0
        %697 = vmatprep.subr.bf16.mxu0 0
        %698 = vmatpush1.bf16.msra.mxu0 0
        %699 = vmatprep.subr.bf16.mxu0 0
        %700 = vmatpush1.bf16.msra.mxu0 0
        %701 = vmatprep.subr.bf16.mxu0 0
        %702 = vmatpush1.bf16.msra.mxu0 0
        %703 = vmatprep.subr.bf16.mxu0 0
        %704 = vmatpush1.bf16.msra.mxu0 0
        %705 = vmatprep.subr.bf16.mxu0 0
        %706 = vmatpush1.bf16.msra.mxu0 0
        %707 = vmatprep.subr.bf16.mxu0 0
        %708 = vmatpush1.bf16.msra.mxu0 0
        %709 = vmatprep.subr.bf16.mxu0 0
        %710 = vmatpush1.bf16.msra.mxu0 0
        %711 = vmatprep.subr.bf16.mxu0 0
        %712 = vmatpush1.bf16.msra.mxu0 0
        %713 = vmatprep.subr.bf16.mxu0 0
        %714 = vmatpush1.bf16.msra.mxu0 0
        %715 = vmatprep.subr.bf16.mxu0 0
        %716 = vmatpush1.bf16.msra.mxu0 0
        %717 = vmatprep.subr.bf16.mxu0 0
        %718 = vmatpush1.bf16.msra.mxu0 0
        %719 = vmatprep.subr.bf16.mxu0 0
        %720 = vmatpush1.bf16.msra.mxu0 0
        %721 = vmatprep.subr.bf16.mxu0 0
        %722 = vmatpush1.bf16.msra.mxu0 0
        %723 = vmatprep.mubr.bf16.mxu0 0
        %724 = vmatmul.mubr.bf16.gmra.mrb[0].mxu0 %v686
        %v725 = vpop.f32.mrb[0].mxu0
        %v726 = vadd.f32 %v670, %v725
        %v727 = vpop.f32.mrb[0].mxu0
        %v728 = vpop.f32.mrb[0].mxu0
        %v729 = vadd.f32 %v670, %v728
        %v730 = vpop.f32.mrb[0].mxu0
        %731 = vmatprep.mubr.bf16.mxu0 0
        %732 = vmatmul.mubr.bf16.gmra.mrb[0].mxu0 %v689
        %v733 = vpop.f32.mrb[0].mxu0
        %v734 = vadd.f32 %v670, %v733
        %v735 = vpop.f32.mrb[0].mxu0
        %v736 = vpop.f32.mrb[0].mxu0
        %v737 = vadd.f32 %v670, %v736
        %v738 = vpop.f32.mrb[0].mxu0
        %739 = vdwg.mxu0
        %vm740 = vcmask 785408
        %741 = vst.msk [vmem:[#allocation2] sm:$0xff] %vm740, %v726
        %742 = vst.msk [vmem:[#allocation2 + $0x8] sm:$0xff] %vm740, %v729
        %743 = vst.msk [vmem:[#allocation2 + $0x10] sm:$0xff] %vm740, %v734
        %744 = vst.msk [vmem:[#allocation2 + $0x18] sm:$0xff] %vm740, %v737
        %v745 = vlaneseq
        %v746 = vshrl.u32 %v745, 7
        %v747 = vlaneseq
        %v748 = vand.u32 %v747, 127
        %vm749 = vcmp.le.s32.totalorder %v748, %v746
        %v750 = vld [vmem:[#allocation2] sm:$0xff]
        %v751 = vld [vmem:[#allocation2 + $0x8] sm:$0xff]
        %v752 = vld [vmem:[#allocation2 + $0x10] sm:$0xff]
        %v753 = vld [vmem:[#allocation2 + $0x18] sm:$0xff]
        %v754 = vmul.f32 %v750, 0.35355338
        %v755 = vmul.f32 %v751, 0.35355338
        %v756 = vmul.f32 %v752, 0.35355338
        %v757 = vmul.f32 %v753, 0.35355338
        %v758 = vpack.c.bf16 %v755, %v754
        %v759 = vpack.c.bf16 %v757, %v756
        %v762 = vunpack.c.l.b16 %v758
        %v763 = vunpack.c.h.b16 %v758
        %v764 = vunpack.c.l.b16 %v759
        %v765 = vunpack.c.h.b16 %v759
        %v766 = vpack.c.b16 %v762, %v762
        %v767 = vpack.c.b16 %v763, %v763
        %v768 = vpack.c.b16 %v764, %v764
        %v769 = vpack.c.b16 %v765, %v765
        %v770 = vpack.c.bf16 %v751, %v750
        %v771 = vpack.c.bf16 %v753, %v752
        %v774 = vunpack.c.l.b16 %v770
        %v775 = vunpack.c.h.b16 %v770
        %v776 = vunpack.c.l.b16 %v771
        %v777 = vunpack.c.h.b16 %v771
        %v778 = vpack.c.b16 %v774, %v774
        %779 = vrot.lane.b32.xlu0 %v778, 96
        %v780 = vpop.permute.xlu0 %779
        %vm781 = vcmask 64512
        %v783 = vsel %vm781, %v766, 0
        %v786 = vsel %vm781, %v780, 0
        %788 = vmatprep.subr.bf16.mxu0 0
        %789 = vmatpush1.bf16.xpose.msra.mxu0 %v786
        %790 = vmatprep.subr.bf16.mxu0 0
        %791 = vmatpush1.bf16.xpose.msra.mxu0 0
        %792 = vmatprep.subr.bf16.mxu0 0
        %793 = vmatpush1.bf16.xpose.msra.mxu0 0
        %794 = vmatprep.subr.bf16.mxu0 0
        %795 = vmatpush1.bf16.xpose.msra.mxu0 0
        %796 = vmatprep.subr.bf16.mxu0 0
        %797 = vmatpush1.bf16.xpose.msra.mxu0 0
        %798 = vmatprep.subr.bf16.mxu0 0
        %799 = vmatpush1.bf16.xpose.msra.mxu0 0
        %800 = vmatprep.subr.bf16.mxu0 0
        %801 = vmatpush1.bf16.xpose.msra.mxu0 0
        %802 = vmatprep.subr.bf16.mxu0 0
        %803 = vmatpush1.bf16.xpose.msra.mxu0 0
        %804 = vmatprep.subr.bf16.mxu0 0
        %805 = vmatpush1.bf16.xpose.msra.mxu0 0
        %806 = vmatprep.subr.bf16.mxu0 0
        %807 = vmatpush1.bf16.xpose.msra.mxu0 0
        %808 = vmatprep.subr.bf16.mxu0 0
        %809 = vmatpush1.bf16.xpose.msra.mxu0 0
        %810 = vmatprep.subr.bf16.mxu0 0
        %811 = vmatpush1.bf16.xpose.msra.mxu0 0
        %812 = vmatprep.subr.bf16.mxu0 0
        %813 = vmatpush1.bf16.xpose.msra.mxu0 0
        %814 = vmatprep.subr.bf16.mxu0 0
        %815 = vmatpush1.bf16.xpose.msra.mxu0 0
        %816 = vmatprep.subr.bf16.mxu0 0
        %817 = vmatpush1.bf16.xpose.msra.mxu0 0
        %818 = vmatprep.subr.bf16.mxu0 0
        %819 = vmatpush1.bf16.xpose.msra.mxu0 0
        %820 = vmatprep.mubr.bf16.mxu0 0
        %821 = vmatmul.mubr.bf16.gmra.mrb[0].mxu0 %v783
        %v822 = vpop.f32.mrb[0].mxu0
        %v823 = vadd.f32 0.0, %v822
        %v824 = vpop.f32.mrb[0].mxu0
        %v825 = vpop.f32.mrb[0].mxu0
        %v826 = vpop.f32.mrb[0].mxu0
        %827 = vdwg.mxu0
        %v828 = vpack.c.b16 %v775, %v775
        %829 = vrot.lane.b32.xlu0 %v828, 96
        %v830 = vpop.permute.xlu0 %829
        %v832 = vsel %vm781, %v767, 0
        %v835 = vsel %vm781, %v830, 0
        %837 = vmatprep.subr.bf16.mxu0 0
        %838 = vmatpush1.bf16.xpose.msra.mxu0 %v835
        %839 = vmatprep.subr.bf16.mxu0 0
        %840 = vmatpush1.bf16.xpose.msra.mxu0 0
        %841 = vmatprep.subr.bf16.mxu0 0
        %842 = vmatpush1.bf16.xpose.msra.mxu0 0
        %843 = vmatprep.subr.bf16.mxu0 0
        %844 = vmatpush1.bf16.xpose.msra.mxu0 0
        %845 = vmatprep.subr.bf16.mxu0 0
        %846 = vmatpush1.bf16.xpose.msra.mxu0 0
        %847 = vmatprep.subr.bf16.mxu0 0
        %848 = vmatpush1.bf16.xpose.msra.mxu0 0
        %849 = vmatprep.subr.bf16.mxu0 0
        %850 = vmatpush1.bf16.xpose.msra.mxu0 0
        %851 = vmatprep.subr.bf16.mxu0 0
        %852 = vmatpush1.bf16.xpose.msra.mxu0 0
        %853 = vmatprep.subr.bf16.mxu0 0
        %854 = vmatpush1.bf16.xpose.msra.mxu0 0
        %855 = vmatprep.subr.bf16.mxu0 0
        %856 = vmatpush1.bf16.xpose.msra.mxu0 0
        %857 = vmatprep.subr.bf16.mxu0 0
        %858 = vmatpush1.bf16.xpose.msra.mxu0 0
        %859 = vmatprep.subr.bf16.mxu0 0
        %860 = vmatpush1.bf16.xpose.msra.mxu0 0
        %861 = vmatprep.subr.bf16.mxu0 0
        %862 = vmatpush1.bf16.xpose.msra.mxu0 0
        %863 = vmatprep.subr.bf16.mxu0 0
        %864 = vmatpush1.bf16.xpose.msra.mxu0 0
        %865 = vmatprep.subr.bf16.mxu0 0
        %866 = vmatpush1.bf16.xpose.msra.mxu0 0
        %867 = vmatprep.subr.bf16.mxu0 0
        %868 = vmatpush1.bf16.xpose.msra.mxu0 0
        %869 = vmatprep.mubr.bf16.mxu0 0
        %870 = vmatmul.mubr.bf16.gmra.mrb[0].mxu0 %v832
        %v871 = vpop.f32.mrb[0].mxu0
        %v872 = vadd.f32 0.0, %v871
        %v873 = vpop.f32.mrb[0].mxu0
        %v874 = vpop.f32.mrb[0].mxu0
        %v875 = vpop.f32.mrb[0].mxu0
        %876 = vdwg.mxu0
        %v877 = vpack.c.b16 %v776, %v776
        %878 = vrot.lane.b32.xlu0 %v877, 96
        %v879 = vpop.permute.xlu0 %878
        %v881 = vsel %vm781, %v768, 0
        %v884 = vsel %vm781, %v879, 0
        %886 = vmatprep.subr.bf16.mxu0 0
        %887 = vmatpush1.bf16.xpose.msra.mxu0 %v884
        %888 = vmatprep.subr.bf16.mxu0 0
        %889 = vmatpush1.bf16.xpose.msra.mxu0 0
        %890 = vmatprep.subr.bf16.mxu0 0
        %891 = vmatpush1.bf16.xpose.msra.mxu0 0
        %892 = vmatprep.subr.bf16.mxu0 0
        %893 = vmatpush1.bf16.xpose.msra.mxu0 0
        %894 = vmatprep.subr.bf16.mxu0 0
        %895 = vmatpush1.bf16.xpose.msra.mxu0 0
        %896 = vmatprep.subr.bf16.mxu0 0
        %897 = vmatpush1.bf16.xpose.msra.mxu0 0
        %898 = vmatprep.subr.bf16.mxu0 0
        %899 = vmatpush1.bf16.xpose.msra.mxu0 0
        %900 = vmatprep.subr.bf16.mxu0 0
        %901 = vmatpush1.bf16.xpose.msra.mxu0 0
        %902 = vmatprep.subr.bf16.mxu0 0
        %903 = vmatpush1.bf16.xpose.msra.mxu0 0
        %904 = vmatprep.subr.bf16.mxu0 0
        %905 = vmatpush1.bf16.xpose.msra.mxu0 0
        %906 = vmatprep.subr.bf16.mxu0 0
        %907 = vmatpush1.bf16.xpose.msra.mxu0 0
        %908 = vmatprep.subr.bf16.mxu0 0
        %909 = vmatpush1.bf16.xpose.msra.mxu0 0
        %910 = vmatprep.subr.bf16.mxu0 0
        %911 = vmatpush1.bf16.xpose.msra.mxu0 0
        %912 = vmatprep.subr.bf16.mxu0 0
        %913 = vmatpush1.bf16.xpose.msra.mxu0 0
        %914 = vmatprep.subr.bf16.mxu0 0
        %915 = vmatpush1.bf16.xpose.msra.mxu0 0
        %916 = vmatprep.subr.bf16.mxu0 0
        %917 = vmatpush1.bf16.xpose.msra.mxu0 0
        %918 = vmatprep.mubr.bf16.mxu0 0
        %919 = vmatmul.mubr.bf16.gmra.mrb[0].mxu0 %v881
        %v920 = vpop.f32.mrb[0].mxu0
        %v921 = vadd.f32 0.0, %v920
        %v922 = vpop.f32.mrb[0].mxu0
        %v923 = vpop.f32.mrb[0].mxu0
        %v924 = vpop.f32.mrb[0].mxu0
        %925 = vdwg.mxu0
        %v926 = vpack.c.b16 %v777, %v777
        %927 = vrot.lane.b32.xlu0 %v926, 96
        %v928 = vpop.permute.xlu0 %927
        %v930 = vsel %vm781, %v769, 0
        %v933 = vsel %vm781, %v928, 0
        %935 = vmatprep.subr.bf16.mxu0 0
        %936 = vmatpush1.bf16.xpose.msra.mxu0 %v933
        %937 = vmatprep.subr.bf16.mxu0 0
        %938 = vmatpush1.bf16.xpose.msra.mxu0 0
        %939 = vmatprep.subr.bf16.mxu0 0
        %940 = vmatpush1.bf16.xpose.msra.mxu0 0
        %941 = vmatprep.subr.bf16.mxu0 0
        %942 = vmatpush1.bf16.xpose.msra.mxu0 0
        %943 = vmatprep.subr.bf16.mxu0 0
        %944 = vmatpush1.bf16.xpose.msra.mxu0 0
        %945 = vmatprep.subr.bf16.mxu0 0
        %946 = vmatpush1.bf16.xpose.msra.mxu0 0
        %947 = vmatprep.subr.bf16.mxu0 0
        %948 = vmatpush1.bf16.xpose.msra.mxu0 0
        %949 = vmatprep.subr.bf16.mxu0 0
        %950 = vmatpush1.bf16.xpose.msra.mxu0 0
        %951 = vmatprep.subr.bf16.mxu0 0
        %952 = vmatpush1.bf16.xpose.msra.mxu0 0
        %953 = vmatprep.subr.bf16.mxu0 0
        %954 = vmatpush1.bf16.xpose.msra.mxu0 0
        %955 = vmatprep.subr.bf16.mxu0 0
        %956 = vmatpush1.bf16.xpose.msra.mxu0 0
        %957 = vmatprep.subr.bf16.mxu0 0
        %958 = vmatpush1.bf16.xpose.msra.mxu0 0
        %959 = vmatprep.subr.bf16.mxu0 0
        %960 = vmatpush1.bf16.xpose.msra.mxu0 0
        %961 = vmatprep.subr.bf16.mxu0 0
        %962 = vmatpush1.bf16.xpose.msra.mxu0 0
        %963 = vmatprep.subr.bf16.mxu0 0
        %964 = vmatpush1.bf16.xpose.msra.mxu0 0
        %965 = vmatprep.subr.bf16.mxu0 0
        %966 = vmatpush1.bf16.xpose.msra.mxu0 0
        %967 = vmatprep.mubr.bf16.mxu0 0
        %968 = vmatmul.mubr.bf16.gmra.mrb[0].mxu0 %v930
        %v969 = vpop.f32.mrb[0].mxu0
        %v970 = vadd.f32 0.0, %v969
        %v971 = vpop.f32.mrb[0].mxu0
        %v972 = vpop.f32.mrb[0].mxu0
        %v973 = vpop.f32.mrb[0].mxu0
        %974 = vdwg.mxu0
        %v975 = vsel %vm749, 1, 0
        %vm976 = vcmp.eq.s32.totalorder %v975, 1
        %v977 = vsel %vm976, %v823, -10000.0
        %v978 = vsel %vm976, %v872, -10000.0
        %v979 = vsel %vm976, %v921, -10000.0
        %v980 = vsel %vm976, %v970, -10000.0
        %v981 = vsel %vm781, %v977, -inf
        %982 = vmax.xlane.f32.xlu0 %v981
        %v983 = vpop.xlane.xlu0 %982
        %v984 = vsel %vm781, %v978, -inf
        %985 = vmax.xlane.f32.xlu0 %v984
        %v986 = vpop.xlane.xlu0 %985
        %v987 = vsel %vm781, %v979, -inf
        %988 = vmax.xlane.f32.xlu0 %v987
        %v989 = vpop.xlane.xlu0 %988
        %v990 = vsel %vm781, %v980, -inf
        %991 = vmax.xlane.f32.xlu0 %v990
        %v992 = vpop.xlane.xlu0 %991
        %v993 = vsub.f32 %v977, %v983
        %v994 = vsub.f32 %v978, %v986
        %v995 = vsub.f32 %v979, %v989
        %v996 = vsub.f32 %v980, %v992
        %v997 = vmul.f32 %v993, 1.442695
        %v998 = vpow.pop %v997
        %v999 = vmul.f32 %v994, 1.442695
        %v1000 = vpow.pop %v999
        %v1001 = vmul.f32 %v995, 1.442695
        %v1002 = vpow.pop %v1001
        %v1003 = vmul.f32 %v996, 1.442695
        %v1004 = vpow.pop %v1003
        %v1005 = vsel %vm781, %v998, 0.0
        %1006 = vadd.xlane.f32.xlu0 %v1005
        %v1007 = vpop.xlane.xlu0 %1006
        %v1008 = vsel %vm781, %v1000, 0.0
        %1009 = vadd.xlane.f32.xlu0 %v1008
        %v1010 = vpop.xlane.xlu0 %1009
        %v1011 = vsel %vm781, %v1002, 0.0
        %1012 = vadd.xlane.f32.xlu0 %v1011
        %v1013 = vpop.xlane.xlu0 %1012
        %v1014 = vsel %vm781, %v1004, 0.0
        %1015 = vadd.xlane.f32.xlu0 %v1014
        %v1016 = vpop.xlane.xlu0 %1015
        %v1017 = vrcp.pop %v1007
        %v1018 = vrcp.pop %v1010
        %v1019 = vrcp.pop %v1013
        %v1020 = vrcp.pop %v1016
        %v1021 = vmul.f32 %v998, %v1017
        %v1022 = vmul.f32 %v1000, %v1018
        %v1023 = vmul.f32 %v1002, %v1019
        %v1024 = vmul.f32 %v1004, %v1020
        %v1025 = vpack.c.bf16 %v1021, %v1021
        %v1026 = vpack.c.bf16 %v1022, %v1022
        %v1027 = vpack.c.bf16 %v1023, %v1023
        %v1028 = vpack.c.bf16 %v1024, %v1024
        %1029 = vrot.lane.b32.xlu0 %v778, 64
        %v1030 = vpop.permute.xlu0 %1029
        %v1032 = vsel %vm781, %v1025, 0
        %vm1034 = vcmask 1043456
        %v1036 = vsel %vm1034, %v1030, 0
        %1038 = vmatprep.subr.bf16.mxu0 0
        %1039 = vmatpush1.bf16.msra.mxu0 %v1036
        %1040 = vmatprep.subr.bf16.mxu0 0
        %1041 = vmatpush1.bf16.msra.mxu0 0
        %1042 = vmatprep.subr.bf16.mxu0 0
        %1043 = vmatpush1.bf16.msra.mxu0 0
        %1044 = vmatprep.subr.bf16.mxu0 0
        %1045 = vmatpush1.bf16.msra.mxu0 0
        %1046 = vmatprep.subr.bf16.mxu0 0
        %1047 = vmatpush1.bf16.msra.mxu0 0
        %1048 = vmatprep.subr.bf16.mxu0 0
        %1049 = vmatpush1.bf16.msra.mxu0 0
        %1050 = vmatprep.subr.bf16.mxu0 0
        %1051 = vmatpush1.bf16.msra.mxu0 0
        %1052 = vmatprep.subr.bf16.mxu0 0
        %1053 = vmatpush1.bf16.msra.mxu0 0
        %1054 = vmatprep.subr.bf16.mxu0 0
        %1055 = vmatpush1.bf16.msra.mxu0 0
        %1056 = vmatprep.subr.bf16.mxu0 0
        %1057 = vmatpush1.bf16.msra.mxu0 0
        %1058 = vmatprep.subr.bf16.mxu0 0
        %1059 = vmatpush1.bf16.msra.mxu0 0
        %1060 = vmatprep.subr.bf16.mxu0 0
        %1061 = vmatpush1.bf16.msra.mxu0 0
        %1062 = vmatprep.subr.bf16.mxu0 0
        %1063 = vmatpush1.bf16.msra.mxu0 0
        %1064 = vmatprep.subr.bf16.mxu0 0
        %1065 = vmatpush1.bf16.msra.mxu0 0
        %1066 = vmatprep.subr.bf16.mxu0 0
        %1067 = vmatpush1.bf16.msra.mxu0 0
        %1068 = vmatprep.subr.bf16.mxu0 0
        %1069 = vmatpush1.bf16.msra.mxu0 0
        %1070 = vmatprep.mubr.bf16.mxu0 0
        %1071 = vmatmul.mubr.bf16.gmra.mrb[0].mxu0 %v1032
        %v1072 = vpop.f32.mrb[0].mxu0
        %v1073 = vadd.f32 0.0, %v1072
        %v1074 = vpop.f32.mrb[0].mxu0
        %v1075 = vpop.f32.mrb[0].mxu0
        %v1076 = vpop.f32.mrb[0].mxu0
        %1077 = vdwg.mxu0
        %1078 = vrot.lane.b32.xlu0 %v828, 64
        %v1079 = vpop.permute.xlu0 %1078
        %v1081 = vsel %vm781, %v1026, 0
        %v1084 = vsel %vm1034, %v1079, 0
        %1086 = vmatprep.subr.bf16.mxu0 0
        %1087 = vmatpush1.bf16.msra.mxu0 %v1084
        %1088 = vmatprep.subr.bf16.mxu0 0
        %1089 = vmatpush1.bf16.msra.mxu0 0
        %1090 = vmatprep.subr.bf16.mxu0 0
        %1091 = vmatpush1.bf16.msra.mxu0 0
        %1092 = vmatprep.subr.bf16.mxu0 0
        %1093 = vmatpush1.bf16.msra.mxu0 0
        %1094 = vmatprep.subr.bf16.mxu0 0
        %1095 = vmatpush1.bf16.msra.mxu0 0
        %1096 = vmatprep.subr.bf16.mxu0 0
        %1097 = vmatpush1.bf16.msra.mxu0 0
        %1098 = vmatprep.subr.bf16.mxu0 0
        %1099 = vmatpush1.bf16.msra.mxu0 0
        %1100 = vmatprep.subr.bf16.mxu0 0
        %1101 = vmatpush1.bf16.msra.mxu0 0
        %1102 = vmatprep.subr.bf16.mxu0 0
        %1103 = vmatpush1.bf16.msra.mxu0 0
        %1104 = vmatprep.subr.bf16.mxu0 0
        %1105 = vmatpush1.bf16.msra.mxu0 0
        %1106 = vmatprep.subr.bf16.mxu0 0
        %1107 = vmatpush1.bf16.msra.mxu0 0
        %1108 = vmatprep.subr.bf16.mxu0 0
        %1109 = vmatpush1.bf16.msra.mxu0 0
        %1110 = vmatprep.subr.bf16.mxu0 0
        %1111 = vmatpush1.bf16.msra.mxu0 0
        %1112 = vmatprep.subr.bf16.mxu0 0
        %1113 = vmatpush1.bf16.msra.mxu0 0
        %1114 = vmatprep.subr.bf16.mxu0 0
        %1115 = vmatpush1.bf16.msra.mxu0 0
        %1116 = vmatprep.subr.bf16.mxu0 0
        %1117 = vmatpush1.bf16.msra.mxu0 0
        %1118 = vmatprep.mubr.bf16.mxu0 0
        %1119 = vmatmul.mubr.bf16.gmra.mrb[0].mxu0 %v1081
        %v1120 = vpop.f32.mrb[0].mxu0
        %v1121 = vadd.f32 0.0, %v1120
        %v1122 = vpop.f32.mrb[0].mxu0
        %v1123 = vpop.f32.mrb[0].mxu0
        %v1124 = vpop.f32.mrb[0].mxu0
        %1125 = vdwg.mxu0
        %1126 = vrot.lane.b32.xlu0 %v877, 64
        %v1127 = vpop.permute.xlu0 %1126
        %v1129 = vsel %vm781, %v1027, 0
        %v1132 = vsel %vm1034, %v1127, 0
        %1134 = vmatprep.subr.bf16.mxu0 0
        %1135 = vmatpush1.bf16.msra.mxu0 %v1132
        %1136 = vmatprep.subr.bf16.mxu0 0
        %1137 = vmatpush1.bf16.msra.mxu0 0
        %1138 = vmatprep.subr.bf16.mxu0 0
        %1139 = vmatpush1.bf16.msra.mxu0 0
        %1140 = vmatprep.subr.bf16.mxu0 0
        %1141 = vmatpush1.bf16.msra.mxu0 0
        %1142 = vmatprep.subr.bf16.mxu0 0
        %1143 = vmatpush1.bf16.msra.mxu0 0
        %1144 = vmatprep.subr.bf16.mxu0 0
        %1145 = vmatpush1.bf16.msra.mxu0 0
        %1146 = vmatprep.subr.bf16.mxu0 0
        %1147 = vmatpush1.bf16.msra.mxu0 0
        %1148 = vmatprep.subr.bf16.mxu0 0
        %1149 = vmatpush1.bf16.msra.mxu0 0
        %1150 = vmatprep.subr.bf16.mxu0 0
        %1151 = vmatpush1.bf16.msra.mxu0 0
        %1152 = vmatprep.subr.bf16.mxu0 0
        %1153 = vmatpush1.bf16.msra.mxu0 0
        %1154 = vmatprep.subr.bf16.mxu0 0
        %1155 = vmatpush1.bf16.msra.mxu0 0
        %1156 = vmatprep.subr.bf16.mxu0 0
        %1157 = vmatpush1.bf16.msra.mxu0 0
        %1158 = vmatprep.subr.bf16.mxu0 0
        %1159 = vmatpush1.bf16.msra.mxu0 0
        %1160 = vmatprep.subr.bf16.mxu0 0
        %1161 = vmatpush1.bf16.msra.mxu0 0
        %1162 = vmatprep.subr.bf16.mxu0 0
        %1163 = vmatpush1.bf16.msra.mxu0 0
        %1164 = vmatprep.subr.bf16.mxu0 0
        %1165 = vmatpush1.bf16.msra.mxu0 0
        %1166 = vmatprep.mubr.bf16.mxu0 0
        %1167 = vmatmul.mubr.bf16.gmra.mrb[0].mxu0 %v1129
        %v1168 = vpop.f32.mrb[0].mxu0
        %v1169 = vadd.f32 0.0, %v1168
        %v1170 = vpop.f32.mrb[0].mxu0
        %v1171 = vpop.f32.mrb[0].mxu0
        %v1172 = vpop.f32.mrb[0].mxu0
        %1173 = vdwg.mxu0
        %1174 = vrot.lane.b32.xlu0 %v926, 64
        %v1175 = vpop.permute.xlu0 %1174
        %v1177 = vsel %vm781, %v1028, 0
        %v1180 = vsel %vm1034, %v1175, 0
        %1182 = vmatprep.subr.bf16.mxu0 0
        %1183 = vmatpush1.bf16.msra.mxu0 %v1180
        %1184 = vmatprep.subr.bf16.mxu0 0
        %1185 = vmatpush1.bf16.msra.mxu0 0
        %1186 = vmatprep.subr.bf16.mxu0 0
        %1187 = vmatpush1.bf16.msra.mxu0 0
        %1188 = vmatprep.subr.bf16.mxu0 0
        %1189 = vmatpush1.bf16.msra.mxu0 0
        %1190 = vmatprep.subr.bf16.mxu0 0
        %1191 = vmatpush1.bf16.msra.mxu0 0
        %1192 = vmatprep.subr.bf16.mxu0 0
        %1193 = vmatpush1.bf16.msra.mxu0 0
        %1194 = vmatprep.subr.bf16.mxu0 0
        %1195 = vmatpush1.bf16.msra.mxu0 0
        %1196 = vmatprep.subr.bf16.mxu0 0
        %1197 = vmatpush1.bf16.msra.mxu0 0
        %1198 = vmatprep.subr.bf16.mxu0 0
        %1199 = vmatpush1.bf16.msra.mxu0 0
        %1200 = vmatprep.subr.bf16.mxu0 0
        %1201 = vmatpush1.bf16.msra.mxu0 0
        %1202 = vmatprep.subr.bf16.mxu0 0
        %1203 = vmatpush1.bf16.msra.mxu0 0
        %1204 = vmatprep.subr.bf16.mxu0 0
        %1205 = vmatpush1.bf16.msra.mxu0 0
        %1206 = vmatprep.subr.bf16.mxu0 0
        %1207 = vmatpush1.bf16.msra.mxu0 0
        %1208 = vmatprep.subr.bf16.mxu0 0
        %1209 = vmatpush1.bf16.msra.mxu0 0
        %1210 = vmatprep.subr.bf16.mxu0 0
        %1211 = vmatpush1.bf16.msra.mxu0 0
        %1212 = vmatprep.subr.bf16.mxu0 0
        %1213 = vmatpush1.bf16.msra.mxu0 0
        %1214 = vmatprep.mubr.bf16.mxu0 0
        %1215 = vmatmul.mubr.bf16.gmra.mrb[0].mxu0 %v1177
        %v1216 = vpop.f32.mrb[0].mxu0
        %v1217 = vadd.f32 0.0, %v1216
        %v1218 = vpop.f32.mrb[0].mxu0
        %v1219 = vpop.f32.mrb[0].mxu0
        %v1220 = vpop.f32.mrb[0].mxu0
        %1221 = vdwg.mxu0
        %v1222 = vld [vmem:[#allocation2] sm:$0xff]
        %v1223 = vld [vmem:[#allocation2 + $0x8] sm:$0xff]
        %v1224 = vld [vmem:[#allocation2 + $0x10] sm:$0xff]
        %v1225 = vld [vmem:[#allocation2 + $0x18] sm:$0xff]
        %v1226 = vmul.f32 %v1222, 0.35355338
        %v1227 = vmul.f32 %v1223, 0.35355338
        %v1228 = vmul.f32 %v1224, 0.35355338
        %v1229 = vmul.f32 %v1225, 0.35355338
        %v1230 = vpack.c.bf16 %v1227, %v1226
        %v1231 = vpack.c.bf16 %v1229, %v1228
        %v1234 = vunpack.c.l.b16 %v1230
        %v1235 = vunpack.c.h.b16 %v1230
        %v1236 = vunpack.c.l.b16 %v1231
        %v1237 = vunpack.c.h.b16 %v1231
        %v1238 = vpack.c.bf16 %v1223, %v1222
        %v1239 = vpack.c.bf16 %v1225, %v1224
        %v1242 = vunpack.c.l.b16 %v1238
        %v1243 = vunpack.c.h.b16 %v1238
        %v1244 = vunpack.c.l.b16 %v1239
        %v1245 = vunpack.c.h.b16 %v1239
        %v1246 = vpack.c.b16 %v1234, %v1234
        %1247 = vrot.lane.b32.xlu0 %v1246, 120
        %v1248 = vpop.permute.xlu0 %1247
        %v1249 = vpack.c.b16 %v1242, %v1242
        %1250 = vrot.lane.b32.xlu0 %v1249, 88
        %v1251 = vpop.permute.xlu0 %1250
        %v1253 = vsel %vm781, %v1248, 0
        %v1256 = vsel %vm781, %v1251, 0
        %1258 = vmatprep.subr.bf16.mxu0 0
        %1259 = vmatpush1.bf16.xpose.msra.mxu0 %v1256
        %1260 = vmatprep.subr.bf16.mxu0 0
        %1261 = vmatpush1.bf16.xpose.msra.mxu0 0
        %1262 = vmatprep.subr.bf16.mxu0 0
        %1263 = vmatpush1.bf16.xpose.msra.mxu0 0
        %1264 = vmatprep.subr.bf16.mxu0 0
        %1265 = vmatpush1.bf16.xpose.msra.mxu0 0
        %1266 = vmatprep.subr.bf16.mxu0 0
        %1267 = vmatpush1.bf16.xpose.msra.mxu0 0
        %1268 = vmatprep.subr.bf16.mxu0 0
        %1269 = vmatpush1.bf16.xpose.msra.mxu0 0
        %1270 = vmatprep.subr.bf16.mxu0 0
        %1271 = vmatpush1.bf16.xpose.msra.mxu0 0
        %1272 = vmatprep.subr.bf16.mxu0 0
        %1273 = vmatpush1.bf16.xpose.msra.mxu0 0
        %1274 = vmatprep.subr.bf16.mxu0 0
        %1275 = vmatpush1.bf16.xpose.msra.mxu0 0
        %1276 = vmatprep.subr.bf16.mxu0 0
        %1277 = vmatpush1.bf16.xpose.msra.mxu0 0
        %1278 = vmatprep.subr.bf16.mxu0 0
        %1279 = vmatpush1.bf16.xpose.msra.mxu0 0
        %1280 = vmatprep.subr.bf16.mxu0 0
        %1281 = vmatpush1.bf16.xpose.msra.mxu0 0
        %1282 = vmatprep.subr.bf16.mxu0 0
        %1283 = vmatpush1.bf16.xpose.msra.mxu0 0
        %1284 = vmatprep.subr.bf16.mxu0 0
        %1285 = vmatpush1.bf16.xpose.msra.mxu0 0
        %1286 = vmatprep.subr.bf16.mxu0 0
        %1287 = vmatpush1.bf16.xpose.msra.mxu0 0
        %1288 = vmatprep.subr.bf16.mxu0 0
        %1289 = vmatpush1.bf16.xpose.msra.mxu0 0
        %1290 = vmatprep.mubr.bf16.mxu0 0
        %1291 = vmatmul.mubr.bf16.gmra.mrb[0].mxu0 %v1253
        %v1292 = vpop.f32.mrb[0].mxu0
        %v1293 = vadd.f32 0.0, %v1292
        %v1294 = vpop.f32.mrb[0].mxu0
        %v1295 = vpop.f32.mrb[0].mxu0
        %v1296 = vpop.f32.mrb[0].mxu0
        %1297 = vdwg.mxu0
        %v1298 = vpack.c.b16 %v1235, %v1235
        %1299 = vrot.lane.b32.xlu0 %v1298, 120
        %v1300 = vpop.permute.xlu0 %1299
        %v1301 = vpack.c.b16 %v1243, %v1243
        %1302 = vrot.lane.b32.xlu0 %v1301, 88
        %v1303 = vpop.permute.xlu0 %1302
        %v1305 = vsel %vm781, %v1300, 0
        %v1308 = vsel %vm781, %v1303, 0
        %1310 = vmatprep.subr.bf16.mxu0 0
        %1311 = vmatpush1.bf16.xpose.msra.mxu0 %v1308
        %1312 = vmatprep.subr.bf16.mxu0 0
        %1313 = vmatpush1.bf16.xpose.msra.mxu0 0
        %1314 = vmatprep.subr.bf16.mxu0 0
        %1315 = vmatpush1.bf16.xpose.msra.mxu0 0
        %1316 = vmatprep.subr.bf16.mxu0 0
        %1317 = vmatpush1.bf16.xpose.msra.mxu0 0
        %1318 = vmatprep.subr.bf16.mxu0 0
        %1319 = vmatpush1.bf16.xpose.msra.mxu0 0
        %1320 = vmatprep.subr.bf16.mxu0 0
        %1321 = vmatpush1.bf16.xpose.msra.mxu0 0
        %1322 = vmatprep.subr.bf16.mxu0 0
        %1323 = vmatpush1.bf16.xpose.msra.mxu0 0
        %1324 = vmatprep.subr.bf16.mxu0 0
        %1325 = vmatpush1.bf16.xpose.msra.mxu0 0
        %1326 = vmatprep.subr.bf16.mxu0 0
        %1327 = vmatpush1.bf16.xpose.msra.mxu0 0
        %1328 = vmatprep.subr.bf16.mxu0 0
        %1329 = vmatpush1.bf16.xpose.msra.mxu0 0
        %1330 = vmatprep.subr.bf16.mxu0 0
        %1331 = vmatpush1.bf16.xpose.msra.mxu0 0
        %1332 = vmatprep.subr.bf16.mxu0 0
        %1333 = vmatpush1.bf16.xpose.msra.mxu0 0
        %1334 = vmatprep.subr.bf16.mxu0 0
        %1335 = vmatpush1.bf16.xpose.msra.mxu0 0
        %1336 = vmatprep.subr.bf16.mxu0 0
        %1337 = vmatpush1.bf16.xpose.msra.mxu0 0
        %1338 = vmatprep.subr.bf16.mxu0 0
        %1339 = vmatpush1.bf16.xpose.msra.mxu0 0
        %1340 = vmatprep.subr.bf16.mxu0 0
        %1341 = vmatpush1.bf16.xpose.msra.mxu0 0
        %1342 = vmatprep.mubr.bf16.mxu0 0
        %1343 = vmatmul.mubr.bf16.gmra.mrb[0].mxu0 %v1305
        %v1344 = vpop.f32.mrb[0].mxu0
        %v1345 = vadd.f32 0.0, %v1344
        %v1346 = vpop.f32.mrb[0].mxu0
        %v1347 = vpop.f32.mrb[0].mxu0
        %v1348 = vpop.f32.mrb[0].mxu0
        %1349 = vdwg.mxu0
        %v1350 = vpack.c.b16 %v1236, %v1236
        %1351 = vrot.lane.b32.xlu0 %v1350, 120
        %v1352 = vpop.permute.xlu0 %1351
        %v1353 = vpack.c.b16 %v1244, %v1244
        %1354 = vrot.lane.b32.xlu0 %v1353, 88
        %v1355 = vpop.permute.xlu0 %1354
        %v1357 = vsel %vm781, %v1352, 0
        %v1360 = vsel %vm781, %v1355, 0
        %1362 = vmatprep.subr.bf16.mxu0 0
        %1363 = vmatpush1.bf16.xpose.msra.mxu0 %v1360
        %1364 = vmatprep.subr.bf16.mxu0 0
        %1365 = vmatpush1.bf16.xpose.msra.mxu0 0
        %1366 = vmatprep.subr.bf16.mxu0 0
        %1367 = vmatpush1.bf16.xpose.msra.mxu0 0
        %1368 = vmatprep.subr.bf16.mxu0 0
        %1369 = vmatpush1.bf16.xpose.msra.mxu0 0
        %1370 = vmatprep.subr.bf16.mxu0 0
        %1371 = vmatpush1.bf16.xpose.msra.mxu0 0
        %1372 = vmatprep.subr.bf16.mxu0 0
        %1373 = vmatpush1.bf16.xpose.msra.mxu0 0
        %1374 = vmatprep.subr.bf16.mxu0 0
        %1375 = vmatpush1.bf16.xpose.msra.mxu0 0
        %1376 = vmatprep.subr.bf16.mxu0 0
        %1377 = vmatpush1.bf16.xpose.msra.mxu0 0
        %1378 = vmatprep.subr.bf16.mxu0 0
        %1379 = vmatpush1.bf16.xpose.msra.mxu0 0
        %1380 = vmatprep.subr.bf16.mxu0 0
        %1381 = vmatpush1.bf16.xpose.msra.mxu0 0
        %1382 = vmatprep.subr.bf16.mxu0 0
        %1383 = vmatpush1.bf16.xpose.msra.mxu0 0
        %1384 = vmatprep.subr.bf16.mxu0 0
        %1385 = vmatpush1.bf16.xpose.msra.mxu0 0
        %1386 = vmatprep.subr.bf16.mxu0 0
        %1387 = vmatpush1.bf16.xpose.msra.mxu0 0
        %1388 = vmatprep.subr.bf16.mxu0 0
        %1389 = vmatpush1.bf16.xpose.msra.mxu0 0
        %1390 = vmatprep.subr.bf16.mxu0 0
        %1391 = vmatpush1.bf16.xpose.msra.mxu0 0
        %1392 = vmatprep.subr.bf16.mxu0 0
        %1393 = vmatpush1.bf16.xpose.msra.mxu0 0
        %1394 = vmatprep.mubr.bf16.mxu0 0
        %1395 = vmatmul.mubr.bf16.gmra.mrb[0].mxu0 %v1357
        %v1396 = vpop.f32.mrb[0].mxu0
        %v1397 = vadd.f32 0.0, %v1396
        %v1398 = vpop.f32.mrb[0].mxu0
        %v1399 = vpop.f32.mrb[0].mxu0
        %v1400 = vpop.f32.mrb[0].mxu0
        %1401 = vdwg.mxu0
        %v1402 = vpack.c.b16 %v1237, %v1237
        %1403 = vrot.lane.b32.xlu0 %v1402, 120
        %v1404 = vpop.permute.xlu0 %1403
        %v1405 = vpack.c.b16 %v1245, %v1245
        %1406 = vrot.lane.b32.xlu0 %v1405, 88
        %v1407 = vpop.permute.xlu0 %1406
        %v1409 = vsel %vm781, %v1404, 0
        %v1412 = vsel %vm781, %v1407, 0
        %1414 = vmatprep.subr.bf16.mxu0 0
        %1415 = vmatpush1.bf16.xpose.msra.mxu0 %v1412
        %1416 = vmatprep.subr.bf16.mxu0 0
        %1417 = vmatpush1.bf16.xpose.msra.mxu0 0
        %1418 = vmatprep.subr.bf16.mxu0 0
        %1419 = vmatpush1.bf16.xpose.msra.mxu0 0
        %1420 = vmatprep.subr.bf16.mxu0 0
        %1421 = vmatpush1.bf16.xpose.msra.mxu0 0
        %1422 = vmatprep.subr.bf16.mxu0 0
        %1423 = vmatpush1.bf16.xpose.msra.mxu0 0
        %1424 = vmatprep.subr.bf16.mxu0 0
        %1425 = vmatpush1.bf16.xpose.msra.mxu0 0
        %1426 = vmatprep.subr.bf16.mxu0 0
        %1427 = vmatpush1.bf16.xpose.msra.mxu0 0
        %1428 = vmatprep.subr.bf16.mxu0 0
        %1429 = vmatpush1.bf16.xpose.msra.mxu0 0
        %1430 = vmatprep.subr.bf16.mxu0 0
        %1431 = vmatpush1.bf16.xpose.msra.mxu0 0
        %1432 = vmatprep.subr.bf16.mxu0 0
        %1433 = vmatpush1.bf16.xpose.msra.mxu0 0
        %1434 = vmatprep.subr.bf16.mxu0 0
        %1435 = vmatpush1.bf16.xpose.msra.mxu0 0
        %1436 = vmatprep.subr.bf16.mxu0 0
        %1437 = vmatpush1.bf16.xpose.msra.mxu0 0
        %1438 = vmatprep.subr.bf16.mxu0 0
        %1439 = vmatpush1.bf16.xpose.msra.mxu0 0
        %1440 = vmatprep.subr.bf16.mxu0 0
        %1441 = vmatpush1.bf16.xpose.msra.mxu0 0
        %1442 = vmatprep.subr.bf16.mxu0 0
        %1443 = vmatpush1.bf16.xpose.msra.mxu0 0
        %1444 = vmatprep.subr.bf16.mxu0 0
        %1445 = vmatpush1.bf16.xpose.msra.mxu0 0
        %1446 = vmatprep.mubr.bf16.mxu0 0
        %1447 = vmatmul.mubr.bf16.gmra.mrb[0].mxu0 %v1409
        %v1448 = vpop.f32.mrb[0].mxu0
        %v1449 = vadd.f32 0.0, %v1448
        %v1450 = vpop.f32.mrb[0].mxu0
        %v1451 = vpop.f32.mrb[0].mxu0
        %v1452 = vpop.f32.mrb[0].mxu0
        %1453 = vdwg.mxu0
        %v1454 = vsel %vm976, %v1293, -10000.0
        %v1455 = vsel %vm976, %v1345, -10000.0
        %v1456 = vsel %vm976, %v1397, -10000.0
        %v1457 = vsel %vm976, %v1449, -10000.0
        %v1458 = vsel %vm781, %v1454, -inf
        %1459 = vmax.xlane.f32.xlu0 %v1458
        %v1460 = vpop.xlane.xlu0 %1459
        %v1461 = vsel %vm781, %v1455, -inf
        %1462 = vmax.xlane.f32.xlu0 %v1461
        %v1463 = vpop.xlane.xlu0 %1462
        %v1464 = vsel %vm781, %v1456, -inf
        %1465 = vmax.xlane.f32.xlu0 %v1464
        %v1466 = vpop.xlane.xlu0 %1465
        %v1467 = vsel %vm781, %v1457, -inf
        %1468 = vmax.xlane.f32.xlu0 %v1467
        %v1469 = vpop.xlane.xlu0 %1468
        %v1470 = vsub.f32 %v1454, %v1460
        %v1471 = vsub.f32 %v1455, %v1463
        %v1472 = vsub.f32 %v1456, %v1466
        %v1473 = vsub.f32 %v1457, %v1469
        %v1474 = vmul.f32 %v1470, 1.442695
        %v1475 = vpow.pop %v1474
        %v1476 = vmul.f32 %v1471, 1.442695
        %v1477 = vpow.pop %v1476
        %v1478 = vmul.f32 %v1472, 1.442695
        %v1479 = vpow.pop %v1478
        %v1480 = vmul.f32 %v1473, 1.442695
        %v1481 = vpow.pop %v1480
        %v1482 = vsel %vm781, %v1475, 0.0
        %1483 = vadd.xlane.f32.xlu0 %v1482
        %v1484 = vpop.xlane.xlu0 %1483
        %v1485 = vsel %vm781, %v1477, 0.0
        %1486 = vadd.xlane.f32.xlu0 %v1485
        %v1487 = vpop.xlane.xlu0 %1486
        %v1488 = vsel %vm781, %v1479, 0.0
        %1489 = vadd.xlane.f32.xlu0 %v1488
        %v1490 = vpop.xlane.xlu0 %1489
        %v1491 = vsel %vm781, %v1481, 0.0
        %1492 = vadd.xlane.f32.xlu0 %v1491
        %v1493 = vpop.xlane.xlu0 %1492
        %v1494 = vrcp.pop %v1484
        %v1495 = vrcp.pop %v1487
        %v1496 = vrcp.pop %v1490
        %v1497 = vrcp.pop %v1493
        %v1498 = vmul.f32 %v1475, %v1494
        %v1499 = vmul.f32 %v1477, %v1495
        %v1500 = vmul.f32 %v1479, %v1496
        %v1501 = vmul.f32 %v1481, %v1497
        %v1502 = vpack.c.bf16 %v1498, %v1498
        %v1503 = vpack.c.bf16 %v1499, %v1499
        %v1504 = vpack.c.bf16 %v1500, %v1500
        %v1505 = vpack.c.bf16 %v1501, %v1501
        %1506 = vrot.lane.b32.xlu0 %v1249, 56
        %v1507 = vpop.permute.xlu0 %1506
        %v1509 = vsel %vm781, %v1502, 0
        %v1512 = vsel %vm1034, %v1507, 0
        %1514 = vmatprep.subr.bf16.mxu0 0
        %1515 = vmatpush1.bf16.msra.mxu0 %v1512
        %1516 = vmatprep.subr.bf16.mxu0 0
        %1517 = vmatpush1.bf16.msra.mxu0 0
        %1518 = vmatprep.subr.bf16.mxu0 0
        %1519 = vmatpush1.bf16.msra.mxu0 0
        %1520 = vmatprep.subr.bf16.mxu0 0
        %1521 = vmatpush1.bf16.msra.mxu0 0
        %1522 = vmatprep.subr.bf16.mxu0 0
        %1523 = vmatpush1.bf16.msra.mxu0 0
        %1524 = vmatprep.subr.bf16.mxu0 0
        %1525 = vmatpush1.bf16.msra.mxu0 0
        %1526 = vmatprep.subr.bf16.mxu0 0
        %1527 = vmatpush1.bf16.msra.mxu0 0
        %1528 = vmatprep.subr.bf16.mxu0 0
        %1529 = vmatpush1.bf16.msra.mxu0 0
        %1530 = vmatprep.subr.bf16.mxu0 0
        %1531 = vmatpush1.bf16.msra.mxu0 0
        %1532 = vmatprep.subr.bf16.mxu0 0
        %1533 = vmatpush1.bf16.msra.mxu0 0
        %1534 = vmatprep.subr.bf16.mxu0 0
        %1535 = vmatpush1.bf16.msra.mxu0 0
        %1536 = vmatprep.subr.bf16.mxu0 0
        %1537 = vmatpush1.bf16.msra.mxu0 0
        %1538 = vmatprep.subr.bf16.mxu0 0
        %1539 = vmatpush1.bf16.msra.mxu0 0
        %1540 = vmatprep.subr.bf16.mxu0 0
        %1541 = vmatpush1.bf16.msra.mxu0 0
        %1542 = vmatprep.subr.bf16.mxu0 0
        %1543 = vmatpush1.bf16.msra.mxu0 0
        %1544 = vmatprep.subr.bf16.mxu0 0
        %1545 = vmatpush1.bf16.msra.mxu0 0
        %1546 = vmatprep.mubr.bf16.mxu0 0
        %1547 = vmatmul.mubr.bf16.gmra.mrb[0].mxu0 %v1509
        %v1548 = vpop.f32.mrb[0].mxu0
        %v1549 = vadd.f32 0.0, %v1548
        %v1550 = vpop.f32.mrb[0].mxu0
        %v1551 = vpop.f32.mrb[0].mxu0
        %v1552 = vpop.f32.mrb[0].mxu0
        %1553 = vdwg.mxu0
        %1554 = vrot.lane.b32.xlu0 %v1301, 56
        %v1555 = vpop.permute.xlu0 %1554
        %v1557 = vsel %vm781, %v1503, 0
        %v1560 = vsel %vm1034, %v1555, 0
        %1562 = vmatprep.subr.bf16.mxu0 0
        %1563 = vmatpush1.bf16.msra.mxu0 %v1560
        %1564 = vmatprep.subr.bf16.mxu0 0
        %1565 = vmatpush1.bf16.msra.mxu0 0
        %1566 = vmatprep.subr.bf16.mxu0 0
        %1567 = vmatpush1.bf16.msra.mxu0 0
        %1568 = vmatprep.subr.bf16.mxu0 0
        %1569 = vmatpush1.bf16.msra.mxu0 0
        %1570 = vmatprep.subr.bf16.mxu0 0
        %1571 = vmatpush1.bf16.msra.mxu0 0
        %1572 = vmatprep.subr.bf16.mxu0 0
        %1573 = vmatpush1.bf16.msra.mxu0 0
        %1574 = vmatprep.subr.bf16.mxu0 0
        %1575 = vmatpush1.bf16.msra.mxu0 0
        %1576 = vmatprep.subr.bf16.mxu0 0
        %1577 = vmatpush1.bf16.msra.mxu0 0
        %1578 = vmatprep.subr.bf16.mxu0 0
        %1579 = vmatpush1.bf16.msra.mxu0 0
        %1580 = vmatprep.subr.bf16.mxu0 0
        %1581 = vmatpush1.bf16.msra.mxu0 0
        %1582 = vmatprep.subr.bf16.mxu0 0
        %1583 = vmatpush1.bf16.msra.mxu0 0
        %1584 = vmatprep.subr.bf16.mxu0 0
        %1585 = vmatpush1.bf16.msra.mxu0 0
        %1586 = vmatprep.subr.bf16.mxu0 0
        %1587 = vmatpush1.bf16.msra.mxu0 0
        %1588 = vmatprep.subr.bf16.mxu0 0
        %1589 = vmatpush1.bf16.msra.mxu0 0
        %1590 = vmatprep.subr.bf16.mxu0 0
        %1591 = vmatpush1.bf16.msra.mxu0 0
        %1592 = vmatprep.subr.bf16.mxu0 0
        %1593 = vmatpush1.bf16.msra.mxu0 0
        %1594 = vmatprep.mubr.bf16.mxu0 0
        %1595 = vmatmul.mubr.bf16.gmra.mrb[0].mxu0 %v1557
        %v1596 = vpop.f32.mrb[0].mxu0
        %v1597 = vadd.f32 0.0, %v1596
        %v1598 = vpop.f32.mrb[0].mxu0
        %v1599 = vpop.f32.mrb[0].mxu0
        %v1600 = vpop.f32.mrb[0].mxu0
        %1601 = vdwg.mxu0
        %1602 = vrot.lane.b32.xlu0 %v1353, 56
        %v1603 = vpop.permute.xlu0 %1602
        %v1605 = vsel %vm781, %v1504, 0
        %v1608 = vsel %vm1034, %v1603, 0
        %1610 = vmatprep.subr.bf16.mxu0 0
        %1611 = vmatpush1.bf16.msra.mxu0 %v1608
        %1612 = vmatprep.subr.bf16.mxu0 0
        %1613 = vmatpush1.bf16.msra.mxu0 0
        %1614 = vmatprep.subr.bf16.mxu0 0
        %1615 = vmatpush1.bf16.msra.mxu0 0
        %1616 = vmatprep.subr.bf16.mxu0 0
        %1617 = vmatpush1.bf16.msra.mxu0 0
        %1618 = vmatprep.subr.bf16.mxu0 0
        %1619 = vmatpush1.bf16.msra.mxu0 0
        %1620 = vmatprep.subr.bf16.mxu0 0
        %1621 = vmatpush1.bf16.msra.mxu0 0
        %1622 = vmatprep.subr.bf16.mxu0 0
        %1623 = vmatpush1.bf16.msra.mxu0 0
        %1624 = vmatprep.subr.bf16.mxu0 0
        %1625 = vmatpush1.bf16.msra.mxu0 0
        %1626 = vmatprep.subr.bf16.mxu0 0
        %1627 = vmatpush1.bf16.msra.mxu0 0
        %1628 = vmatprep.subr.bf16.mxu0 0
        %1629 = vmatpush1.bf16.msra.mxu0 0
        %1630 = vmatprep.subr.bf16.mxu0 0
        %1631 = vmatpush1.bf16.msra.mxu0 0
        %1632 = vmatprep.subr.bf16.mxu0 0
        %1633 = vmatpush1.bf16.msra.mxu0 0
        %1634 = vmatprep.subr.bf16.mxu0 0
        %1635 = vmatpush1.bf16.msra.mxu0 0
        %1636 = vmatprep.subr.bf16.mxu0 0
        %1637 = vmatpush1.bf16.msra.mxu0 0
        %1638 = vmatprep.subr.bf16.mxu0 0
        %1639 = vmatpush1.bf16.msra.mxu0 0
        %1640 = vmatprep.subr.bf16.mxu0 0
        %1641 = vmatpush1.bf16.msra.mxu0 0
        %1642 = vmatprep.mubr.bf16.mxu0 0
        %1643 = vmatmul.mubr.bf16.gmra.mrb[0].mxu0 %v1605
        %v1644 = vpop.f32.mrb[0].mxu0
        %v1645 = vadd.f32 0.0, %v1644
        %v1646 = vpop.f32.mrb[0].mxu0
        %v1647 = vpop.f32.mrb[0].mxu0
        %v1648 = vpop.f32.mrb[0].mxu0
        %1649 = vdwg.mxu0
        %1650 = vrot.lane.b32.xlu0 %v1405, 56
        %v1651 = vpop.permute.xlu0 %1650
        %v1653 = vsel %vm781, %v1505, 0
        %v1656 = vsel %vm1034, %v1651, 0
        %1658 = vmatprep.subr.bf16.mxu0 0
        %1659 = vmatpush1.bf16.msra.mxu0 %v1656
        %1660 = vmatprep.subr.bf16.mxu0 0
        %1661 = vmatpush1.bf16.msra.mxu0 0
        %1662 = vmatprep.subr.bf16.mxu0 0
        %1663 = vmatpush1.bf16.msra.mxu0 0
        %1664 = vmatprep.subr.bf16.mxu0 0
        %1665 = vmatpush1.bf16.msra.mxu0 0
        %1666 = vmatprep.subr.bf16.mxu0 0
        %1667 = vmatpush1.bf16.msra.mxu0 0
        %1668 = vmatprep.subr.bf16.mxu0 0
        %1669 = vmatpush1.bf16.msra.mxu0 0
        %1670 = vmatprep.subr.bf16.mxu0 0
        %1671 = vmatpush1.bf16.msra.mxu0 0
        %1672 = vmatprep.subr.bf16.mxu0 0
        %1673 = vmatpush1.bf16.msra.mxu0 0
        %1674 = vmatprep.subr.bf16.mxu0 0
        %1675 = vmatpush1.bf16.msra.mxu0 0
        %1676 = vmatprep.subr.bf16.mxu0 0
        %1677 = vmatpush1.bf16.msra.mxu0 0
        %1678 = vmatprep.subr.bf16.mxu0 0
        %1679 = vmatpush1.bf16.msra.mxu0 0
        %1680 = vmatprep.subr.bf16.mxu0 0
        %1681 = vmatpush1.bf16.msra.mxu0 0
        %1682 = vmatprep.subr.bf16.mxu0 0
        %1683 = vmatpush1.bf16.msra.mxu0 0
        %1684 = vmatprep.subr.bf16.mxu0 0
        %1685 = vmatpush1.bf16.msra.mxu0 0
        %1686 = vmatprep.subr.bf16.mxu0 0
        %1687 = vmatpush1.bf16.msra.mxu0 0
        %1688 = vmatprep.subr.bf16.mxu0 0
        %1689 = vmatpush1.bf16.msra.mxu0 0
        %1690 = vmatprep.mubr.bf16.mxu0 0
        %1691 = vmatmul.mubr.bf16.gmra.mrb[0].mxu0 %v1653
        %v1692 = vpop.f32.mrb[0].mxu0
        %v1693 = vadd.f32 0.0, %v1692
        %v1694 = vpop.f32.mrb[0].mxu0
        %v1695 = vpop.f32.mrb[0].mxu0
        %v1696 = vpop.f32.mrb[0].mxu0
        %1697 = vdwg.mxu0
        %v1698 = vld [vmem:[#allocation2] sm:$0xff]
        %v1699 = vld [vmem:[#allocation2 + $0x8] sm:$0xff]
        %v1700 = vld [vmem:[#allocation2 + $0x10] sm:$0xff]
        %v1701 = vld [vmem:[#allocation2 + $0x18] sm:$0xff]
        %v1702 = vmul.f32 %v1698, 0.35355338
        %v1703 = vmul.f32 %v1699, 0.35355338
        %v1704 = vmul.f32 %v1700, 0.35355338
        %v1705 = vmul.f32 %v1701, 0.35355338
        %v1706 = vpack.c.bf16 %v1703, %v1702
        %v1707 = vpack.c.bf16 %v1705, %v1704
        %v1710 = vunpack.c.l.b16 %v1706
        %v1711 = vunpack.c.h.b16 %v1706
        %v1712 = vunpack.c.l.b16 %v1707
        %v1713 = vunpack.c.h.b16 %v1707
        %v1714 = vpack.c.bf16 %v1699, %v1698
        %v1715 = vpack.c.bf16 %v1701, %v1700
        %v1718 = vunpack.c.l.b16 %v1714
        %v1719 = vunpack.c.h.b16 %v1714
        %v1720 = vunpack.c.l.b16 %v1715
        %v1721 = vunpack.c.h.b16 %v1715
        %v1722 = vpack.c.b16 %v1710, %v1710
        %1723 = vrot.lane.b32.xlu0 %v1722, 112
        %v1724 = vpop.permute.xlu0 %1723
        %v1725 = vpack.c.b16 %v1718, %v1718
        %1726 = vrot.lane.b32.xlu0 %v1725, 80
        %v1727 = vpop.permute.xlu0 %1726
        %v1729 = vsel %vm781, %v1724, 0
        %v1732 = vsel %vm781, %v1727, 0
        %1734 = vmatprep.subr.bf16.mxu0 0
        %1735 = vmatpush1.bf16.xpose.msra.mxu0 %v1732
        %1736 = vmatprep.subr.bf16.mxu0 0
        %1737 = vmatpush1.bf16.xpose.msra.mxu0 0
        %1738 = vmatprep.subr.bf16.mxu0 0
        %1739 = vmatpush1.bf16.xpose.msra.mxu0 0
        %1740 = vmatprep.subr.bf16.mxu0 0
        %1741 = vmatpush1.bf16.xpose.msra.mxu0 0
        %1742 = vmatprep.subr.bf16.mxu0 0
        %1743 = vmatpush1.bf16.xpose.msra.mxu0 0
        %1744 = vmatprep.subr.bf16.mxu0 0
        %1745 = vmatpush1.bf16.xpose.msra.mxu0 0
        %1746 = vmatprep.subr.bf16.mxu0 0
        %1747 = vmatpush1.bf16.xpose.msra.mxu0 0
        %1748 = vmatprep.subr.bf16.mxu0 0
        %1749 = vmatpush1.bf16.xpose.msra.mxu0 0
        %1750 = vmatprep.subr.bf16.mxu0 0
        %1751 = vmatpush1.bf16.xpose.msra.mxu0 0
        %1752 = vmatprep.subr.bf16.mxu0 0
        %1753 = vmatpush1.bf16.xpose.msra.mxu0 0
        %1754 = vmatprep.subr.bf16.mxu0 0
        %1755 = vmatpush1.bf16.xpose.msra.mxu0 0
        %1756 = vmatprep.subr.bf16.mxu0 0
        %1757 = vmatpush1.bf16.xpose.msra.mxu0 0
        %1758 = vmatprep.subr.bf16.mxu0 0
        %1759 = vmatpush1.bf16.xpose.msra.mxu0 0
        %1760 = vmatprep.subr.bf16.mxu0 0
        %1761 = vmatpush1.bf16.xpose.msra.mxu0 0
        %1762 = vmatprep.subr.bf16.mxu0 0
        %1763 = vmatpush1.bf16.xpose.msra.mxu0 0
        %1764 = vmatprep.subr.bf16.mxu0 0
        %1765 = vmatpush1.bf16.xpose.msra.mxu0 0
        %1766 = vmatprep.mubr.bf16.mxu0 0
        %1767 = vmatmul.mubr.bf16.gmra.mrb[0].mxu0 %v1729
        %v1768 = vpop.f32.mrb[0].mxu0
        %v1769 = vadd.f32 0.0, %v1768
        %v1770 = vpop.f32.mrb[0].mxu0
        %v1771 = vpop.f32.mrb[0].mxu0
        %v1772 = vpop.f32.mrb[0].mxu0
        %1773 = vdwg.mxu0
        %v1774 = vpack.c.b16 %v1711, %v1711
        %1775 = vrot.lane.b32.xlu0 %v1774, 112
        %v1776 = vpop.permute.xlu0 %1775
        %v1777 = vpack.c.b16 %v1719, %v1719
        %1778 = vrot.lane.b32.xlu0 %v1777, 80
        %v1779 = vpop.permute.xlu0 %1778
        %v1781 = vsel %vm781, %v1776, 0
        %v1784 = vsel %vm781, %v1779, 0
        %1786 = vmatprep.subr.bf16.mxu0 0
        %1787 = vmatpush1.bf16.xpose.msra.mxu0 %v1784
        %1788 = vmatprep.subr.bf16.mxu0 0
        %1789 = vmatpush1.bf16.xpose.msra.mxu0 0
        %1790 = vmatprep.subr.bf16.mxu0 0
        %1791 = vmatpush1.bf16.xpose.msra.mxu0 0
        %1792 = vmatprep.subr.bf16.mxu0 0
        %1793 = vmatpush1.bf16.xpose.msra.mxu0 0
        %1794 = vmatprep.subr.bf16.mxu0 0
        %1795 = vmatpush1.bf16.xpose.msra.mxu0 0
        %1796 = vmatprep.subr.bf16.mxu0 0
        %1797 = vmatpush1.bf16.xpose.msra.mxu0 0
        %1798 = vmatprep.subr.bf16.mxu0 0
        %1799 = vmatpush1.bf16.xpose.msra.mxu0 0
        %1800 = vmatprep.subr.bf16.mxu0 0
        %1801 = vmatpush1.bf16.xpose.msra.mxu0 0
        %1802 = vmatprep.subr.bf16.mxu0 0
        %1803 = vmatpush1.bf16.xpose.msra.mxu0 0
        %1804 = vmatprep.subr.bf16.mxu0 0
        %1805 = vmatpush1.bf16.xpose.msra.mxu0 0
        %1806 = vmatprep.subr.bf16.mxu0 0
        %1807 = vmatpush1.bf16.xpose.msra.mxu0 0
        %1808 = vmatprep.subr.bf16.mxu0 0
        %1809 = vmatpush1.bf16.xpose.msra.mxu0 0
        %1810 = vmatprep.subr.bf16.mxu0 0
        %1811 = vmatpush1.bf16.xpose.msra.mxu0 0
        %1812 = vmatprep.subr.bf16.mxu0 0
        %1813 = vmatpush1.bf16.xpose.msra.mxu0 0
        %1814 = vmatprep.subr.bf16.mxu0 0
        %1815 = vmatpush1.bf16.xpose.msra.mxu0 0
        %1816 = vmatprep.subr.bf16.mxu0 0
        %1817 = vmatpush1.bf16.xpose.msra.mxu0 0
        %1818 = vmatprep.mubr.bf16.mxu0 0
        %1819 = vmatmul.mubr.bf16.gmra.mrb[0].mxu0 %v1781
        %v1820 = vpop.f32.mrb[0].mxu0
        %v1821 = vadd.f32 0.0, %v1820
        %v1822 = vpop.f32.mrb[0].mxu0
        %v1823 = vpop.f32.mrb[0].mxu0
        %v1824 = vpop.f32.mrb[0].mxu0
        %1825 = vdwg.mxu0
        %v1826 = vpack.c.b16 %v1712, %v1712
        %1827 = vrot.lane.b32.xlu0 %v1826, 112
        %v1828 = vpop.permute.xlu0 %1827
        %v1829 = vpack.c.b16 %v1720, %v1720
        %1830 = vrot.lane.b32.xlu0 %v1829, 80
        %v1831 = vpop.permute.xlu0 %1830
        %v1833 = vsel %vm781, %v1828, 0
        %v1836 = vsel %vm781, %v1831, 0
        %1838 = vmatprep.subr.bf16.mxu0 0
        %1839 = vmatpush1.bf16.xpose.msra.mxu0 %v1836
        %1840 = vmatprep.subr.bf16.mxu0 0
        %1841 = vmatpush1.bf16.xpose.msra.mxu0 0
        %1842 = vmatprep.subr.bf16.mxu0 0
        %1843 = vmatpush1.bf16.xpose.msra.mxu0 0
        %1844 = vmatprep.subr.bf16.mxu0 0
        %1845 = vmatpush1.bf16.xpose.msra.mxu0 0
        %1846 = vmatprep.subr.bf16.mxu0 0
        %1847 = vmatpush1.bf16.xpose.msra.mxu0 0
        %1848 = vmatprep.subr.bf16.mxu0 0
        %1849 = vmatpush1.bf16.xpose.msra.mxu0 0
        %1850 = vmatprep.subr.bf16.mxu0 0
        %1851 = vmatpush1.bf16.xpose.msra.mxu0 0
        %1852 = vmatprep.subr.bf16.mxu0 0
        %1853 = vmatpush1.bf16.xpose.msra.mxu0 0
        %1854 = vmatprep.subr.bf16.mxu0 0
        %1855 = vmatpush1.bf16.xpose.msra.mxu0 0
        %1856 = vmatprep.subr.bf16.mxu0 0
        %1857 = vmatpush1.bf16.xpose.msra.mxu0 0
        %1858 = vmatprep.subr.bf16.mxu0 0
        %1859 = vmatpush1.bf16.xpose.msra.mxu0 0
        %1860 = vmatprep.subr.bf16.mxu0 0
        %1861 = vmatpush1.bf16.xpose.msra.mxu0 0
        %1862 = vmatprep.subr.bf16.mxu0 0
        %1863 = vmatpush1.bf16.xpose.msra.mxu0 0
        %1864 = vmatprep.subr.bf16.mxu0 0
        %1865 = vmatpush1.bf16.xpose.msra.mxu0 0
        %1866 = vmatprep.subr.bf16.mxu0 0
        %1867 = vmatpush1.bf16.xpose.msra.mxu0 0
        %1868 = vmatprep.subr.bf16.mxu0 0
        %1869 = vmatpush1.bf16.xpose.msra.mxu0 0
        %1870 = vmatprep.mubr.bf16.mxu0 0
        %1871 = vmatmul.mubr.bf16.gmra.mrb[0].mxu0 %v1833
        %v1872 = vpop.f32.mrb[0].mxu0
        %v1873 = vadd.f32 0.0, %v1872
        %v1874 = vpop.f32.mrb[0].mxu0
        %v1875 = vpop.f32.mrb[0].mxu0
        %v1876 = vpop.f32.mrb[0].mxu0
        %1877 = vdwg.mxu0
        %v1878 = vpack.c.b16 %v1713, %v1713
        %1879 = vrot.lane.b32.xlu0 %v1878, 112
        %v1880 = vpop.permute.xlu0 %1879
        %v1881 = vpack.c.b16 %v1721, %v1721
        %1882 = vrot.lane.b32.xlu0 %v1881, 80
        %v1883 = vpop.permute.xlu0 %1882
        %v1885 = vsel %vm781, %v1880, 0
        %v1888 = vsel %vm781, %v1883, 0
        %1890 = vmatprep.subr.bf16.mxu0 0
        %1891 = vmatpush1.bf16.xpose.msra.mxu0 %v1888
        %1892 = vmatprep.subr.bf16.mxu0 0
        %1893 = vmatpush1.bf16.xpose.msra.mxu0 0
        %1894 = vmatprep.subr.bf16.mxu0 0
        %1895 = vmatpush1.bf16.xpose.msra.mxu0 0
        %1896 = vmatprep.subr.bf16.mxu0 0
        %1897 = vmatpush1.bf16.xpose.msra.mxu0 0
        %1898 = vmatprep.subr.bf16.mxu0 0
        %1899 = vmatpush1.bf16.xpose.msra.mxu0 0
        %1900 = vmatprep.subr.bf16.mxu0 0
        %1901 = vmatpush1.bf16.xpose.msra.mxu0 0
        %1902 = vmatprep.subr.bf16.mxu0 0
        %1903 = vmatpush1.bf16.xpose.msra.mxu0 0
        %1904 = vmatprep.subr.bf16.mxu0 0
        %1905 = vmatpush1.bf16.xpose.msra.mxu0 0
        %1906 = vmatprep.subr.bf16.mxu0 0
        %1907 = vmatpush1.bf16.xpose.msra.mxu0 0
        %1908 = vmatprep.subr.bf16.mxu0 0
        %1909 = vmatpush1.bf16.xpose.msra.mxu0 0
        %1910 = vmatprep.subr.bf16.mxu0 0
        %1911 = vmatpush1.bf16.xpose.msra.mxu0 0
        %1912 = vmatprep.subr.bf16.mxu0 0
        %1913 = vmatpush1.bf16.xpose.msra.mxu0 0
        %1914 = vmatprep.subr.bf16.mxu0 0
        %1915 = vmatpush1.bf16.xpose.msra.mxu0 0
        %1916 = vmatprep.subr.bf16.mxu0 0
        %1917 = vmatpush1.bf16.xpose.msra.mxu0 0
        %1918 = vmatprep.subr.bf16.mxu0 0
        %1919 = vmatpush1.bf16.xpose.msra.mxu0 0
        %1920 = vmatprep.subr.bf16.mxu0 0
        %1921 = vmatpush1.bf16.xpose.msra.mxu0 0
        %1922 = vmatprep.mubr.bf16.mxu0 0
        %1923 = vmatmul.mubr.bf16.gmra.mrb[0].mxu0 %v1885
        %v1924 = vpop.f32.mrb[0].mxu0
        %v1925 = vadd.f32 0.0, %v1924
        %v1926 = vpop.f32.mrb[0].mxu0
        %v1927 = vpop.f32.mrb[0].mxu0
        %v1928 = vpop.f32.mrb[0].mxu0
        %1929 = vdwg.mxu0
        %v1930 = vsel %vm976, %v1769, -10000.0
        %v1931 = vsel %vm976, %v1821, -10000.0
        %v1932 = vsel %vm976, %v1873, -10000.0
        %v1933 = vsel %vm976, %v1925, -10000.0
        %v1934 = vsel %vm781, %v1930, -inf
        %1935 = vmax.xlane.f32.xlu0 %v1934
        %v1936 = vpop.xlane.xlu0 %1935
        %v1937 = vsel %vm781, %v1931, -inf
        %1938 = vmax.xlane.f32.xlu0 %v1937
        %v1939 = vpop.xlane.xlu0 %1938
        %v1940 = vsel %vm781, %v1932, -inf
        %1941 = vmax.xlane.f32.xlu0 %v1940
        %v1942 = vpop.xlane.xlu0 %1941
        %v1943 = vsel %vm781, %v1933, -inf
        %1944 = vmax.xlane.f32.xlu0 %v1943
        %v1945 = vpop.xlane.xlu0 %1944
        %v1946 = vsub.f32 %v1930, %v1936
        %v1947 = vsub.f32 %v1931, %v1939
        %v1948 = vsub.f32 %v1932, %v1942
        %v1949 = vsub.f32 %v1933, %v1945
        %v1950 = vmul.f32 %v1946, 1.442695
        %v1951 = vpow.pop %v1950
        %v1952 = vmul.f32 %v1947, 1.442695
        %v1953 = vpow.pop %v1952
        %v1954 = vmul.f32 %v1948, 1.442695
        %v1955 = vpow.pop %v1954
        %v1956 = vmul.f32 %v1949, 1.442695
        %v1957 = vpow.pop %v1956
        %v1958 = vsel %vm781, %v1951, 0.0
        %1959 = vadd.xlane.f32.xlu0 %v1958
        %v1960 = vpop.xlane.xlu0 %1959
        %v1961 = vsel %vm781, %v1953, 0.0
        %1962 = vadd.xlane.f32.xlu0 %v1961
        %v1963 = vpop.xlane.xlu0 %1962
        %v1964 = vsel %vm781, %v1955, 0.0
        %1965 = vadd.xlane.f32.xlu0 %v1964
        %v1966 = vpop.xlane.xlu0 %1965
        %v1967 = vsel %vm781, %v1957, 0.0
        %1968 = vadd.xlane.f32.xlu0 %v1967
        %v1969 = vpop.xlane.xlu0 %1968
        %v1970 = vrcp.pop %v1960
        %v1971 = vrcp.pop %v1963
        %v1972 = vrcp.pop %v1966
        %v1973 = vrcp.pop %v1969
        %v1974 = vmul.f32 %v1951, %v1970
        %v1975 = vmul.f32 %v1953, %v1971
        %v1976 = vmul.f32 %v1955, %v1972
        %v1977 = vmul.f32 %v1957, %v1973
        %v1978 = vpack.c.bf16 %v1974, %v1974
        %v1979 = vpack.c.bf16 %v1975, %v1975
        %v1980 = vpack.c.bf16 %v1976, %v1976
        %v1981 = vpack.c.bf16 %v1977, %v1977
        %1982 = vrot.lane.b32.xlu0 %v1725, 48
        %v1983 = vpop.permute.xlu0 %1982
        %v1985 = vsel %vm781, %v1978, 0
        %v1988 = vsel %vm1034, %v1983, 0
        %1990 = vmatprep.subr.bf16.mxu0 0
        %1991 = vmatpush1.bf16.msra.mxu0 %v1988
        %1992 = vmatprep.subr.bf16.mxu0 0
        %1993 = vmatpush1.bf16.msra.mxu0 0
        %1994 = vmatprep.subr.bf16.mxu0 0
        %1995 = vmatpush1.bf16.msra.mxu0 0
        %1996 = vmatprep.subr.bf16.mxu0 0
        %1997 = vmatpush1.bf16.msra.mxu0 0
        %1998 = vmatprep.subr.bf16.mxu0 0
        %1999 = vmatpush1.bf16.msra.mxu0 0
        %2000 = vmatprep.subr.bf16.mxu0 0
        %2001 = vmatpush1.bf16.msra.mxu0 0
        %2002 = vmatprep.subr.bf16.mxu0 0
        %2003 = vmatpush1.bf16.msra.mxu0 0
        %2004 = vmatprep.subr.bf16.mxu0 0
        %2005 = vmatpush1.bf16.msra.mxu0 0
        %2006 = vmatprep.subr.bf16.mxu0 0
        %2007 = vmatpush1.bf16.msra.mxu0 0
        %2008 = vmatprep.subr.bf16.mxu0 0
        %2009 = vmatpush1.bf16.msra.mxu0 0
        %2010 = vmatprep.subr.bf16.mxu0 0
        %2011 = vmatpush1.bf16.msra.mxu0 0
        %2012 = vmatprep.subr.bf16.mxu0 0
        %2013 = vmatpush1.bf16.msra.mxu0 0
        %2014 = vmatprep.subr.bf16.mxu0 0
        %2015 = vmatpush1.bf16.msra.mxu0 0
        %2016 = vmatprep.subr.bf16.mxu0 0
        %2017 = vmatpush1.bf16.msra.mxu0 0
        %2018 = vmatprep.subr.bf16.mxu0 0
        %2019 = vmatpush1.bf16.msra.mxu0 0
        %2020 = vmatprep.subr.bf16.mxu0 0
        %2021 = vmatpush1.bf16.msra.mxu0 0
        %2022 = vmatprep.mubr.bf16.mxu0 0
        %2023 = vmatmul.mubr.bf16.gmra.mrb[0].mxu0 %v1985
        %v2024 = vpop.f32.mrb[0].mxu0
        %v2025 = vadd.f32 0.0, %v2024
        %v2026 = vpop.f32.mrb[0].mxu0
        %v2027 = vpop.f32.mrb[0].mxu0
        %v2028 = vpop.f32.mrb[0].mxu0
        %2029 = vdwg.mxu0
        %2030 = vrot.lane.b32.xlu0 %v1777, 48
        %v2031 = vpop.permute.xlu0 %2030
        %v2033 = vsel %vm781, %v1979, 0
        %v2036 = vsel %vm1034, %v2031, 0
        %2038 = vmatprep.subr.bf16.mxu0 0
        %2039 = vmatpush1.bf16.msra.mxu0 %v2036
        %2040 = vmatprep.subr.bf16.mxu0 0
        %2041 = vmatpush1.bf16.msra.mxu0 0
        %2042 = vmatprep.subr.bf16.mxu0 0
        %2043 = vmatpush1.bf16.msra.mxu0 0
        %2044 = vmatprep.subr.bf16.mxu0 0
        %2045 = vmatpush1.bf16.msra.mxu0 0
        %2046 = vmatprep.subr.bf16.mxu0 0
        %2047 = vmatpush1.bf16.msra.mxu0 0
        %2048 = vmatprep.subr.bf16.mxu0 0
        %2049 = vmatpush1.bf16.msra.mxu0 0
        %2050 = vmatprep.subr.bf16.mxu0 0
        %2051 = vmatpush1.bf16.msra.mxu0 0
        %2052 = vmatprep.subr.bf16.mxu0 0
        %2053 = vmatpush1.bf16.msra.mxu0 0
        %2054 = vmatprep.subr.bf16.mxu0 0
        %2055 = vmatpush1.bf16.msra.mxu0 0
        %2056 = vmatprep.subr.bf16.mxu0 0
        %2057 = vmatpush1.bf16.msra.mxu0 0
        %2058 = vmatprep.subr.bf16.mxu0 0
        %2059 = vmatpush1.bf16.msra.mxu0 0
        %2060 = vmatprep.subr.bf16.mxu0 0
        %2061 = vmatpush1.bf16.msra.mxu0 0
        %2062 = vmatprep.subr.bf16.mxu0 0
        %2063 = vmatpush1.bf16.msra.mxu0 0
        %2064 = vmatprep.subr.bf16.mxu0 0
        %2065 = vmatpush1.bf16.msra.mxu0 0
        %2066 = vmatprep.subr.bf16.mxu0 0
        %2067 = vmatpush1.bf16.msra.mxu0 0
        %2068 = vmatprep.subr.bf16.mxu0 0
        %2069 = vmatpush1.bf16.msra.mxu0 0
        %2070 = vmatprep.mubr.bf16.mxu0 0
        %2071 = vmatmul.mubr.bf16.gmra.mrb[0].mxu0 %v2033
        %v2072 = vpop.f32.mrb[0].mxu0
        %v2073 = vadd.f32 0.0, %v2072
        %v2074 = vpop.f32.mrb[0].mxu0
        %v2075 = vpop.f32.mrb[0].mxu0
        %v2076 = vpop.f32.mrb[0].mxu0
        %2077 = vdwg.mxu0
        %2078 = vrot.lane.b32.xlu0 %v1829, 48
        %v2079 = vpop.permute.xlu0 %2078
        %v2081 = vsel %vm781, %v1980, 0
        %v2084 = vsel %vm1034, %v2079, 0
        %2086 = vmatprep.subr.bf16.mxu0 0
        %2087 = vmatpush1.bf16.msra.mxu0 %v2084
        %2088 = vmatprep.subr.bf16.mxu0 0
        %2089 = vmatpush1.bf16.msra.mxu0 0
        %2090 = vmatprep.subr.bf16.mxu0 0
        %2091 = vmatpush1.bf16.msra.mxu0 0
        %2092 = vmatprep.subr.bf16.mxu0 0
        %2093 = vmatpush1.bf16.msra.mxu0 0
        %2094 = vmatprep.subr.bf16.mxu0 0
        %2095 = vmatpush1.bf16.msra.mxu0 0
        %2096 = vmatprep.subr.bf16.mxu0 0
        %2097 = vmatpush1.bf16.msra.mxu0 0
        %2098 = vmatprep.subr.bf16.mxu0 0
        %2099 = vmatpush1.bf16.msra.mxu0 0
        %2100 = vmatprep.subr.bf16.mxu0 0
        %2101 = vmatpush1.bf16.msra.mxu0 0
        %2102 = vmatprep.subr.bf16.mxu0 0
        %2103 = vmatpush1.bf16.msra.mxu0 0
        %2104 = vmatprep.subr.bf16.mxu0 0
        %2105 = vmatpush1.bf16.msra.mxu0 0
        %2106 = vmatprep.subr.bf16.mxu0 0
        %2107 = vmatpush1.bf16.msra.mxu0 0
        %2108 = vmatprep.subr.bf16.mxu0 0
        %2109 = vmatpush1.bf16.msra.mxu0 0
        %2110 = vmatprep.subr.bf16.mxu0 0
        %2111 = vmatpush1.bf16.msra.mxu0 0
        %2112 = vmatprep.subr.bf16.mxu0 0
        %2113 = vmatpush1.bf16.msra.mxu0 0
        %2114 = vmatprep.subr.bf16.mxu0 0
        %2115 = vmatpush1.bf16.msra.mxu0 0
        %2116 = vmatprep.subr.bf16.mxu0 0
        %2117 = vmatpush1.bf16.msra.mxu0 0
        %2118 = vmatprep.mubr.bf16.mxu0 0
        %2119 = vmatmul.mubr.bf16.gmra.mrb[0].mxu0 %v2081
        %v2120 = vpop.f32.mrb[0].mxu0
        %v2121 = vadd.f32 0.0, %v2120
        %v2122 = vpop.f32.mrb[0].mxu0
        %v2123 = vpop.f32.mrb[0].mxu0
        %v2124 = vpop.f32.mrb[0].mxu0
        %2125 = vdwg.mxu0
        %2126 = vrot.lane.b32.xlu0 %v1881, 48
        %v2127 = vpop.permute.xlu0 %2126
        %v2129 = vsel %vm781, %v1981, 0
        %v2132 = vsel %vm1034, %v2127, 0
        %2134 = vmatprep.subr.bf16.mxu0 0
        %2135 = vmatpush1.bf16.msra.mxu0 %v2132
        %2136 = vmatprep.subr.bf16.mxu0 0
        %2137 = vmatpush1.bf16.msra.mxu0 0
        %2138 = vmatprep.subr.bf16.mxu0 0
        %2139 = vmatpush1.bf16.msra.mxu0 0
        %2140 = vmatprep.subr.bf16.mxu0 0
        %2141 = vmatpush1.bf16.msra.mxu0 0
        %2142 = vmatprep.subr.bf16.mxu0 0
        %2143 = vmatpush1.bf16.msra.mxu0 0
        %2144 = vmatprep.subr.bf16.mxu0 0
        %2145 = vmatpush1.bf16.msra.mxu0 0
        %2146 = vmatprep.subr.bf16.mxu0 0
        %2147 = vmatpush1.bf16.msra.mxu0 0
        %2148 = vmatprep.subr.bf16.mxu0 0
        %2149 = vmatpush1.bf16.msra.mxu0 0
        %2150 = vmatprep.subr.bf16.mxu0 0
        %2151 = vmatpush1.bf16.msra.mxu0 0
        %2152 = vmatprep.subr.bf16.mxu0 0
        %2153 = vmatpush1.bf16.msra.mxu0 0
        %2154 = vmatprep.subr.bf16.mxu0 0
        %2155 = vmatpush1.bf16.msra.mxu0 0
        %2156 = vmatprep.subr.bf16.mxu0 0
        %2157 = vmatpush1.bf16.msra.mxu0 0
        %2158 = vmatprep.subr.bf16.mxu0 0
        %2159 = vmatpush1.bf16.msra.mxu0 0
        %2160 = vmatprep.subr.bf16.mxu0 0
        %2161 = vmatpush1.bf16.msra.mxu0 0
        %2162 = vmatprep.subr.bf16.mxu0 0
        %2163 = vmatpush1.bf16.msra.mxu0 0
        %2164 = vmatprep.subr.bf16.mxu0 0
        %2165 = vmatpush1.bf16.msra.mxu0 0
        %2166 = vmatprep.mubr.bf16.mxu0 0
        %2167 = vmatmul.mubr.bf16.gmra.mrb[0].mxu0 %v2129
        %v2168 = vpop.f32.mrb[0].mxu0
        %v2169 = vadd.f32 0.0, %v2168
        %v2170 = vpop.f32.mrb[0].mxu0
        %v2171 = vpop.f32.mrb[0].mxu0
        %v2172 = vpop.f32.mrb[0].mxu0
        %2173 = vdwg.mxu0
        %v2174 = vld [vmem:[#allocation2] sm:$0xff]
        %v2175 = vld [vmem:[#allocation2 + $0x8] sm:$0xff]
        %v2176 = vld [vmem:[#allocation2 + $0x10] sm:$0xff]
        %v2177 = vld [vmem:[#allocation2 + $0x18] sm:$0xff]
        %v2178 = vmul.f32 %v2174, 0.35355338
        %v2179 = vmul.f32 %v2175, 0.35355338
        %v2180 = vmul.f32 %v2176, 0.35355338
        %v2181 = vmul.f32 %v2177, 0.35355338
        %v2182 = vpack.c.bf16 %v2179, %v2178
        %v2183 = vpack.c.bf16 %v2181, %v2180
        %v2186 = vunpack.c.l.b16 %v2182
        %v2187 = vunpack.c.h.b16 %v2182
        %v2188 = vunpack.c.l.b16 %v2183
        %v2189 = vunpack.c.h.b16 %v2183
        %v2190 = vpack.c.bf16 %v2175, %v2174
        %v2191 = vpack.c.bf16 %v2177, %v2176
        %v2194 = vunpack.c.l.b16 %v2190
        %v2195 = vunpack.c.h.b16 %v2190
        %v2196 = vunpack.c.l.b16 %v2191
        %v2197 = vunpack.c.h.b16 %v2191
        %v2198 = vpack.c.b16 %v2186, %v2186
        %2199 = vrot.lane.b32.xlu0 %v2198, 104
        %v2200 = vpop.permute.xlu0 %2199
        %v2201 = vpack.c.b16 %v2194, %v2194
        %2202 = vrot.lane.b32.xlu0 %v2201, 72
        %v2203 = vpop.permute.xlu0 %2202
        %v2205 = vsel %vm781, %v2200, 0
        %v2208 = vsel %vm781, %v2203, 0
        %2210 = vmatprep.subr.bf16.mxu0 0
        %2211 = vmatpush1.bf16.xpose.msra.mxu0 %v2208
        %2212 = vmatprep.subr.bf16.mxu0 0
        %2213 = vmatpush1.bf16.xpose.msra.mxu0 0
        %2214 = vmatprep.subr.bf16.mxu0 0
        %2215 = vmatpush1.bf16.xpose.msra.mxu0 0
        %2216 = vmatprep.subr.bf16.mxu0 0
        %2217 = vmatpush1.bf16.xpose.msra.mxu0 0
        %2218 = vmatprep.subr.bf16.mxu0 0
        %2219 = vmatpush1.bf16.xpose.msra.mxu0 0
        %2220 = vmatprep.subr.bf16.mxu0 0
        %2221 = vmatpush1.bf16.xpose.msra.mxu0 0
        %2222 = vmatprep.subr.bf16.mxu0 0
        %2223 = vmatpush1.bf16.xpose.msra.mxu0 0
        %2224 = vmatprep.subr.bf16.mxu0 0
        %2225 = vmatpush1.bf16.xpose.msra.mxu0 0
        %2226 = vmatprep.subr.bf16.mxu0 0
        %2227 = vmatpush1.bf16.xpose.msra.mxu0 0
        %2228 = vmatprep.subr.bf16.mxu0 0
        %2229 = vmatpush1.bf16.xpose.msra.mxu0 0
        %2230 = vmatprep.subr.bf16.mxu0 0
        %2231 = vmatpush1.bf16.xpose.msra.mxu0 0
        %2232 = vmatprep.subr.bf16.mxu0 0
        %2233 = vmatpush1.bf16.xpose.msra.mxu0 0
        %2234 = vmatprep.subr.bf16.mxu0 0
        %2235 = vmatpush1.bf16.xpose.msra.mxu0 0
        %2236 = vmatprep.subr.bf16.mxu0 0
        %2237 = vmatpush1.bf16.xpose.msra.mxu0 0
        %2238 = vmatprep.subr.bf16.mxu0 0
        %2239 = vmatpush1.bf16.xpose.msra.mxu0 0
        %2240 = vmatprep.subr.bf16.mxu0 0
        %2241 = vmatpush1.bf16.xpose.msra.mxu0 0
        %2242 = vmatprep.mubr.bf16.mxu0 0
        %2243 = vmatmul.mubr.bf16.gmra.mrb[0].mxu0 %v2205
        %v2244 = vpop.f32.mrb[0].mxu0
        %v2245 = vadd.f32 0.0, %v2244
        %v2246 = vpop.f32.mrb[0].mxu0
        %v2247 = vpop.f32.mrb[0].mxu0
        %v2248 = vpop.f32.mrb[0].mxu0
        %2249 = vdwg.mxu0
        %v2250 = vpack.c.b16 %v2187, %v2187
        %2251 = vrot.lane.b32.xlu0 %v2250, 104
        %v2252 = vpop.permute.xlu0 %2251
        %v2253 = vpack.c.b16 %v2195, %v2195
        %2254 = vrot.lane.b32.xlu0 %v2253, 72
        %v2255 = vpop.permute.xlu0 %2254
        %v2257 = vsel %vm781, %v2252, 0
        %v2260 = vsel %vm781, %v2255, 0
        %2262 = vmatprep.subr.bf16.mxu0 0
        %2263 = vmatpush1.bf16.xpose.msra.mxu0 %v2260
        %2264 = vmatprep.subr.bf16.mxu0 0
        %2265 = vmatpush1.bf16.xpose.msra.mxu0 0
        %2266 = vmatprep.subr.bf16.mxu0 0
        %2267 = vmatpush1.bf16.xpose.msra.mxu0 0
        %2268 = vmatprep.subr.bf16.mxu0 0
        %2269 = vmatpush1.bf16.xpose.msra.mxu0 0
        %2270 = vmatprep.subr.bf16.mxu0 0
        %2271 = vmatpush1.bf16.xpose.msra.mxu0 0
        %2272 = vmatprep.subr.bf16.mxu0 0
        %2273 = vmatpush1.bf16.xpose.msra.mxu0 0
        %2274 = vmatprep.subr.bf16.mxu0 0
        %2275 = vmatpush1.bf16.xpose.msra.mxu0 0
        %2276 = vmatprep.subr.bf16.mxu0 0
        %2277 = vmatpush1.bf16.xpose.msra.mxu0 0
        %2278 = vmatprep.subr.bf16.mxu0 0
        %2279 = vmatpush1.bf16.xpose.msra.mxu0 0
        %2280 = vmatprep.subr.bf16.mxu0 0
        %2281 = vmatpush1.bf16.xpose.msra.mxu0 0
        %2282 = vmatprep.subr.bf16.mxu0 0
        %2283 = vmatpush1.bf16.xpose.msra.mxu0 0
        %2284 = vmatprep.subr.bf16.mxu0 0
        %2285 = vmatpush1.bf16.xpose.msra.mxu0 0
        %2286 = vmatprep.subr.bf16.mxu0 0
        %2287 = vmatpush1.bf16.xpose.msra.mxu0 0
        %2288 = vmatprep.subr.bf16.mxu0 0
        %2289 = vmatpush1.bf16.xpose.msra.mxu0 0
        %2290 = vmatprep.subr.bf16.mxu0 0
        %2291 = vmatpush1.bf16.xpose.msra.mxu0 0
        %2292 = vmatprep.subr.bf16.mxu0 0
        %2293 = vmatpush1.bf16.xpose.msra.mxu0 0
        %2294 = vmatprep.mubr.bf16.mxu0 0
        %2295 = vmatmul.mubr.bf16.gmra.mrb[0].mxu0 %v2257
        %v2296 = vpop.f32.mrb[0].mxu0
        %v2297 = vadd.f32 0.0, %v2296
        %v2298 = vpop.f32.mrb[0].mxu0
        %v2299 = vpop.f32.mrb[0].mxu0
        %v2300 = vpop.f32.mrb[0].mxu0
        %2301 = vdwg.mxu0
        %v2302 = vpack.c.b16 %v2188, %v2188
        %2303 = vrot.lane.b32.xlu0 %v2302, 104
        %v2304 = vpop.permute.xlu0 %2303
        %v2305 = vpack.c.b16 %v2196, %v2196
        %2306 = vrot.lane.b32.xlu0 %v2305, 72
        %v2307 = vpop.permute.xlu0 %2306
        %v2309 = vsel %vm781, %v2304, 0
        %v2312 = vsel %vm781, %v2307, 0
        %2314 = vmatprep.subr.bf16.mxu0 0
        %2315 = vmatpush1.bf16.xpose.msra.mxu0 %v2312
        %2316 = vmatprep.subr.bf16.mxu0 0
        %2317 = vmatpush1.bf16.xpose.msra.mxu0 0
        %2318 = vmatprep.subr.bf16.mxu0 0
        %2319 = vmatpush1.bf16.xpose.msra.mxu0 0
        %2320 = vmatprep.subr.bf16.mxu0 0
        %2321 = vmatpush1.bf16.xpose.msra.mxu0 0
        %2322 = vmatprep.subr.bf16.mxu0 0
        %2323 = vmatpush1.bf16.xpose.msra.mxu0 0
        %2324 = vmatprep.subr.bf16.mxu0 0
        %2325 = vmatpush1.bf16.xpose.msra.mxu0 0
        %2326 = vmatprep.subr.bf16.mxu0 0
        %2327 = vmatpush1.bf16.xpose.msra.mxu0 0
        %2328 = vmatprep.subr.bf16.mxu0 0
        %2329 = vmatpush1.bf16.xpose.msra.mxu0 0
        %2330 = vmatprep.subr.bf16.mxu0 0
        %2331 = vmatpush1.bf16.xpose.msra.mxu0 0
        %2332 = vmatprep.subr.bf16.mxu0 0
        %2333 = vmatpush1.bf16.xpose.msra.mxu0 0
        %2334 = vmatprep.subr.bf16.mxu0 0
        %2335 = vmatpush1.bf16.xpose.msra.mxu0 0
        %2336 = vmatprep.subr.bf16.mxu0 0
        %2337 = vmatpush1.bf16.xpose.msra.mxu0 0
        %2338 = vmatprep.subr.bf16.mxu0 0
        %2339 = vmatpush1.bf16.xpose.msra.mxu0 0
        %2340 = vmatprep.subr.bf16.mxu0 0
        %2341 = vmatpush1.bf16.xpose.msra.mxu0 0
        %2342 = vmatprep.subr.bf16.mxu0 0
        %2343 = vmatpush1.bf16.xpose.msra.mxu0 0
        %2344 = vmatprep.subr.bf16.mxu0 0
        %2345 = vmatpush1.bf16.xpose.msra.mxu0 0
        %2346 = vmatprep.mubr.bf16.mxu0 0
        %2347 = vmatmul.mubr.bf16.gmra.mrb[0].mxu0 %v2309
        %v2348 = vpop.f32.mrb[0].mxu0
        %v2349 = vadd.f32 0.0, %v2348
        %v2350 = vpop.f32.mrb[0].mxu0
        %v2351 = vpop.f32.mrb[0].mxu0
        %v2352 = vpop.f32.mrb[0].mxu0
        %2353 = vdwg.mxu0
        %v2354 = vpack.c.b16 %v2189, %v2189
        %2355 = vrot.lane.b32.xlu0 %v2354, 104
        %v2356 = vpop.permute.xlu0 %2355
        %v2357 = vpack.c.b16 %v2197, %v2197
        %2358 = vrot.lane.b32.xlu0 %v2357, 72
        %v2359 = vpop.permute.xlu0 %2358
        %v2361 = vsel %vm781, %v2356, 0
        %v2364 = vsel %vm781, %v2359, 0
        %2366 = vmatprep.subr.bf16.mxu0 0
        %2367 = vmatpush1.bf16.xpose.msra.mxu0 %v2364
        %2368 = vmatprep.subr.bf16.mxu0 0
        %2369 = vmatpush1.bf16.xpose.msra.mxu0 0
        %2370 = vmatprep.subr.bf16.mxu0 0
        %2371 = vmatpush1.bf16.xpose.msra.mxu0 0
        %2372 = vmatprep.subr.bf16.mxu0 0
        %2373 = vmatpush1.bf16.xpose.msra.mxu0 0
        %2374 = vmatprep.subr.bf16.mxu0 0
        %2375 = vmatpush1.bf16.xpose.msra.mxu0 0
        %2376 = vmatprep.subr.bf16.mxu0 0
        %2377 = vmatpush1.bf16.xpose.msra.mxu0 0
        %2378 = vmatprep.subr.bf16.mxu0 0
        %2379 = vmatpush1.bf16.xpose.msra.mxu0 0
        %2380 = vmatprep.subr.bf16.mxu0 0
        %2381 = vmatpush1.bf16.xpose.msra.mxu0 0
        %2382 = vmatprep.subr.bf16.mxu0 0
        %2383 = vmatpush1.bf16.xpose.msra.mxu0 0
        %2384 = vmatprep.subr.bf16.mxu0 0
        %2385 = vmatpush1.bf16.xpose.msra.mxu0 0
        %2386 = vmatprep.subr.bf16.mxu0 0
        %2387 = vmatpush1.bf16.xpose.msra.mxu0 0
        %2388 = vmatprep.subr.bf16.mxu0 0
        %2389 = vmatpush1.bf16.xpose.msra.mxu0 0
        %2390 = vmatprep.subr.bf16.mxu0 0
        %2391 = vmatpush1.bf16.xpose.msra.mxu0 0
        %2392 = vmatprep.subr.bf16.mxu0 0
        %2393 = vmatpush1.bf16.xpose.msra.mxu0 0
        %2394 = vmatprep.subr.bf16.mxu0 0
        %2395 = vmatpush1.bf16.xpose.msra.mxu0 0
        %2396 = vmatprep.subr.bf16.mxu0 0
        %2397 = vmatpush1.bf16.xpose.msra.mxu0 0
        %2398 = vmatprep.mubr.bf16.mxu0 0
        %2399 = vmatmul.mubr.bf16.gmra.mrb[0].mxu0 %v2361
        %v2400 = vpop.f32.mrb[0].mxu0
        %v2401 = vadd.f32 0.0, %v2400
        %v2402 = vpop.f32.mrb[0].mxu0
        %v2403 = vpop.f32.mrb[0].mxu0
        %v2404 = vpop.f32.mrb[0].mxu0
        %2405 = vdwg.mxu0
        %v2406 = vsel %vm976, %v2245, -10000.0
        %v2407 = vsel %vm976, %v2297, -10000.0
        %v2408 = vsel %vm976, %v2349, -10000.0
        %v2409 = vsel %vm976, %v2401, -10000.0
        %v2410 = vsel %vm781, %v2406, -inf
        %2411 = vmax.xlane.f32.xlu0 %v2410
        %v2412 = vpop.xlane.xlu0 %2411
        %v2413 = vsel %vm781, %v2407, -inf
        %2414 = vmax.xlane.f32.xlu0 %v2413
        %v2415 = vpop.xlane.xlu0 %2414
        %v2416 = vsel %vm781, %v2408, -inf
        %2417 = vmax.xlane.f32.xlu0 %v2416
        %v2418 = vpop.xlane.xlu0 %2417
        %v2419 = vsel %vm781, %v2409, -inf
        %2420 = vmax.xlane.f32.xlu0 %v2419
        %v2421 = vpop.xlane.xlu0 %2420
        %v2422 = vsub.f32 %v2406, %v2412
        %v2423 = vsub.f32 %v2407, %v2415
        %v2424 = vsub.f32 %v2408, %v2418
        %v2425 = vsub.f32 %v2409, %v2421
        %v2426 = vmul.f32 %v2422, 1.442695
        %v2427 = vpow.pop %v2426
        %v2428 = vmul.f32 %v2423, 1.442695
        %v2429 = vpow.pop %v2428
        %v2430 = vmul.f32 %v2424, 1.442695
        %v2431 = vpow.pop %v2430
        %v2432 = vmul.f32 %v2425, 1.442695
        %v2433 = vpow.pop %v2432
        %v2434 = vsel %vm781, %v2427, 0.0
        %2435 = vadd.xlane.f32.xlu0 %v2434
        %v2436 = vpop.xlane.xlu0 %2435
        %v2437 = vsel %vm781, %v2429, 0.0
        %2438 = vadd.xlane.f32.xlu0 %v2437
        %v2439 = vpop.xlane.xlu0 %2438
        %v2440 = vsel %vm781, %v2431, 0.0
        %2441 = vadd.xlane.f32.xlu0 %v2440
        %v2442 = vpop.xlane.xlu0 %2441
        %v2443 = vsel %vm781, %v2433, 0.0
        %2444 = vadd.xlane.f32.xlu0 %v2443
        %v2445 = vpop.xlane.xlu0 %2444
        %v2446 = vrcp.pop %v2436
        %v2447 = vrcp.pop %v2439
        %v2448 = vrcp.pop %v2442
        %v2449 = vrcp.pop %v2445
        %v2450 = vmul.f32 %v2427, %v2446
        %v2451 = vmul.f32 %v2429, %v2447
        %v2452 = vmul.f32 %v2431, %v2448
        %v2453 = vmul.f32 %v2433, %v2449
        %v2454 = vpack.c.bf16 %v2450, %v2450
        %v2455 = vpack.c.bf16 %v2451, %v2451
        %v2456 = vpack.c.bf16 %v2452, %v2452
        %v2457 = vpack.c.bf16 %v2453, %v2453
        %2458 = vrot.lane.b32.xlu0 %v2201, 40
        %v2459 = vpop.permute.xlu0 %2458
        %v2461 = vsel %vm781, %v2454, 0
        %v2464 = vsel %vm1034, %v2459, 0
        %2466 = vmatprep.subr.bf16.mxu0 0
        %2467 = vmatpush1.bf16.msra.mxu0 %v2464
        %2468 = vmatprep.subr.bf16.mxu0 0
        %2469 = vmatpush1.bf16.msra.mxu0 0
        %2470 = vmatprep.subr.bf16.mxu0 0
        %2471 = vmatpush1.bf16.msra.mxu0 0
        %2472 = vmatprep.subr.bf16.mxu0 0
        %2473 = vmatpush1.bf16.msra.mxu0 0
        %2474 = vmatprep.subr.bf16.mxu0 0
        %2475 = vmatpush1.bf16.msra.mxu0 0
        %2476 = vmatprep.subr.bf16.mxu0 0
        %2477 = vmatpush1.bf16.msra.mxu0 0
        %2478 = vmatprep.subr.bf16.mxu0 0
        %2479 = vmatpush1.bf16.msra.mxu0 0
        %2480 = vmatprep.subr.bf16.mxu0 0
        %2481 = vmatpush1.bf16.msra.mxu0 0
        %2482 = vmatprep.subr.bf16.mxu0 0
        %2483 = vmatpush1.bf16.msra.mxu0 0
        %2484 = vmatprep.subr.bf16.mxu0 0
        %2485 = vmatpush1.bf16.msra.mxu0 0
        %2486 = vmatprep.subr.bf16.mxu0 0
        %2487 = vmatpush1.bf16.msra.mxu0 0
        %2488 = vmatprep.subr.bf16.mxu0 0
        %2489 = vmatpush1.bf16.msra.mxu0 0
        %2490 = vmatprep.subr.bf16.mxu0 0
        %2491 = vmatpush1.bf16.msra.mxu0 0
        %2492 = vmatprep.subr.bf16.mxu0 0
        %2493 = vmatpush1.bf16.msra.mxu0 0
        %2494 = vmatprep.subr.bf16.mxu0 0
        %2495 = vmatpush1.bf16.msra.mxu0 0
        %2496 = vmatprep.subr.bf16.mxu0 0
        %2497 = vmatpush1.bf16.msra.mxu0 0
        %2498 = vmatprep.mubr.bf16.mxu0 0
        %2499 = vmatmul.mubr.bf16.gmra.mrb[0].mxu0 %v2461
        %v2500 = vpop.f32.mrb[0].mxu0
        %v2501 = vadd.f32 0.0, %v2500
        %v2502 = vpop.f32.mrb[0].mxu0
        %v2503 = vpop.f32.mrb[0].mxu0
        %v2504 = vpop.f32.mrb[0].mxu0
        %2505 = vdwg.mxu0
        %2506 = vrot.lane.b32.xlu0 %v2253, 40
        %v2507 = vpop.permute.xlu0 %2506
        %v2509 = vsel %vm781, %v2455, 0
        %v2512 = vsel %vm1034, %v2507, 0
        %2514 = vmatprep.subr.bf16.mxu0 0
        %2515 = vmatpush1.bf16.msra.mxu0 %v2512
        %2516 = vmatprep.subr.bf16.mxu0 0
        %2517 = vmatpush1.bf16.msra.mxu0 0
        %2518 = vmatprep.subr.bf16.mxu0 0
        %2519 = vmatpush1.bf16.msra.mxu0 0
        %2520 = vmatprep.subr.bf16.mxu0 0
        %2521 = vmatpush1.bf16.msra.mxu0 0
        %2522 = vmatprep.subr.bf16.mxu0 0
        %2523 = vmatpush1.bf16.msra.mxu0 0
        %2524 = vmatprep.subr.bf16.mxu0 0
        %2525 = vmatpush1.bf16.msra.mxu0 0
        %2526 = vmatprep.subr.bf16.mxu0 0
        %2527 = vmatpush1.bf16.msra.mxu0 0
        %2528 = vmatprep.subr.bf16.mxu0 0
        %2529 = vmatpush1.bf16.msra.mxu0 0
        %2530 = vmatprep.subr.bf16.mxu0 0
        %2531 = vmatpush1.bf16.msra.mxu0 0
        %2532 = vmatprep.subr.bf16.mxu0 0
        %2533 = vmatpush1.bf16.msra.mxu0 0
        %2534 = vmatprep.subr.bf16.mxu0 0
        %2535 = vmatpush1.bf16.msra.mxu0 0
        %2536 = vmatprep.subr.bf16.mxu0 0
        %2537 = vmatpush1.bf16.msra.mxu0 0
        %2538 = vmatprep.subr.bf16.mxu0 0
        %2539 = vmatpush1.bf16.msra.mxu0 0
        %2540 = vmatprep.subr.bf16.mxu0 0
        %2541 = vmatpush1.bf16.msra.mxu0 0
        %2542 = vmatprep.subr.bf16.mxu0 0
        %2543 = vmatpush1.bf16.msra.mxu0 0
        %2544 = vmatprep.subr.bf16.mxu0 0
        %2545 = vmatpush1.bf16.msra.mxu0 0
        %2546 = vmatprep.mubr.bf16.mxu0 0
        %2547 = vmatmul.mubr.bf16.gmra.mrb[0].mxu0 %v2509
        %v2548 = vpop.f32.mrb[0].mxu0
        %v2549 = vadd.f32 0.0, %v2548
        %v2550 = vpop.f32.mrb[0].mxu0
        %v2551 = vpop.f32.mrb[0].mxu0
        %v2552 = vpop.f32.mrb[0].mxu0
        %2553 = vdwg.mxu0
        %2554 = vrot.lane.b32.xlu0 %v2305, 40
        %v2555 = vpop.permute.xlu0 %2554
        %v2557 = vsel %vm781, %v2456, 0
        %v2560 = vsel %vm1034, %v2555, 0
        %2562 = vmatprep.subr.bf16.mxu0 0
        %2563 = vmatpush1.bf16.msra.mxu0 %v2560
        %2564 = vmatprep.subr.bf16.mxu0 0
        %2565 = vmatpush1.bf16.msra.mxu0 0
        %2566 = vmatprep.subr.bf16.mxu0 0
        %2567 = vmatpush1.bf16.msra.mxu0 0
        %2568 = vmatprep.subr.bf16.mxu0 0
        %2569 = vmatpush1.bf16.msra.mxu0 0
        %2570 = vmatprep.subr.bf16.mxu0 0
        %2571 = vmatpush1.bf16.msra.mxu0 0
        %2572 = vmatprep.subr.bf16.mxu0 0
        %2573 = vmatpush1.bf16.msra.mxu0 0
        %2574 = vmatprep.subr.bf16.mxu0 0
        %2575 = vmatpush1.bf16.msra.mxu0 0
        %2576 = vmatprep.subr.bf16.mxu0 0
        %2577 = vmatpush1.bf16.msra.mxu0 0
        %2578 = vmatprep.subr.bf16.mxu0 0
        %2579 = vmatpush1.bf16.msra.mxu0 0
        %2580 = vmatprep.subr.bf16.mxu0 0
        %2581 = vmatpush1.bf16.msra.mxu0 0
        %2582 = vmatprep.subr.bf16.mxu0 0
        %2583 = vmatpush1.bf16.msra.mxu0 0
        %2584 = vmatprep.subr.bf16.mxu0 0
        %2585 = vmatpush1.bf16.msra.mxu0 0
        %2586 = vmatprep.subr.bf16.mxu0 0
        %2587 = vmatpush1.bf16.msra.mxu0 0
        %2588 = vmatprep.subr.bf16.mxu0 0
        %2589 = vmatpush1.bf16.msra.mxu0 0
        %2590 = vmatprep.subr.bf16.mxu0 0
        %2591 = vmatpush1.bf16.msra.mxu0 0
        %2592 = vmatprep.subr.bf16.mxu0 0
        %2593 = vmatpush1.bf16.msra.mxu0 0
        %2594 = vmatprep.mubr.bf16.mxu0 0
        %2595 = vmatmul.mubr.bf16.gmra.mrb[0].mxu0 %v2557
        %v2596 = vpop.f32.mrb[0].mxu0
        %v2597 = vadd.f32 0.0, %v2596
        %v2598 = vpop.f32.mrb[0].mxu0
        %v2599 = vpop.f32.mrb[0].mxu0
        %v2600 = vpop.f32.mrb[0].mxu0
        %2601 = vdwg.mxu0
        %2602 = vrot.lane.b32.xlu0 %v2357, 40
        %v2603 = vpop.permute.xlu0 %2602
        %v2605 = vsel %vm781, %v2457, 0
        %v2608 = vsel %vm1034, %v2603, 0
        %2610 = vmatprep.subr.bf16.mxu0 0
        %2611 = vmatpush1.bf16.msra.mxu0 %v2608
        %2612 = vmatprep.subr.bf16.mxu0 0
        %2613 = vmatpush1.bf16.msra.mxu0 0
        %2614 = vmatprep.subr.bf16.mxu0 0
        %2615 = vmatpush1.bf16.msra.mxu0 0
        %2616 = vmatprep.subr.bf16.mxu0 0
        %2617 = vmatpush1.bf16.msra.mxu0 0
        %2618 = vmatprep.subr.bf16.mxu0 0
        %2619 = vmatpush1.bf16.msra.mxu0 0
        %2620 = vmatprep.subr.bf16.mxu0 0
        %2621 = vmatpush1.bf16.msra.mxu0 0
        %2622 = vmatprep.subr.bf16.mxu0 0
        %2623 = vmatpush1.bf16.msra.mxu0 0
        %2624 = vmatprep.subr.bf16.mxu0 0
        %2625 = vmatpush1.bf16.msra.mxu0 0
        %2626 = vmatprep.subr.bf16.mxu0 0
        %2627 = vmatpush1.bf16.msra.mxu0 0
        %2628 = vmatprep.subr.bf16.mxu0 0
        %2629 = vmatpush1.bf16.msra.mxu0 0
        %2630 = vmatprep.subr.bf16.mxu0 0
        %2631 = vmatpush1.bf16.msra.mxu0 0
        %2632 = vmatprep.subr.bf16.mxu0 0
        %2633 = vmatpush1.bf16.msra.mxu0 0
        %2634 = vmatprep.subr.bf16.mxu0 0
        %2635 = vmatpush1.bf16.msra.mxu0 0
        %2636 = vmatprep.subr.bf16.mxu0 0
        %2637 = vmatpush1.bf16.msra.mxu0 0
        %2638 = vmatprep.subr.bf16.mxu0 0
        %2639 = vmatpush1.bf16.msra.mxu0 0
        %2640 = vmatprep.subr.bf16.mxu0 0
        %2641 = vmatpush1.bf16.msra.mxu0 0
        %2642 = vmatprep.mubr.bf16.mxu0 0
        %2643 = vmatmul.mubr.bf16.gmra.mrb[0].mxu0 %v2605
        %v2644 = vpop.f32.mrb[0].mxu0
        %v2645 = vadd.f32 0.0, %v2644
        %v2646 = vpop.f32.mrb[0].mxu0
        %v2647 = vpop.f32.mrb[0].mxu0
        %v2648 = vpop.f32.mrb[0].mxu0
        %2649 = vdwg.mxu0
        %2654 = vrot.lane.b32.xlu0 %v1549, 8
        %v2655 = vpop.permute.xlu0 %2654
        %2656 = vrot.lane.b32.xlu0 %v1597, 8
        %v2657 = vpop.permute.xlu0 %2656
        %2658 = vrot.lane.b32.xlu0 %v1645, 8
        %v2659 = vpop.permute.xlu0 %2658
        %2660 = vrot.lane.b32.xlu0 %v1693, 8
        %v2661 = vpop.permute.xlu0 %2660
        %2670 = vrot.lane.b32.xlu0 %v2025, 16
        %v2671 = vpop.permute.xlu0 %2670
        %2672 = vrot.lane.b32.xlu0 %v2073, 16
        %v2673 = vpop.permute.xlu0 %2672
        %2674 = vrot.lane.b32.xlu0 %v2121, 16
        %v2675 = vpop.permute.xlu0 %2674
        %2676 = vrot.lane.b32.xlu0 %v2169, 16
        %v2677 = vpop.permute.xlu0 %2676
        %2686 = vrot.lane.b32.xlu0 %v2501, 24
        %v2687 = vpop.permute.xlu0 %2686
        %2688 = vrot.lane.b32.xlu0 %v2549, 24
        %v2689 = vpop.permute.xlu0 %2688
        %2690 = vrot.lane.b32.xlu0 %v2597, 24
        %v2691 = vpop.permute.xlu0 %2690
        %2692 = vrot.lane.b32.xlu0 %v2645, 24
        %v2693 = vpop.permute.xlu0 %2692
        %v2698 = vsel %vm781, %v1073, %v2655
        %v2699 = vsel %vm781, %v1121, %v2657
        %v2700 = vsel %vm781, %v1169, %v2659
        %v2701 = vsel %vm781, %v1217, %v2661
        %vm2702 = vcmask 130048
        %v2703 = vsel %vm2702, %v2698, %v2671
        %v2704 = vsel %vm2702, %v2699, %v2673
        %v2705 = vsel %vm2702, %v2700, %v2675
        %v2706 = vsel %vm2702, %v2701, %v2677
        %vm2707 = vcmask 195584
        %v2708 = vsel %vm2707, %v2703, %v2687
        %v2709 = vsel %vm2707, %v2704, %v2689
        %v2710 = vsel %vm2707, %v2705, %v2691
        %v2711 = vsel %vm2707, %v2706, %v2693
        %v2712 = vpack.c.bf16 %v2709, %v2708
        %v2713 = vpack.c.bf16 %v2711, %v2710
        %v2714 = vld [vmem:[%s608] sm:$0xf]
        %v2715 = vld [vmem:[%s608 + $0x4] sm:$0xf]
        %v2716 = vld [vmem:[%s608 + $0x8] sm:$0xf]
        %v2717 = vld [vmem:[%s608 + $0xc] sm:$0xf]
        %v2718 = vld [vmem:[%s611] sm:$0x1]
        %v2720 = vlaneseq
        %v2721 = vshrl.u32 %v2720, 7
        %v2722 = vsub.s32 0, %v2721
        %v2723 = vrot.slane %v2718, %v2722
        %v2729 = vunpack.c.l.b16 %v2714
        %v2730 = vunpack.c.l.b16 %v2715
        %v2731 = vunpack.c.l.b16 %v2716
        %v2732 = vunpack.c.l.b16 %v2717
        %v2733 = vpack.c.b16 %v2730, %v2729
        %v2734 = vpack.c.b16 %v2732, %v2731
        %v2738 = vsel %vm684, %v2712, 0
        %v2741 = vsel %vm684, %v2713, 0
        %2743 = vmatprep.subr.bf16.mxu0 0
        %2744 = vmatpush1.bf16.msra.mxu0 %v2733
        %2745 = vmatprep.subr.bf16.mxu0 0
        %2746 = vmatpush1.bf16.msra.mxu0 %v2734
        %2747 = vmatprep.subr.bf16.mxu0 0
        %2748 = vmatpush1.bf16.msra.mxu0 0
        %2749 = vmatprep.subr.bf16.mxu0 0
        %2750 = vmatpush1.bf16.msra.mxu0 0
        %2751 = vmatprep.subr.bf16.mxu0 0
        %2752 = vmatpush1.bf16.msra.mxu0 0
        %2753 = vmatprep.subr.bf16.mxu0 0
        %2754 = vmatpush1.bf16.msra.mxu0 0
        %2755 = vmatprep.subr.bf16.mxu0 0
        %2756 = vmatpush1.bf16.msra.mxu0 0
        %2757 = vmatprep.subr.bf16.mxu0 0
        %2758 = vmatpush1.bf16.msra.mxu0 0
        %2759 = vmatprep.subr.bf16.mxu0 0
        %2760 = vmatpush1.bf16.msra.mxu0 0
        %2761 = vmatprep.subr.bf16.mxu0 0
        %2762 = vmatpush1.bf16.msra.mxu0 0
        %2763 = vmatprep.subr.bf16.mxu0 0
        %2764 = vmatpush1.bf16.msra.mxu0 0
        %2765 = vmatprep.subr.bf16.mxu0 0
        %2766 = vmatpush1.bf16.msra.mxu0 0
        %2767 = vmatprep.subr.bf16.mxu0 0
        %2768 = vmatpush1.bf16.msra.mxu0 0
        %2769 = vmatprep.subr.bf16.mxu0 0
        %2770 = vmatpush1.bf16.msra.mxu0 0
        %2771 = vmatprep.subr.bf16.mxu0 0
        %2772 = vmatpush1.bf16.msra.mxu0 0
        %2773 = vmatprep.subr.bf16.mxu0 0
        %2774 = vmatpush1.bf16.msra.mxu0 0
        %2775 = vmatprep.mubr.bf16.mxu0 0
        %2776 = vmatmul.mubr.bf16.gmra.mrb[0].mxu0 %v2738
        %v2777 = vpop.f32.mrb[0].mxu0
        %v2778 = vadd.f32 %v2723, %v2777
        %v2779 = vpop.f32.mrb[0].mxu0
        %v2780 = vpop.f32.mrb[0].mxu0
        %v2781 = vadd.f32 %v2723, %v2780
        %v2782 = vpop.f32.mrb[0].mxu0
        %2783 = vmatprep.mubr.bf16.mxu0 0
        %2784 = vmatmul.mubr.bf16.gmra.mrb[0].mxu0 %v2741
        %v2785 = vpop.f32.mrb[0].mxu0
        %v2786 = vadd.f32 %v2723, %v2785
        %v2787 = vpop.f32.mrb[0].mxu0
        %v2788 = vpop.f32.mrb[0].mxu0
        %v2789 = vadd.f32 %v2723, %v2788
        %v2790 = vpop.f32.mrb[0].mxu0
        %2791 = vdwg.mxu0
        %v2792 = vadd.f32 %v655, %v2778
        %v2793 = vadd.f32 %v656, %v2781
        %v2794 = vadd.f32 %v657, %v2786
        %v2795 = vadd.f32 %v658, %v2789
        %v2796 = vsel %vm684, %v2792, 0.0
        %2797 = vadd.xlane.f32.xlu0 %v2796
        %v2798 = vpop.xlane.xlu0 %2797
        %v2799 = vsel %vm684, %v2793, 0.0
        %2800 = vadd.xlane.f32.xlu0 %v2799
        %v2801 = vpop.xlane.xlu0 %2800
        %v2802 = vsel %vm684, %v2794, 0.0
        %2803 = vadd.xlane.f32.xlu0 %v2802
        %v2804 = vpop.xlane.xlu0 %2803
        %v2805 = vsel %vm684, %v2795, 0.0
        %2806 = vadd.xlane.f32.xlu0 %v2805
        %v2807 = vpop.xlane.xlu0 %2806
        %v2808 = vrcp.pop 32.0
        %v2809 = vmul.f32 %v2798, %v2808
        %v2810 = vmul.f32 %v2801, %v2808
        %v2811 = vmul.f32 %v2804, %v2808
        %v2812 = vmul.f32 %v2807, %v2808
        %v2813 = vsub.f32 %v2792, %v2809
        %v2814 = vsub.f32 %v2793, %v2810
        %v2815 = vsub.f32 %v2794, %v2811
        %v2816 = vsub.f32 %v2795, %v2812
        %v2817 = vmul.f32 %v2813, %v2813
        %v2818 = vmul.f32 %v2814, %v2814
        %v2819 = vmul.f32 %v2815, %v2815
        %v2820 = vmul.f32 %v2816, %v2816
        %v2821 = vsel %vm684, %v2817, 0.0
        %2822 = vadd.xlane.f32.xlu0 %v2821
        %v2823 = vpop.xlane.xlu0 %2822
        %v2824 = vsel %vm684, %v2818, 0.0
        %2825 = vadd.xlane.f32.xlu0 %v2824
        %v2826 = vpop.xlane.xlu0 %2825
        %v2827 = vsel %vm684, %v2819, 0.0
        %2828 = vadd.xlane.f32.xlu0 %v2827
        %v2829 = vpop.xlane.xlu0 %2828
        %v2830 = vsel %vm684, %v2820, 0.0
        %2831 = vadd.xlane.f32.xlu0 %v2830
        %v2832 = vpop.xlane.xlu0 %2831
        %v2833 = vmul.f32 %v2823, %v2808
        %v2834 = vmul.f32 %v2826, %v2808
        %v2835 = vmul.f32 %v2829, %v2808
        %v2836 = vmul.f32 %v2832, %v2808
        %v2837 = vadd.f32 %v2833, 1e-05
        %v2838 = vadd.f32 %v2834, 1e-05
        %v2839 = vadd.f32 %v2835, 1e-05
        %v2840 = vadd.f32 %v2836, 1e-05
        %v2841 = vrsqrt.pop %v2837
        %v2842 = vrsqrt.pop %v2838
        %v2843 = vrsqrt.pop %v2839
        %v2844 = vrsqrt.pop %v2840
        %v2845 = vmul.f32 %v2813, %v2841
        %v2846 = vmul.f32 %v2814, %v2842
        %v2847 = vmul.f32 %v2815, %v2843
        %v2848 = vmul.f32 %v2816, %v2844
        %v2849 = vld [vmem:[%s614] sm:$0x1]
        %v2851 = vlaneseq
        %v2852 = vshrl.u32 %v2851, 7
        %v2853 = vsub.s32 0, %v2852
        %v2854 = vrot.slane %v2849, %v2853
        %v2856 = vmul.f32 %v2845, %v2854
        %v2857 = vmul.f32 %v2846, %v2854
        %v2858 = vmul.f32 %v2847, %v2854
        %v2859 = vmul.f32 %v2848, %v2854
        %v2860 = vld [vmem:[%s617] sm:$0x1]
        %v2862 = vlaneseq
        %v2863 = vshrl.u32 %v2862, 7
        %v2864 = vsub.s32 0, %v2863
        %v2865 = vrot.slane %v2860, %v2864
        %v2867 = vadd.f32 %v2856, %v2865
        %v2868 = vadd.f32 %v2857, %v2865
        %v2869 = vadd.f32 %v2858, %v2865
        %v2870 = vadd.f32 %v2859, %v2865
        %v2871 = vpack.c.bf16 %v2868, %v2867
        %v2872 = vpack.c.bf16 %v2870, %v2869
        %v2873 = vld [vmem:[%s622] sm:$0xf]
        %v2874 = vld [vmem:[%s622 + $0x4] sm:$0xf]
        %v2875 = vld [vmem:[%s622 + $0x8] sm:$0xf]
        %v2876 = vld [vmem:[%s622 + $0xc] sm:$0xf]
        %v2877 = vld [vmem:[%s625] sm:$0x1]
        %v2879 = vlaneseq
        %v2880 = vshrl.u32 %v2879, 7
        %v2881 = vsub.s32 0, %v2880
        %v2882 = vrot.slane %v2877, %v2881
        %v2888 = vunpack.c.l.b16 %v2873
        %v2889 = vunpack.c.l.b16 %v2874
        %v2890 = vunpack.c.l.b16 %v2875
        %v2891 = vunpack.c.l.b16 %v2876
        %v2892 = vpack.c.b16 %v2889, %v2888
        %v2893 = vpack.c.b16 %v2891, %v2890
        %v2897 = vsel %vm684, %v2871, 0
        %v2900 = vsel %vm684, %v2872, 0
        %2902 = vmatprep.subr.bf16.mxu0 0
        %2903 = vmatpush1.bf16.msra.mxu0 %v2892
        %2904 = vmatprep.subr.bf16.mxu0 0
        %2905 = vmatpush1.bf16.msra.mxu0 %v2893
        %2906 = vmatprep.subr.bf16.mxu0 0
        %2907 = vmatpush1.bf16.msra.mxu0 0
        %2908 = vmatprep.subr.bf16.mxu0 0
        %2909 = vmatpush1.bf16.msra.mxu0 0
        %2910 = vmatprep.subr.bf16.mxu0 0
        %2911 = vmatpush1.bf16.msra.mxu0 0
        %2912 = vmatprep.subr.bf16.mxu0 0
        %2913 = vmatpush1.bf16.msra.mxu0 0
        %2914 = vmatprep.subr.bf16.mxu0 0
        %2915 = vmatpush1.bf16.msra.mxu0 0
        %2916 = vmatprep.subr.bf16.mxu0 0
        %2917 = vmatpush1.bf16.msra.mxu0 0
        %2918 = vmatprep.subr.bf16.mxu0 0
        %2919 = vmatpush1.bf16.msra.mxu0 0
        %2920 = vmatprep.subr.bf16.mxu0 0
        %2921 = vmatpush1.bf16.msra.mxu0 0
        %2922 = vmatprep.subr.bf16.mxu0 0
        %2923 = vmatpush1.bf16.msra.mxu0 0
        %2924 = vmatprep.subr.bf16.mxu0 0
        %2925 = vmatpush1.bf16.msra.mxu0 0
        %2926 = vmatprep.subr.bf16.mxu0 0
        %2927 = vmatpush1.bf16.msra.mxu0 0
        %2928 = vmatprep.subr.bf16.mxu0 0
        %2929 = vmatpush1.bf16.msra.mxu0 0
        %2930 = vmatprep.subr.bf16.mxu0 0
        %2931 = vmatpush1.bf16.msra.mxu0 0
        %2932 = vmatprep.subr.bf16.mxu0 0
        %2933 = vmatpush1.bf16.msra.mxu0 0
        %2934 = vmatprep.mubr.bf16.mxu0 0
        %2935 = vmatmul.mubr.bf16.gmra.mrb[0].mxu0 %v2897
        %v2936 = vpop.f32.mrb[0].mxu0
        %v2937 = vadd.f32 %v2882, %v2936
        %v2938 = vpop.f32.mrb[0].mxu0
        %v2939 = vpop.f32.mrb[0].mxu0
        %v2940 = vadd.f32 %v2882, %v2939
        %v2941 = vpop.f32.mrb[0].mxu0
        %2942 = vmatprep.mubr.bf16.mxu0 0
        %2943 = vmatmul.mubr.bf16.gmra.mrb[0].mxu0 %v2900
        %v2944 = vpop.f32.mrb[0].mxu0
        %v2945 = vadd.f32 %v2882, %v2944
        %v2946 = vpop.f32.mrb[0].mxu0
        %v2947 = vpop.f32.mrb[0].mxu0
        %v2948 = vadd.f32 %v2882, %v2947
        %v2949 = vpop.f32.mrb[0].mxu0
        %2950 = vdwg.mxu0
        %v2951 = vmul.f32 %v2937, %v2937
        %v2952 = vmul.f32 %v2940, %v2940
        %v2953 = vmul.f32 %v2945, %v2945
        %v2954 = vmul.f32 %v2948, %v2948
        %v2955 = vmul.f32 %v2951, %v2937
        %v2956 = vmul.f32 %v2952, %v2940
        %v2957 = vmul.f32 %v2953, %v2945
        %v2958 = vmul.f32 %v2954, %v2948
        %v2959 = vmul.f32 %v2937, 0.5
        %v2960 = vmul.f32 %v2940, 0.5
        %v2961 = vmul.f32 %v2945, 0.5
        %v2962 = vmul.f32 %v2948, 0.5
        %v2963 = vmul.f32 %v2955, 0.044715
        %v2964 = vmul.f32 %v2956, 0.044715
        %v2965 = vmul.f32 %v2957, 0.044715
        %v2966 = vmul.f32 %v2958, 0.044715
        %v2967 = vadd.f32 %v2937, %v2963
        %v2968 = vadd.f32 %v2940, %v2964
        %v2969 = vadd.f32 %v2945, %v2965
        %v2970 = vadd.f32 %v2948, %v2966
        %v2971 = vmul.f32 %v2967, 0.7978846
        %v2972 = vmul.f32 %v2968, 0.7978846
        %v2973 = vmul.f32 %v2969, 0.7978846
        %v2974 = vmul.f32 %v2970, 0.7978846
        %v2975 = vtanh.pop %v2971
        %v2976 = vtanh.pop %v2972
        %v2977 = vtanh.pop %v2973
        %v2978 = vtanh.pop %v2974
        %v2979 = vadd.f32 %v2975, 1.0
        %v2980 = vadd.f32 %v2976, 1.0
        %v2981 = vadd.f32 %v2977, 1.0
        %v2982 = vadd.f32 %v2978, 1.0
        %v2983 = vmul.f32 %v2959, %v2979
        %v2984 = vmul.f32 %v2960, %v2980
        %v2985 = vmul.f32 %v2961, %v2981
        %v2986 = vmul.f32 %v2962, %v2982
        %v2987 = vpack.c.bf16 %v2984, %v2983
        %v2988 = vpack.c.bf16 %v2986, %v2985
        %v2989 = vld [vmem:[%s630] sm:$0xf]
        %v2990 = vld [vmem:[%s630 + $0x4] sm:$0xf]
        %v2991 = vld [vmem:[%s630 + $0x8] sm:$0xf]
        %v2992 = vld [vmem:[%s630 + $0xc] sm:$0xf]
        %v2993 = vld [vmem:[%s630 + $0x10] sm:$0xf]
        %v2994 = vld [vmem:[%s630 + $0x14] sm:$0xf]
        %v2995 = vld [vmem:[%s630 + $0x18] sm:$0xf]
        %v2996 = vld [vmem:[%s630 + $0x1c] sm:$0xf]
        %v2997 = vld [vmem:[%s630 + $0x20] sm:$0xf]
        %v2998 = vld [vmem:[%s630 + $0x24] sm:$0xf]
        %v2999 = vld [vmem:[%s630 + $0x28] sm:$0xf]
        %v3000 = vld [vmem:[%s630 + $0x2c] sm:$0xf]
        %v3001 = vld [vmem:[%s630 + $0x30] sm:$0xf]
        %v3002 = vld [vmem:[%s630 + $0x34] sm:$0xf]
        %v3003 = vld [vmem:[%s630 + $0x38] sm:$0xf]
        %v3004 = vld [vmem:[%s630 + $0x3c] sm:$0xf]
        %v3005 = vld [vmem:[%s633] sm:$0x1]
        %v3007 = vlaneseq
        %v3008 = vshrl.u32 %v3007, 7
        %v3009 = vsub.s32 0, %v3008
        %v3010 = vrot.slane %v3005, %v3009
        %v3028 = vunpack.c.l.b16 %v2989
        %v3029 = vunpack.c.l.b16 %v2990
        %v3030 = vunpack.c.l.b16 %v2991
        %v3031 = vunpack.c.l.b16 %v2992
        %v3032 = vunpack.c.l.b16 %v2993
        %v3033 = vunpack.c.l.b16 %v2994
        %v3034 = vunpack.c.l.b16 %v2995
        %v3035 = vunpack.c.l.b16 %v2996
        %v3036 = vunpack.c.l.b16 %v2997
        %v3037 = vunpack.c.l.b16 %v2998
        %v3038 = vunpack.c.l.b16 %v2999
        %v3039 = vunpack.c.l.b16 %v3000
        %v3040 = vunpack.c.l.b16 %v3001
        %v3041 = vunpack.c.l.b16 %v3002
        %v3042 = vunpack.c.l.b16 %v3003
        %v3043 = vunpack.c.l.b16 %v3004
        %v3044 = vpack.c.b16 %v3029, %v3028
        %v3045 = vpack.c.b16 %v3031, %v3030
        %v3046 = vpack.c.b16 %v3033, %v3032
        %v3047 = vpack.c.b16 %v3035, %v3034
        %v3048 = vpack.c.b16 %v3037, %v3036
        %v3049 = vpack.c.b16 %v3039, %v3038
        %v3050 = vpack.c.b16 %v3041, %v3040
        %v3051 = vpack.c.b16 %v3043, %v3042
        %3060 = vmatprep.subr.bf16.mxu0 0
        %3061 = vmatpush1.bf16.msra.mxu0 %v3044
        %3062 = vmatprep.subr.bf16.mxu0 0
        %3063 = vmatpush1.bf16.msra.mxu0 %v3045
        %3064 = vmatprep.subr.bf16.mxu0 0
        %3065 = vmatpush1.bf16.msra.mxu0 %v3046
        %3066 = vmatprep.subr.bf16.mxu0 0
        %3067 = vmatpush1.bf16.msra.mxu0 %v3047
        %3068 = vmatprep.subr.bf16.mxu0 0
        %3069 = vmatpush1.bf16.msra.mxu0 %v3048
        %3070 = vmatprep.subr.bf16.mxu0 0
        %3071 = vmatpush1.bf16.msra.mxu0 %v3049
        %3072 = vmatprep.subr.bf16.mxu0 0
        %3073 = vmatpush1.bf16.msra.mxu0 %v3050
        %3074 = vmatprep.subr.bf16.mxu0 0
        %3075 = vmatpush1.bf16.msra.mxu0 %v3051
        %3076 = vmatprep.subr.bf16.mxu0 0
        %3077 = vmatpush1.bf16.msra.mxu0 0
        %3078 = vmatprep.subr.bf16.mxu0 0
        %3079 = vmatpush1.bf16.msra.mxu0 0
        %3080 = vmatprep.subr.bf16.mxu0 0
        %3081 = vmatpush1.bf16.msra.mxu0 0
        %3082 = vmatprep.subr.bf16.mxu0 0
        %3083 = vmatpush1.bf16.msra.mxu0 0
        %3084 = vmatprep.subr.bf16.mxu0 0
        %3085 = vmatpush1.bf16.msra.mxu0 0
        %3086 = vmatprep.subr.bf16.mxu0 0
        %3087 = vmatpush1.bf16.msra.mxu0 0
        %3088 = vmatprep.subr.bf16.mxu0 0
        %3089 = vmatpush1.bf16.msra.mxu0 0
        %3090 = vmatprep.subr.bf16.mxu0 0
        %3091 = vmatpush1.bf16.msra.mxu0 0
        %3092 = vmatprep.mubr.bf16.mxu0 0
        %3093 = vmatmul.mubr.bf16.gmra.mrb[0].mxu0 %v2987
        %v3094 = vpop.f32.mrb[0].mxu0
        %v3095 = vadd.f32 %v3010, %v3094
        %v3096 = vpop.f32.mrb[0].mxu0
        %v3097 = vpop.f32.mrb[0].mxu0
        %v3098 = vadd.f32 %v3010, %v3097
        %v3099 = vpop.f32.mrb[0].mxu0
        %3100 = vmatprep.mubr.bf16.mxu0 0
        %3101 = vmatmul.mubr.bf16.gmra.mrb[0].mxu0 %v2988
        %v3102 = vpop.f32.mrb[0].mxu0
        %v3103 = vadd.f32 %v3010, %v3102
        %v3104 = vpop.f32.mrb[0].mxu0
        %v3105 = vpop.f32.mrb[0].mxu0
        %v3106 = vadd.f32 %v3010, %v3105
        %v3107 = vpop.f32.mrb[0].mxu0
        %3108 = vdwg.mxu0
        %v3109 = vadd.f32 %v2867, %v3095
        %v3110 = vadd.f32 %v2868, %v3098
        %v3111 = vadd.f32 %v2869, %v3103
        %v3112 = vadd.f32 %v2870, %v3106
        %v3113 = vsel %vm684, %v3109, 0.0
        %3114 = vadd.xlane.f32.xlu0 %v3113
        %v3115 = vpop.xlane.xlu0 %3114
        %v3116 = vsel %vm684, %v3110, 0.0
        %3117 = vadd.xlane.f32.xlu0 %v3116
        %v3118 = vpop.xlane.xlu0 %3117
        %v3119 = vsel %vm684, %v3111, 0.0
        %3120 = vadd.xlane.f32.xlu0 %v3119
        %v3121 = vpop.xlane.xlu0 %3120
        %v3122 = vsel %vm684, %v3112, 0.0
        %3123 = vadd.xlane.f32.xlu0 %v3122
        %v3124 = vpop.xlane.xlu0 %3123
        %v3125 = vmul.f32 %v3115, %v2808
        %v3126 = vmul.f32 %v3118, %v2808
        %v3127 = vmul.f32 %v3121, %v2808
        %v3128 = vmul.f32 %v3124, %v2808
        %v3129 = vsub.f32 %v3109, %v3125
        %v3130 = vsub.f32 %v3110, %v3126
        %v3131 = vsub.f32 %v3111, %v3127
        %v3132 = vsub.f32 %v3112, %v3128
        %v3133 = vmul.f32 %v3129, %v3129
        %v3134 = vmul.f32 %v3130, %v3130
        %v3135 = vmul.f32 %v3131, %v3131
        %v3136 = vmul.f32 %v3132, %v3132
        %v3137 = vsel %vm684, %v3133, 0.0
        %3138 = vadd.xlane.f32.xlu0 %v3137
        %v3139 = vpop.xlane.xlu0 %3138
        %v3140 = vsel %vm684, %v3134, 0.0
        %3141 = vadd.xlane.f32.xlu0 %v3140
        %v3142 = vpop.xlane.xlu0 %3141
        %v3143 = vsel %vm684, %v3135, 0.0
        %3144 = vadd.xlane.f32.xlu0 %v3143
        %v3145 = vpop.xlane.xlu0 %3144
        %v3146 = vsel %vm684, %v3136, 0.0
        %3147 = vadd.xlane.f32.xlu0 %v3146
        %v3148 = vpop.xlane.xlu0 %3147
        %v3149 = vmul.f32 %v3139, %v2808
        %v3150 = vmul.f32 %v3142, %v2808
        %v3151 = vmul.f32 %v3145, %v2808
        %v3152 = vmul.f32 %v3148, %v2808
        %v3153 = vadd.f32 %v3149, 1e-05
        %v3154 = vadd.f32 %v3150, 1e-05
        %v3155 = vadd.f32 %v3151, 1e-05
        %v3156 = vadd.f32 %v3152, 1e-05
        %v3157 = vrsqrt.pop %v3153
        %v3158 = vrsqrt.pop %v3154
        %v3159 = vrsqrt.pop %v3155
        %v3160 = vrsqrt.pop %v3156
        %v3161 = vmul.f32 %v3129, %v3157
        %v3162 = vmul.f32 %v3130, %v3158
        %v3163 = vmul.f32 %v3131, %v3159
        %v3164 = vmul.f32 %v3132, %v3160
        %v3165 = vld [vmem:[%s636] sm:$0x1]
        %v3167 = vlaneseq
        %v3168 = vshrl.u32 %v3167, 7
        %v3169 = vsub.s32 0, %v3168
        %v3170 = vrot.slane %v3165, %v3169
        %v3172 = vmul.f32 %v3161, %v3170
        %v3173 = vmul.f32 %v3162, %v3170
        %v3174 = vmul.f32 %v3163, %v3170
        %v3175 = vmul.f32 %v3164, %v3170
        %v3176 = vld [vmem:[%s639] sm:$0x1]
        %v3178 = vlaneseq
        %v3179 = vshrl.u32 %v3178, 7
        %v3180 = vsub.s32 0, %v3179
        %v3181 = vrot.slane %v3176, %v3180
        %v3183 = vadd.f32 %v3172, %v3181
        %v3184 = vadd.f32 %v3173, %v3181
        %v3185 = vadd.f32 %v3174, %v3181
        %v3186 = vadd.f32 %v3175, %v3181
        %3187 = vst.msk [vmem:[#allocation6] sm:$0xff] %vm684, %v3183
        %3188 = vst.msk [vmem:[#allocation6 + $0x8] sm:$0xff] %vm684, %v3184
        %3189 = vst.msk [vmem:[#allocation6 + $0x10] sm:$0xff] %vm684, %v3185
        %3190 = vst.msk [vmem:[#allocation6 + $0x18] sm:$0xff] %vm684, %v3186
        // Predicated region
        $region81: #{gpt_double_heads_forward.1} parent=71 // pred_check
          %p3191 = pneg %p394
        $region82: #{gpt_double_heads_forward.1} parent=71 // pred_check_branch
          %3193 = sbr.rel (%p3191) target = $region84
        $region83: #{gpt_double_heads_forward.1} parent=71 // pred_region
          %s3194 = smul.u32 4, %s30
          %s3196 = ssub.s32 512, 512
          %3197 = vsyncadd [#allocation5], %s3196
          %s3198 = smul.addr %s3194, 128
          %s3199 = scalar_lea.hbm %s13, %s3198
          %s3200 = sshll.u32 [#allocation6], 4
          %s3201 = int_to_ptr.vmem [resolvable:$true] %s3200
          %3206 = dma.vmem_to_hbm [thread:$0]  %s3201, 512, %s3199, [#allocation5], 128, 128, 8
        $region84: #{gpt_double_heads_forward.1} parent=71 // pred_fallthru
          _
        // Predicated region
        $region85: #{gpt_double_heads_forward.1} parent=71 // pred_check
          %p3207 = pneg %p394
        $region86: #{gpt_double_heads_forward.1} parent=71 // pred_check_branch
          %3209 = sbr.rel (%p3207) target = $region88
        $region87: #{gpt_double_heads_forward.1} parent=71 // pred_region
          %3210 = dma.done [#allocation5], 512
        $region88: #{gpt_double_heads_forward.1} parent=71 // pred_fallthru
          _
      $region72: #{gpt_double_heads_forward.1} parent=5 // pred_fallthru
        _
      %p3211 = scmp.le.s32.totalorder 2, %s21
      // Predicated region
      $region89: #{gpt_double_heads_forward.1} parent=5 // pred_check
        %p3212 = pneg %p3211
      $region90: #{gpt_double_heads_forward.1} parent=5 // pred_check_branch
        %3214 = sbr.rel (%p3212) target = $region92
      $region91: #{gpt_double_heads_forward.1} parent=5 // pred_region
        %s3215 = ssub.s32 %s21, 2
      $region92: #{gpt_double_heads_forward.1} parent=5 // pred_fallthru
        _
    $region6: #{gpt_double_heads_forward.1} parent=1 // loop_footer
      %s25 = sadd.s32 1, %s21
    $region7: #{gpt_double_heads_forward.1} parent=1 // loop_footer_branch
      %20 = sbr.rel target = $region3
    $region8: #{gpt_double_heads_forward.1} parent=1 // loop_exit
      _
    %3216 = vsyncpa [#allocation4], 1
    %s3217 = scalar_lea.sflag [#allocation4], 1
    %3218 = vsyncpa %s3217, 1
    %3219 = vsyncpa [#allocation5], 1
    %s3220 = scalar_lea.sflag [#allocation5], 1
    %3221 = vsyncpa %s3220, 1

</llo_original>
